<compile_context>
chip_gen: v6e
topology: v6e:2x2x1
jax: 0.10.0
libtpu: 0.0.40
codegen_flags: <defaults>
</compile_context>

<pallas_src>
import jax
import jax.numpy as jnp
from jax import lax
from jax.experimental import pallas as pl
from jax.experimental.pallas import tpu as pltpu

NEG_SLOPE = 0.1  # LeakyReLU negative slope used by the FFN


def _round_up(x, m):
    return (x + m - 1) // m * m


def _dot_t(a, b):
    # a: (M, K), b: (N, K) -> (M, N), contraction on the shared last axis
    return lax.dot_general(a, b, (((1,), (1,)), ((), ())),
                           preferred_element_type=jnp.float32)


def decode_kernel(ut_ref, w_ref, b_ref, u_ut_ref, u_em_ref, s_ut_ref, s_em_ref):
    """One block of `Bb` batch elements per grid step.

    ut_ref   : (Bb, S, D_pad)           zero-padded utterance embeddings
    w_ref    : (D_pad, 4*E_pad)         fused FFN weights (uc|ue|ec|ee blocks)
    b_ref    : (1, 4*E_pad)             fused FFN bias (bias-1 column folded in)
    u_ut_ref : (E_pad, n_ut*E_pad)      ut_attn weight, flattened [k, o*E_pad + l]
    u_em_ref : (E_pad, n_em*E_pad)      em_attn weight, flattened [k, o*E_pad + l]
    s_ut_ref : (Bb, n_ut, S, S)
    s_em_ref : (Bb, n_em, S, S)
    """
    Bb, S, Dp = ut_ref.shape
    n_ut = s_ut_ref.shape[1]
    n_em = s_em_ref.shape[1]
    Ep = u_ut_ref.shape[0]

    # --- fused FFN: one big matmul for all 4 projections over all Bb*S rows ---
    x = ut_ref[...].reshape(Bb * S, Dp)
    h = jnp.dot(x, w_ref[...], preferred_element_type=jnp.float32) + b_ref[...]
    h = jnp.where(h > 0, h, NEG_SLOPE * h)              # (Bb*S, 4*E_pad)

    uc = h[:, 0 * Ep:1 * Ep]                            # 128-aligned lane slices
    ue = h[:, 1 * Ep:2 * Ep]
    ec = h[:, 2 * Ep:3 * Ep]
    ee = h[:, 3 * Ep:4 * Ep]

    # --- biaffine stage 1, fused across heads: t[i, o*Ep + l] = sum_k x[i,k] U[o,k,l]
    t_ut = jnp.dot(uc, u_ut_ref[...], preferred_element_type=jnp.float32)
    t_em = jnp.dot(ec, u_em_ref[...], preferred_element_type=jnp.float32)

    # --- biaffine stage 2: per batch element / head (small static unroll),
    #     every slice is 8-sublane / 128-lane aligned, output block is lane = S.
    for bb in range(Bb):
        lo = bb * S
        ue_b = ue[lo:lo + S]                            # (S, E_pad)
        ee_b = ee[lo:lo + S]
        for o in range(n_ut):
            s_ut_ref[bb, o] = _dot_t(t_ut[lo:lo + S, o * Ep:(o + 1) * Ep], ue_b)
        for o in range(n_em):
            s_em_ref[bb, o] = _dot_t(t_em[lo:lo + S, o * Ep:(o + 1) * Ep], ee_b)


def prepare_params(raw, d_in):
    """Fold bias columns, zero-pad to 128 and fuse weights (done once, plain JAX)."""
    E = raw["w_uc"].shape[1]
    E1 = E + 1                                   # biaffine n_in + bias column
    Ep = _round_up(E1, 128)
    Dp = _round_up(d_in, 128)

    def head_block(w, b):
        wb = jnp.zeros((Dp, Ep), jnp.float32).at[:d_in, :E].set(w)
        bb = jnp.zeros((Ep,), jnp.float32).at[:E].set(b)
        bb = bb.at[E].set(1.0)                   # bias column: LeakyReLU(1) == 1
        return wb, bb

    blocks = [head_block(raw["w_" + k], raw["b_" + k])
              for k in ("uc", "ue", "ec", "ee")]
    w_all = jnp.concatenate([w for w, _ in blocks], axis=1)       # (Dp, 4*Ep)
    b_all = jnp.concatenate([b for _, b in blocks])[None, :]      # (1, 4*Ep)

    def u_flat(u):
        n = u.shape[0]
        up = jnp.zeros((n, Ep, Ep), jnp.float32).at[:, :E1, :E1].set(u)
        # [k, o*Ep + l] layout so stage 1 is a single (M,Ep)x(Ep,n*Ep) matmul
        return jnp.transpose(up, (1, 0, 2)).reshape(Ep, n * Ep)

    return dict(w_all=w_all, b_all=b_all,
                u_ut=u_flat(raw["u_ut"]), u_em=u_flat(raw["u_em"]),
                d_pad=Dp, e_pad=Ep,
                n_ut=raw["u_ut"].shape[0], n_em=raw["u_em"].shape[0])


def decode_pallas(ut_embed, prep, *, batch_block=1, torch_layout=True):
    B, S, D_in = ut_embed.shape
    Dp, Ep = prep["d_pad"], prep["e_pad"]
    n_ut, n_em = prep["n_ut"], prep["n_em"]

    # pad feature dim (and S to a sublane multiple) once, outside the kernel
    if Dp != D_in:
        ut_embed = jnp.pad(ut_embed, ((0, 0), (0, 0), (0, Dp - D_in)))
    Sp = _round_up(S, 8)
    if Sp != S:
        ut_embed = jnp.pad(ut_embed, ((0, 0), (0, Sp - S), (0, 0)))

    batch_block = max(1, min(batch_block, B))
    while B % batch_block:                       # keep the grid exact
        batch_block -= 1
    Bb = batch_block
    grid = (B // Bb,)                            # keep >= 2 steps for v7x's 2 TCs

    in_specs = [
        pl.BlockSpec((Bb, Sp, Dp), lambda g: (g, 0, 0)),
        pl.BlockSpec((Dp, 4 * Ep), lambda g: (0, 0)),
        pl.BlockSpec((1, 4 * Ep), lambda g: (0, 0)),
        pl.BlockSpec((Ep, n_ut * Ep), lambda g: (0, 0)),
        pl.BlockSpec((Ep, n_em * Ep), lambda g: (0, 0)),
    ]
    out_specs = [
        pl.BlockSpec((Bb, n_ut, Sp, Sp), lambda g: (g, 0, 0, 0)),
        pl.BlockSpec((Bb, n_em, Sp, Sp), lambda g: (g, 0, 0, 0)),
    ]
    out_shape = [
        jax.ShapeDtypeStruct((B, n_ut, Sp, Sp), jnp.float32),
        jax.ShapeDtypeStruct((B, n_em, Sp, Sp), jnp.float32),
    ]

    # explicit VMEM budget: above 16/32 MiB scoped defaults, <= 64 MiB (v7x phys)
    blk_bytes = 4 * (Bb * Sp * Dp + Dp * 4 * Ep + 4 * Ep
                     + Ep * n_ut * Ep + Ep * n_em * Ep
                     + Bb * (n_ut + n_em) * Sp * Sp)
    vmem_limit = int(min(64 * 1024 * 1024, max(32 * 1024 * 1024, 4 * blk_bytes)))

    s_ut_raw, s_em_raw = pl.pallas_call(
        decode_kernel,
        out_shape=out_shape,
        grid_spec=pltpu.PrefetchScalarGridSpec(
            num_scalar_prefetch=0,
            grid=grid,
            in_specs=in_specs,
            out_specs=out_specs,
        ),
        compiler_params=pltpu.CompilerParams(
            dimension_semantics=("parallel",),
            vmem_limit_bytes=vmem_limit),
    )(ut_embed, prep["w_all"], prep["b_all"], prep["u_ut"], prep["u_em"])

    if Sp != S:
        s_ut_raw = s_ut_raw[:, :, :S, :S]
        s_em_raw = s_em_raw[:, :, :S, :S]

    if not torch_layout:
        # native (B, n_out, S, S) layout — no extra HBM round trip
        return s_ut_raw, s_em_raw
    # torch: self.*_attn(x, y).permute(0, 2, 3, 1) -> (B, S, S, n_out)
    return (jnp.transpose(s_ut_raw, (0, 2, 3, 1)),
            jnp.transpose(s_em_raw, (0, 2, 3, 1)))


def encode(words, speakers, word_table, spk_table):
    """Plain-JAX glue mirroring Subtask2Model.encode (img/audio confs = None)."""
    cls_ids = words[:, :, 0]                                  # (B, S)  first sub-token
    word_embed = jnp.take(word_table, cls_ids, axis=0)        # (B, S, D_text)
    spk_embed = jnp.take(spk_table, speakers, axis=0)         # (B, S, D_spk)
    return jnp.concatenate([word_embed, spk_embed], axis=-1)  # (B, S, D_in)


def decode_reference(ut_embed, raw):
    """Pure-JAX reference of Subtask2Model.decode for the correctness check."""
    def ffn(w, b):
        h = ut_embed @ w + b
        return jnp.where(h > 0, h, NEG_SLOPE * h)

    def with_bias(x):
        return jnp.concatenate([x, jnp.ones(x.shape[:-1] + (1,), x.dtype)], -1)

    uc = with_bias(ffn(raw["w_uc"], raw["b_uc"]))
    ue = with_bias(ffn(raw["w_ue"], raw["b_ue"]))
    ec = with_bias(ffn(raw["w_ec"], raw["b_ec"]))
    ee = with_bias(ffn(raw["w_ee"], raw["b_ee"]))
    s_ut = jnp.einsum("bxi,oij,byj->bxyo", uc, raw["u_ut"], ue)
    s_em = jnp.einsum("bxi,oij,byj->bxyo", ec, raw["u_em"], ee)
    return s_ut, s_em


if __name__ == "__main__":
    # Small synthetic configuration.
    B, S, L = 4, 8, 6              # batch, utterances per dialogue, sub-tokens
    text_vocab, text_embed = 64, 32
    spk_vocab, spk_embed = 6, 8    # spk_conf.vocab_size / embed_size, pad_index=0
    E = 32                         # ut_embed_size
    n_em = 7                       # em_conf.vocab_size
    D_in = text_embed + spk_embed  # ut_input_size (no img / audio)

    key = jax.random.PRNGKey(0)
    keys = jax.random.split(key, 12)

    words = jax.random.randint(keys[0], (B, S, L), 0, text_vocab, dtype=jnp.int32)
    speakers = jax.random.randint(keys[1], (B, S), 1, spk_vocab, dtype=jnp.int32)

    word_table = 0.1 * jax.random.normal(keys[2], (text_vocab, text_embed), jnp.float32)
    spk_table = 0.1 * jax.random.normal(keys[3], (spk_vocab, spk_embed), jnp.float32)
    spk_table = spk_table.at[0].set(0.0)  # padding_idx = pad_index

    def linear_init(k, fan_in, fan_out):
        lim = 1.0 / jnp.sqrt(jnp.float32(fan_in))
        kw, kb = jax.random.split(k)
        w = jax.random.uniform(kw, (fan_in, fan_out), jnp.float32, -lim, lim)
        b = jax.random.uniform(kb, (fan_out,), jnp.float32, -lim, lim)
        return w, b

    raw = {}
    for name, k in zip(("uc", "ue", "ec", "ee"), keys[4:8]):
        raw["w_" + name], raw["b_" + name] = linear_init(k, D_in, E)
    raw["u_ut"] = 0.1 * jax.random.normal(keys[8], (2, E + 1, E + 1), jnp.float32)
    raw["u_em"] = 0.1 * jax.random.normal(keys[9], (n_em, E + 1, E + 1), jnp.float32)

    prep = prepare_params(raw, D_in)
    ut_embed = encode(words, speakers, word_table, spk_table)   # (B, S, D_in)

    # batch_block=2 -> FFN M dim = 2*S per step, grid = (2,) parallel steps.
    s_ut, s_em = decode_pallas(ut_embed, prep, batch_block=2, torch_layout=True)
    jax.block_until_ready((s_ut, s_em))

    assert s_ut.shape == (B, S, S, 2)
    assert s_em.shape == (B, S, S, n_em)

    # Correctness check against the pure-JAX reference (raw, unfused params).
    r_ut, r_em = decode_reference(ut_embed, raw)
    assert jnp.allclose(s_ut, r_ut, atol=2e-4, rtol=2e-4)
    assert jnp.allclose(s_em, r_em, atol=2e-4, rtol=2e-4)

    print("KERNEL_OK")
</pallas_src>

<mosaic_0001>
module attributes {stable_mosaic.version = 11 : i64} {
  func.func @decode_kernel(%arg0: i32, %arg1: memref<2x8x128xf32, #tpu.memory_space<vmem>>, %arg2: memref<128x512xf32, #tpu.memory_space<vmem>>, %arg3: memref<1x512xf32, #tpu.memory_space<vmem>>, %arg4: memref<128x256xf32, #tpu.memory_space<vmem>>, %arg5: memref<128x896xf32, #tpu.memory_space<vmem>>, %arg6: memref<2x2x8x8xf32, #tpu.memory_space<vmem>>, %arg7: memref<2x7x8x8xf32, #tpu.memory_space<vmem>>) attributes {dimension_semantics = [#tpu.dimension_semantics<parallel>], iteration_bounds = array<i64: 2>, scalar_prefetch = 0 : i64, scratch_operands = 0 : i64, tpu.core_type = #tpu.core_type<tc>, window_params = [{transform_indices = @transform_0, window_bounds = array<i64: 2, 8, 128>}, {pipeline_mode = #tpu.pipeline_mode<synchronous>, transform_indices = @transform_1, window_bounds = array<i64: 128, 512>}, {pipeline_mode = #tpu.pipeline_mode<synchronous>, transform_indices = @transform_2, window_bounds = array<i64: 1, 512>}, {pipeline_mode = #tpu.pipeline_mode<synchronous>, transform_indices = @transform_3, window_bounds = array<i64: 128, 256>}, {pipeline_mode = #tpu.pipeline_mode<synchronous>, transform_indices = @transform_4, window_bounds = array<i64: 128, 896>}, {transform_indices = @transform_5, window_bounds = array<i64: 2, 2, 8, 8>}, {transform_indices = @transform_6, window_bounds = array<i64: 2, 7, 8, 8>}]} {
    %c0 = arith.constant 0 : index
    %c0_0 = arith.constant 0 : index
    %c0_1 = arith.constant 0 : index
    %0 = vector.load %arg1[%c0, %c0_0, %c0_1] : memref<2x8x128xf32, #tpu.memory_space<vmem>>, vector<2x8x128xf32>
    %1 = vector.shape_cast %0 : vector<2x8x128xf32> to vector<16x128xf32>
    %c0_2 = arith.constant 0 : index
    %c0_3 = arith.constant 0 : index
    %2 = vector.load %arg2[%c0_2, %c0_3] : memref<128x512xf32, #tpu.memory_space<vmem>>, vector<128x512xf32>
    %cst = arith.constant dense<0.000000e+00> : vector<16x512xf32>
    %3 = tpu.matmul %1, %2, %cst {dimension_numbers = #tpu.dot_dimension_numbers<[1], [0], [0], [1], [0, 0, 1, 1], [], []>} : vector<16x128xf32>, vector<128x512xf32>, vector<16x512xf32> -> vector<16x512xf32>
    %c0_4 = arith.constant 0 : index
    %c0_5 = arith.constant 0 : index
    %4 = vector.load %arg3[%c0_4, %c0_5] : memref<1x512xf32, #tpu.memory_space<vmem>>, vector<1x512xf32>
    %5 = vector.broadcast %4 : vector<1x512xf32> to vector<16x512xf32>
    %6 = arith.addf %3, %5 : vector<16x512xf32>
    %cst_6 = arith.constant 0.000000e+00 : f32
    %7 = vector.broadcast %cst_6 : f32 to vector<16x512xf32>
    %8 = arith.cmpf ogt, %6, %7 : vector<16x512xf32>
    %cst_7 = arith.constant 1.000000e-01 : f32
    %9 = vector.broadcast %cst_7 : f32 to vector<16x512xf32>
    %10 = arith.mulf %9, %6 : vector<16x512xf32>
    %11 = arith.select %8, %6, %10 : vector<16x512xi1>, vector<16x512xf32>
    %12 = vector.extract_strided_slice %11 {offsets = [0, 0], sizes = [16, 128], strides = [1, 1]} : vector<16x512xf32> to vector<16x128xf32>
    %13 = vector.extract_strided_slice %11 {offsets = [0, 128], sizes = [16, 128], strides = [1, 1]} : vector<16x512xf32> to vector<16x128xf32>
    %14 = vector.extract_strided_slice %11 {offsets = [0, 256], sizes = [16, 128], strides = [1, 1]} : vector<16x512xf32> to vector<16x128xf32>
    %15 = vector.extract_strided_slice %11 {offsets = [0, 384], sizes = [16, 128], strides = [1, 1]} : vector<16x512xf32> to vector<16x128xf32>
    %c0_8 = arith.constant 0 : index
    %c0_9 = arith.constant 0 : index
    %16 = vector.load %arg4[%c0_8, %c0_9] : memref<128x256xf32, #tpu.memory_space<vmem>>, vector<128x256xf32>
    %cst_10 = arith.constant dense<0.000000e+00> : vector<16x256xf32>
    %17 = tpu.matmul %12, %16, %cst_10 {dimension_numbers = #tpu.dot_dimension_numbers<[1], [0], [0], [1], [0, 0, 1, 1], [], []>} : vector<16x128xf32>, vector<128x256xf32>, vector<16x256xf32> -> vector<16x256xf32>
    %c0_11 = arith.constant 0 : index
    %c0_12 = arith.constant 0 : index
    %18 = vector.load %arg5[%c0_11, %c0_12] : memref<128x896xf32, #tpu.memory_space<vmem>>, vector<128x896xf32>
    %cst_13 = arith.constant dense<0.000000e+00> : vector<16x896xf32>
    %19 = tpu.matmul %14, %18, %cst_13 {dimension_numbers = #tpu.dot_dimension_numbers<[1], [0], [0], [1], [0, 0, 1, 1], [], []>} : vector<16x128xf32>, vector<128x896xf32>, vector<16x896xf32> -> vector<16x896xf32>
    %20 = vector.extract_strided_slice %13 {offsets = [0, 0], sizes = [8, 128], strides = [1, 1]} : vector<16x128xf32> to vector<8x128xf32>
    %21 = vector.extract_strided_slice %15 {offsets = [0, 0], sizes = [8, 128], strides = [1, 1]} : vector<16x128xf32> to vector<8x128xf32>
    %22 = vector.extract_strided_slice %17 {offsets = [0, 0], sizes = [8, 128], strides = [1, 1]} : vector<16x256xf32> to vector<8x128xf32>
    %cst_14 = arith.constant dense<0.000000e+00> : vector<8x8xf32>
    %23 = tpu.matmul %22, %20, %cst_14 {dimension_numbers = #tpu.dot_dimension_numbers<[1], [1], [0], [0], [0, 0, 1, 0], [], []>} : vector<8x128xf32>, vector<8x128xf32>, vector<8x8xf32> -> vector<8x8xf32>
    %c0_15 = arith.constant 0 : index
    %c0_16 = arith.constant 0 : index
    %c0_17 = arith.constant 0 : index
    %c0_18 = arith.constant 0 : index
    %24 = vector.load %arg6[%c0_15, %c0_16, %c0_17, %c0_18] : memref<2x2x8x8xf32, #tpu.memory_space<vmem>>, vector<1x1x8x8xf32>
    %25 = vector.shape_cast %24 : vector<1x1x8x8xf32> to vector<8x8xf32>
    %26 = vector.shape_cast %23 : vector<8x8xf32> to vector<1x1x8x8xf32>
    tpu.vector_store %arg6[%c0_15, %c0_16, %c0_17, %c0_18], %26 {strides = array<i32>} : memref<2x2x8x8xf32, #tpu.memory_space<vmem>>, vector<1x1x8x8xf32>,
    %27 = vector.extract_strided_slice %17 {offsets = [0, 128], sizes = [8, 128], strides = [1, 1]} : vector<16x256xf32> to vector<8x128xf32>
    %cst_19 = arith.constant dense<0.000000e+00> : vector<8x8xf32>
    %28 = tpu.matmul %27, %20, %cst_19 {dimension_numbers = #tpu.dot_dimension_numbers<[1], [1], [0], [0], [0, 0, 1, 0], [], []>} : vector<8x128xf32>, vector<8x128xf32>, vector<8x8xf32> -> vector<8x8xf32>
    %c0_20 = arith.constant 0 : index
    %c1 = arith.constant 1 : index
    %c0_21 = arith.constant 0 : index
    %c0_22 = arith.constant 0 : index
    %29 = vector.load %arg6[%c0_20, %c1, %c0_21, %c0_22] : memref<2x2x8x8xf32, #tpu.memory_space<vmem>>, vector<1x1x8x8xf32>
    %30 = vector.shape_cast %29 : vector<1x1x8x8xf32> to vector<8x8xf32>
    %31 = vector.shape_cast %28 : vector<8x8xf32> to vector<1x1x8x8xf32>
    tpu.vector_store %arg6[%c0_20, %c1, %c0_21, %c0_22], %31 {strides = array<i32>} : memref<2x2x8x8xf32, #tpu.memory_space<vmem>>, vector<1x1x8x8xf32>,
    %32 = vector.extract_strided_slice %19 {offsets = [0, 0], sizes = [8, 128], strides = [1, 1]} : vector<16x896xf32> to vector<8x128xf32>
    %cst_23 = arith.constant dense<0.000000e+00> : vector<8x8xf32>
    %33 = tpu.matmul %32, %21, %cst_23 {dimension_numbers = #tpu.dot_dimension_numbers<[1], [1], [0], [0], [0, 0, 1, 0], [], []>} : vector<8x128xf32>, vector<8x128xf32>, vector<8x8xf32> -> vector<8x8xf32>
    %c0_24 = arith.constant 0 : index
    %c0_25 = arith.constant 0 : index
    %c0_26 = arith.constant 0 : index
    %c0_27 = arith.constant 0 : index
    %34 = vector.load %arg7[%c0_24, %c0_25, %c0_26, %c0_27] : memref<2x7x8x8xf32, #tpu.memory_space<vmem>>, vector<1x1x8x8xf32>
    %35 = vector.shape_cast %34 : vector<1x1x8x8xf32> to vector<8x8xf32>
    %36 = vector.shape_cast %33 : vector<8x8xf32> to vector<1x1x8x8xf32>
    tpu.vector_store %arg7[%c0_24, %c0_25, %c0_26, %c0_27], %36 {strides = array<i32>} : memref<2x7x8x8xf32, #tpu.memory_space<vmem>>, vector<1x1x8x8xf32>,
    %37 = vector.extract_strided_slice %19 {offsets = [0, 128], sizes = [8, 128], strides = [1, 1]} : vector<16x896xf32> to vector<8x128xf32>
    %cst_28 = arith.constant dense<0.000000e+00> : vector<8x8xf32>
    %38 = tpu.matmul %37, %21, %cst_28 {dimension_numbers = #tpu.dot_dimension_numbers<[1], [1], [0], [0], [0, 0, 1, 0], [], []>} : vector<8x128xf32>, vector<8x128xf32>, vector<8x8xf32> -> vector<8x8xf32>
    %c0_29 = arith.constant 0 : index
    %c1_30 = arith.constant 1 : index
    %c0_31 = arith.constant 0 : index
    %c0_32 = arith.constant 0 : index
    %39 = vector.load %arg7[%c0_29, %c1_30, %c0_31, %c0_32] : memref<2x7x8x8xf32, #tpu.memory_space<vmem>>, vector<1x1x8x8xf32>
    %40 = vector.shape_cast %39 : vector<1x1x8x8xf32> to vector<8x8xf32>
    %41 = vector.shape_cast %38 : vector<8x8xf32> to vector<1x1x8x8xf32>
    tpu.vector_store %arg7[%c0_29, %c1_30, %c0_31, %c0_32], %41 {strides = array<i32>} : memref<2x7x8x8xf32, #tpu.memory_space<vmem>>, vector<1x1x8x8xf32>,
    %42 = vector.extract_strided_slice %19 {offsets = [0, 256], sizes = [8, 128], strides = [1, 1]} : vector<16x896xf32> to vector<8x128xf32>
    %cst_33 = arith.constant dense<0.000000e+00> : vector<8x8xf32>
    %43 = tpu.matmul %42, %21, %cst_33 {dimension_numbers = #tpu.dot_dimension_numbers<[1], [1], [0], [0], [0, 0, 1, 0], [], []>} : vector<8x128xf32>, vector<8x128xf32>, vector<8x8xf32> -> vector<8x8xf32>
    %c0_34 = arith.constant 0 : index
    %c2 = arith.constant 2 : index
    %c0_35 = arith.constant 0 : index
    %c0_36 = arith.constant 0 : index
    %44 = vector.load %arg7[%c0_34, %c2, %c0_35, %c0_36] : memref<2x7x8x8xf32, #tpu.memory_space<vmem>>, vector<1x1x8x8xf32>
    %45 = vector.shape_cast %44 : vector<1x1x8x8xf32> to vector<8x8xf32>
    %46 = vector.shape_cast %43 : vector<8x8xf32> to vector<1x1x8x8xf32>
    tpu.vector_store %arg7[%c0_34, %c2, %c0_35, %c0_36], %46 {strides = array<i32>} : memref<2x7x8x8xf32, #tpu.memory_space<vmem>>, vector<1x1x8x8xf32>,
    %47 = vector.extract_strided_slice %19 {offsets = [0, 384], sizes = [8, 128], strides = [1, 1]} : vector<16x896xf32> to vector<8x128xf32>
    %cst_37 = arith.constant dense<0.000000e+00> : vector<8x8xf32>
    %48 = tpu.matmul %47, %21, %cst_37 {dimension_numbers = #tpu.dot_dimension_numbers<[1], [1], [0], [0], [0, 0, 1, 0], [], []>} : vector<8x128xf32>, vector<8x128xf32>, vector<8x8xf32> -> vector<8x8xf32>
    %c0_38 = arith.constant 0 : index
    %c3 = arith.constant 3 : index
    %c0_39 = arith.constant 0 : index
    %c0_40 = arith.constant 0 : index
    %49 = vector.load %arg7[%c0_38, %c3, %c0_39, %c0_40] : memref<2x7x8x8xf32, #tpu.memory_space<vmem>>, vector<1x1x8x8xf32>
    %50 = vector.shape_cast %49 : vector<1x1x8x8xf32> to vector<8x8xf32>
    %51 = vector.shape_cast %48 : vector<8x8xf32> to vector<1x1x8x8xf32>
    tpu.vector_store %arg7[%c0_38, %c3, %c0_39, %c0_40], %51 {strides = array<i32>} : memref<2x7x8x8xf32, #tpu.memory_space<vmem>>, vector<1x1x8x8xf32>,
    %52 = vector.extract_strided_slice %19 {offsets = [0, 512], sizes = [8, 128], strides = [1, 1]} : vector<16x896xf32> to vector<8x128xf32>
    %cst_41 = arith.constant dense<0.000000e+00> : vector<8x8xf32>
    %53 = tpu.matmul %52, %21, %cst_41 {dimension_numbers = #tpu.dot_dimension_numbers<[1], [1], [0], [0], [0, 0, 1, 0], [], []>} : vector<8x128xf32>, vector<8x128xf32>, vector<8x8xf32> -> vector<8x8xf32>
    %c0_42 = arith.constant 0 : index
    %c4 = arith.constant 4 : index
    %c0_43 = arith.constant 0 : index
    %c0_44 = arith.constant 0 : index
    %54 = vector.load %arg7[%c0_42, %c4, %c0_43, %c0_44] : memref<2x7x8x8xf32, #tpu.memory_space<vmem>>, vector<1x1x8x8xf32>
    %55 = vector.shape_cast %54 : vector<1x1x8x8xf32> to vector<8x8xf32>
    %56 = vector.shape_cast %53 : vector<8x8xf32> to vector<1x1x8x8xf32>
    tpu.vector_store %arg7[%c0_42, %c4, %c0_43, %c0_44], %56 {strides = array<i32>} : memref<2x7x8x8xf32, #tpu.memory_space<vmem>>, vector<1x1x8x8xf32>,
    %57 = vector.extract_strided_slice %19 {offsets = [0, 640], sizes = [8, 128], strides = [1, 1]} : vector<16x896xf32> to vector<8x128xf32>
    %cst_45 = arith.constant dense<0.000000e+00> : vector<8x8xf32>
    %58 = tpu.matmul %57, %21, %cst_45 {dimension_numbers = #tpu.dot_dimension_numbers<[1], [1], [0], [0], [0, 0, 1, 0], [], []>} : vector<8x128xf32>, vector<8x128xf32>, vector<8x8xf32> -> vector<8x8xf32>
    %c0_46 = arith.constant 0 : index
    %c5 = arith.constant 5 : index
    %c0_47 = arith.constant 0 : index
    %c0_48 = arith.constant 0 : index
    %59 = vector.load %arg7[%c0_46, %c5, %c0_47, %c0_48] : memref<2x7x8x8xf32, #tpu.memory_space<vmem>>, vector<1x1x8x8xf32>
    %60 = vector.shape_cast %59 : vector<1x1x8x8xf32> to vector<8x8xf32>
    %61 = vector.shape_cast %58 : vector<8x8xf32> to vector<1x1x8x8xf32>
    tpu.vector_store %arg7[%c0_46, %c5, %c0_47, %c0_48], %61 {strides = array<i32>} : memref<2x7x8x8xf32, #tpu.memory_space<vmem>>, vector<1x1x8x8xf32>,
    %62 = vector.extract_strided_slice %19 {offsets = [0, 768], sizes = [8, 128], strides = [1, 1]} : vector<16x896xf32> to vector<8x128xf32>
    %cst_49 = arith.constant dense<0.000000e+00> : vector<8x8xf32>
    %63 = tpu.matmul %62, %21, %cst_49 {dimension_numbers = #tpu.dot_dimension_numbers<[1], [1], [0], [0], [0, 0, 1, 0], [], []>} : vector<8x128xf32>, vector<8x128xf32>, vector<8x8xf32> -> vector<8x8xf32>
    %c0_50 = arith.constant 0 : index
    %c6 = arith.constant 6 : index
    %c0_51 = arith.constant 0 : index
    %c0_52 = arith.constant 0 : index
    %64 = vector.load %arg7[%c0_50, %c6, %c0_51, %c0_52] : memref<2x7x8x8xf32, #tpu.memory_space<vmem>>, vector<1x1x8x8xf32>
    %65 = vector.shape_cast %64 : vector<1x1x8x8xf32> to vector<8x8xf32>
    %66 = vector.shape_cast %63 : vector<8x8xf32> to vector<1x1x8x8xf32>
    tpu.vector_store %arg7[%c0_50, %c6, %c0_51, %c0_52], %66 {strides = array<i32>} : memref<2x7x8x8xf32, #tpu.memory_space<vmem>>, vector<1x1x8x8xf32>,
    %67 = vector.extract_strided_slice %13 {offsets = [8, 0], sizes = [8, 128], strides = [1, 1]} : vector<16x128xf32> to vector<8x128xf32>
    %68 = vector.extract_strided_slice %15 {offsets = [8, 0], sizes = [8, 128], strides = [1, 1]} : vector<16x128xf32> to vector<8x128xf32>
    %69 = vector.extract_strided_slice %17 {offsets = [8, 0], sizes = [8, 128], strides = [1, 1]} : vector<16x256xf32> to vector<8x128xf32>
    %cst_53 = arith.constant dense<0.000000e+00> : vector<8x8xf32>
    %70 = tpu.matmul %69, %67, %cst_53 {dimension_numbers = #tpu.dot_dimension_numbers<[1], [1], [0], [0], [0, 0, 1, 0], [], []>} : vector<8x128xf32>, vector<8x128xf32>, vector<8x8xf32> -> vector<8x8xf32>
    %c1_54 = arith.constant 1 : index
    %c0_55 = arith.constant 0 : index
    %c0_56 = arith.constant 0 : index
    %c0_57 = arith.constant 0 : index
    %71 = vector.load %arg6[%c1_54, %c0_55, %c0_56, %c0_57] : memref<2x2x8x8xf32, #tpu.memory_space<vmem>>, vector<1x1x8x8xf32>
    %72 = vector.shape_cast %71 : vector<1x1x8x8xf32> to vector<8x8xf32>
    %73 = vector.shape_cast %70 : vector<8x8xf32> to vector<1x1x8x8xf32>
    tpu.vector_store %arg6[%c1_54, %c0_55, %c0_56, %c0_57], %73 {strides = array<i32>} : memref<2x2x8x8xf32, #tpu.memory_space<vmem>>, vector<1x1x8x8xf32>,
    %74 = vector.extract_strided_slice %17 {offsets = [8, 128], sizes = [8, 128], strides = [1, 1]} : vector<16x256xf32> to vector<8x128xf32>
    %cst_58 = arith.constant dense<0.000000e+00> : vector<8x8xf32>
    %75 = tpu.matmul %74, %67, %cst_58 {dimension_numbers = #tpu.dot_dimension_numbers<[1], [1], [0], [0], [0, 0, 1, 0], [], []>} : vector<8x128xf32>, vector<8x128xf32>, vector<8x8xf32> -> vector<8x8xf32>
    %c1_59 = arith.constant 1 : index
    %c1_60 = arith.constant 1 : index
    %c0_61 = arith.constant 0 : index
    %c0_62 = arith.constant 0 : index
    %76 = vector.load %arg6[%c1_59, %c1_60, %c0_61, %c0_62] : memref<2x2x8x8xf32, #tpu.memory_space<vmem>>, vector<1x1x8x8xf32>
    %77 = vector.shape_cast %76 : vector<1x1x8x8xf32> to vector<8x8xf32>
    %78 = vector.shape_cast %75 : vector<8x8xf32> to vector<1x1x8x8xf32>
    tpu.vector_store %arg6[%c1_59, %c1_60, %c0_61, %c0_62], %78 {strides = array<i32>} : memref<2x2x8x8xf32, #tpu.memory_space<vmem>>, vector<1x1x8x8xf32>,
    %79 = vector.extract_strided_slice %19 {offsets = [8, 0], sizes = [8, 128], strides = [1, 1]} : vector<16x896xf32> to vector<8x128xf32>
    %cst_63 = arith.constant dense<0.000000e+00> : vector<8x8xf32>
    %80 = tpu.matmul %79, %68, %cst_63 {dimension_numbers = #tpu.dot_dimension_numbers<[1], [1], [0], [0], [0, 0, 1, 0], [], []>} : vector<8x128xf32>, vector<8x128xf32>, vector<8x8xf32> -> vector<8x8xf32>
    %c1_64 = arith.constant 1 : index
    %c0_65 = arith.constant 0 : index
    %c0_66 = arith.constant 0 : index
    %c0_67 = arith.constant 0 : index
    %81 = vector.load %arg7[%c1_64, %c0_65, %c0_66, %c0_67] : memref<2x7x8x8xf32, #tpu.memory_space<vmem>>, vector<1x1x8x8xf32>
    %82 = vector.shape_cast %81 : vector<1x1x8x8xf32> to vector<8x8xf32>
    %83 = vector.shape_cast %80 : vector<8x8xf32> to vector<1x1x8x8xf32>
    tpu.vector_store %arg7[%c1_64, %c0_65, %c0_66, %c0_67], %83 {strides = array<i32>} : memref<2x7x8x8xf32, #tpu.memory_space<vmem>>, vector<1x1x8x8xf32>,
    %84 = vector.extract_strided_slice %19 {offsets = [8, 128], sizes = [8, 128], strides = [1, 1]} : vector<16x896xf32> to vector<8x128xf32>
    %cst_68 = arith.constant dense<0.000000e+00> : vector<8x8xf32>
    %85 = tpu.matmul %84, %68, %cst_68 {dimension_numbers = #tpu.dot_dimension_numbers<[1], [1], [0], [0], [0, 0, 1, 0], [], []>} : vector<8x128xf32>, vector<8x128xf32>, vector<8x8xf32> -> vector<8x8xf32>
    %c1_69 = arith.constant 1 : index
    %c1_70 = arith.constant 1 : index
    %c0_71 = arith.constant 0 : index
    %c0_72 = arith.constant 0 : index
    %86 = vector.load %arg7[%c1_69, %c1_70, %c0_71, %c0_72] : memref<2x7x8x8xf32, #tpu.memory_space<vmem>>, vector<1x1x8x8xf32>
    %87 = vector.shape_cast %86 : vector<1x1x8x8xf32> to vector<8x8xf32>
    %88 = vector.shape_cast %85 : vector<8x8xf32> to vector<1x1x8x8xf32>
    tpu.vector_store %arg7[%c1_69, %c1_70, %c0_71, %c0_72], %88 {strides = array<i32>} : memref<2x7x8x8xf32, #tpu.memory_space<vmem>>, vector<1x1x8x8xf32>,
    %89 = vector.extract_strided_slice %19 {offsets = [8, 256], sizes = [8, 128], strides = [1, 1]} : vector<16x896xf32> to vector<8x128xf32>
    %cst_73 = arith.constant dense<0.000000e+00> : vector<8x8xf32>
    %90 = tpu.matmul %89, %68, %cst_73 {dimension_numbers = #tpu.dot_dimension_numbers<[1], [1], [0], [0], [0, 0, 1, 0], [], []>} : vector<8x128xf32>, vector<8x128xf32>, vector<8x8xf32> -> vector<8x8xf32>
    %c1_74 = arith.constant 1 : index
    %c2_75 = arith.constant 2 : index
    %c0_76 = arith.constant 0 : index
    %c0_77 = arith.constant 0 : index
    %91 = vector.load %arg7[%c1_74, %c2_75, %c0_76, %c0_77] : memref<2x7x8x8xf32, #tpu.memory_space<vmem>>, vector<1x1x8x8xf32>
    %92 = vector.shape_cast %91 : vector<1x1x8x8xf32> to vector<8x8xf32>
    %93 = vector.shape_cast %90 : vector<8x8xf32> to vector<1x1x8x8xf32>
    tpu.vector_store %arg7[%c1_74, %c2_75, %c0_76, %c0_77], %93 {strides = array<i32>} : memref<2x7x8x8xf32, #tpu.memory_space<vmem>>, vector<1x1x8x8xf32>,
    %94 = vector.extract_strided_slice %19 {offsets = [8, 384], sizes = [8, 128], strides = [1, 1]} : vector<16x896xf32> to vector<8x128xf32>
    %cst_78 = arith.constant dense<0.000000e+00> : vector<8x8xf32>
    %95 = tpu.matmul %94, %68, %cst_78 {dimension_numbers = #tpu.dot_dimension_numbers<[1], [1], [0], [0], [0, 0, 1, 0], [], []>} : vector<8x128xf32>, vector<8x128xf32>, vector<8x8xf32> -> vector<8x8xf32>
    %c1_79 = arith.constant 1 : index
    %c3_80 = arith.constant 3 : index
    %c0_81 = arith.constant 0 : index
    %c0_82 = arith.constant 0 : index
    %96 = vector.load %arg7[%c1_79, %c3_80, %c0_81, %c0_82] : memref<2x7x8x8xf32, #tpu.memory_space<vmem>>, vector<1x1x8x8xf32>
    %97 = vector.shape_cast %96 : vector<1x1x8x8xf32> to vector<8x8xf32>
    %98 = vector.shape_cast %95 : vector<8x8xf32> to vector<1x1x8x8xf32>
    tpu.vector_store %arg7[%c1_79, %c3_80, %c0_81, %c0_82], %98 {strides = array<i32>} : memref<2x7x8x8xf32, #tpu.memory_space<vmem>>, vector<1x1x8x8xf32>,
    %99 = vector.extract_strided_slice %19 {offsets = [8, 512], sizes = [8, 128], strides = [1, 1]} : vector<16x896xf32> to vector<8x128xf32>
    %cst_83 = arith.constant dense<0.000000e+00> : vector<8x8xf32>
    %100 = tpu.matmul %99, %68, %cst_83 {dimension_numbers = #tpu.dot_dimension_numbers<[1], [1], [0], [0], [0, 0, 1, 0], [], []>} : vector<8x128xf32>, vector<8x128xf32>, vector<8x8xf32> -> vector<8x8xf32>
    %c1_84 = arith.constant 1 : index
    %c4_85 = arith.constant 4 : index
    %c0_86 = arith.constant 0 : index
    %c0_87 = arith.constant 0 : index
    %101 = vector.load %arg7[%c1_84, %c4_85, %c0_86, %c0_87] : memref<2x7x8x8xf32, #tpu.memory_space<vmem>>, vector<1x1x8x8xf32>
    %102 = vector.shape_cast %101 : vector<1x1x8x8xf32> to vector<8x8xf32>
    %103 = vector.shape_cast %100 : vector<8x8xf32> to vector<1x1x8x8xf32>
    tpu.vector_store %arg7[%c1_84, %c4_85, %c0_86, %c0_87], %103 {strides = array<i32>} : memref<2x7x8x8xf32, #tpu.memory_space<vmem>>, vector<1x1x8x8xf32>,
    %104 = vector.extract_strided_slice %19 {offsets = [8, 640], sizes = [8, 128], strides = [1, 1]} : vector<16x896xf32> to vector<8x128xf32>
    %cst_88 = arith.constant dense<0.000000e+00> : vector<8x8xf32>
    %105 = tpu.matmul %104, %68, %cst_88 {dimension_numbers = #tpu.dot_dimension_numbers<[1], [1], [0], [0], [0, 0, 1, 0], [], []>} : vector<8x128xf32>, vector<8x128xf32>, vector<8x8xf32> -> vector<8x8xf32>
    %c1_89 = arith.constant 1 : index
    %c5_90 = arith.constant 5 : index
    %c0_91 = arith.constant 0 : index
    %c0_92 = arith.constant 0 : index
    %106 = vector.load %arg7[%c1_89, %c5_90, %c0_91, %c0_92] : memref<2x7x8x8xf32, #tpu.memory_space<vmem>>, vector<1x1x8x8xf32>
    %107 = vector.shape_cast %106 : vector<1x1x8x8xf32> to vector<8x8xf32>
    %108 = vector.shape_cast %105 : vector<8x8xf32> to vector<1x1x8x8xf32>
    tpu.vector_store %arg7[%c1_89, %c5_90, %c0_91, %c0_92], %108 {strides = array<i32>} : memref<2x7x8x8xf32, #tpu.memory_space<vmem>>, vector<1x1x8x8xf32>,
    %109 = vector.extract_strided_slice %19 {offsets = [8, 768], sizes = [8, 128], strides = [1, 1]} : vector<16x896xf32> to vector<8x128xf32>
    %cst_93 = arith.constant dense<0.000000e+00> : vector<8x8xf32>
    %110 = tpu.matmul %109, %68, %cst_93 {dimension_numbers = #tpu.dot_dimension_numbers<[1], [1], [0], [0], [0, 0, 1, 0], [], []>} : vector<8x128xf32>, vector<8x128xf32>, vector<8x8xf32> -> vector<8x8xf32>
    %c1_94 = arith.constant 1 : index
    %c6_95 = arith.constant 6 : index
    %c0_96 = arith.constant 0 : index
    %c0_97 = arith.constant 0 : index
    %111 = vector.load %arg7[%c1_94, %c6_95, %c0_96, %c0_97] : memref<2x7x8x8xf32, #tpu.memory_space<vmem>>, vector<1x1x8x8xf32>
    %112 = vector.shape_cast %111 : vector<1x1x8x8xf32> to vector<8x8xf32>
    %113 = vector.shape_cast %110 : vector<8x8xf32> to vector<1x1x8x8xf32>
    tpu.vector_store %arg7[%c1_94, %c6_95, %c0_96, %c0_97], %113 {strides = array<i32>} : memref<2x7x8x8xf32, #tpu.memory_space<vmem>>, vector<1x1x8x8xf32>,
    return
  }
  func.func @transform_0(%arg0: i32) -> (i32, i32, i32) {
    %c0_i32 = arith.constant 0 : i32
    %c0_i32_0 = arith.constant 0 : i32
    %c0_i32_1 = arith.constant 0 : i32
    return %arg0, %c0_i32, %c0_i32_0 : i32, i32, i32
  }
  func.func @transform_1(%arg0: i32) -> (i32, i32) {
    %c0_i32 = arith.constant 0 : i32
    %c0_i32_0 = arith.constant 0 : i32
    %c0_i32_1 = arith.constant 0 : i32
    return %c0_i32, %c0_i32_0 : i32, i32
  }
  func.func @transform_2(%arg0: i32) -> (i32, i32) {
    %c0_i32 = arith.constant 0 : i32
    %c0_i32_0 = arith.constant 0 : i32
    %c0_i32_1 = arith.constant 0 : i32
    return %c0_i32, %c0_i32_0 : i32, i32
  }
  func.func @transform_3(%arg0: i32) -> (i32, i32) {
    %c0_i32 = arith.constant 0 : i32
    %c0_i32_0 = arith.constant 0 : i32
    %c0_i32_1 = arith.constant 0 : i32
    return %c0_i32, %c0_i32_0 : i32, i32
  }
  func.func @transform_4(%arg0: i32) -> (i32, i32) {
    %c0_i32 = arith.constant 0 : i32
    %c0_i32_0 = arith.constant 0 : i32
    %c0_i32_1 = arith.constant 0 : i32
    return %c0_i32, %c0_i32_0 : i32, i32
  }
  func.func @transform_5(%arg0: i32) -> (i32, i32, i32, i32) {
    %c0_i32 = arith.constant 0 : i32
    %c0_i32_0 = arith.constant 0 : i32
    %c0_i32_1 = arith.constant 0 : i32
    %c0_i32_2 = arith.constant 0 : i32
    return %arg0, %c0_i32, %c0_i32_0, %c0_i32_1 : i32, i32, i32, i32
  }
  func.func @transform_6(%arg0: i32) -> (i32, i32, i32, i32) {
    %c0_i32 = arith.constant 0 : i32
    %c0_i32_0 = arith.constant 0 : i32
    %c0_i32_1 = arith.constant 0 : i32
    %c0_i32_2 = arith.constant 0 : i32
    return %arg0, %c0_i32, %c0_i32_0, %c0_i32_1 : i32, i32, i32, i32
  }
}

</mosaic_0001>

<llo_original>
// kernel: tpu_custom_call.1
$region0: #{tpu_custom_call.1}
  #allocation0 [shape = 'u32[]', space=smem, size = 0x4, offset = 0x4, fixed_abs, tag = 'smem constant byte address 0x4 - core index']
  #allocation1 [shape = 'u32[144,128]{1,0:T(1,128)}', space=vmem, size = 0x12000, scoped, tag = 'internal scratch']
  %s0 = inlined_call_operand.hbm [shape: f32[4,8,128], index: 0, kind: input, shape index: {}]
  %s1 = inlined_call_operand.hbm [shape: f32[128,512], index: 1, kind: input, shape index: {}]
  %s2 = inlined_call_operand.hbm [shape: f32[1,512], index: 2, kind: input, shape index: {}]
  %s3 = inlined_call_operand.hbm [shape: f32[128,256], index: 3, kind: input, shape index: {}]
  %s4 = inlined_call_operand.hbm [shape: f32[128,896], index: 4, kind: input, shape index: {}]
  %s5 = inlined_call_operand.hbm [shape: f32[4,2,8,8], index: 5, kind: output, shape index: {0}]
  %s6 = inlined_call_operand.hbm [shape: f32[4,7,8,8], index: 6, kind: output, shape index: {1}]
  %7 = xla_tuple %s5, %s6
  %s8 = sld [smem:[#allocation0]]
  $region81: #{tpu_custom_call.1} parent=0
    _
  %s10 = ssub.s32 1, %s8
  %s11 = scalar_select 0, %s10, %s8
  $region1: #{tpu_custom_call.1} parent=0
    #allocation2 [shape = 'u8[16384]{0}', space=vmem, size = 0x4000, scoped, tag = 'input window, operand 0']
    #allocation3 [shape = 's32[2]{0}', space=sflag, size = 0x8, scoped, tag = 'scoped memory for tpu_custom_call.1']
    #allocation4 [shape = 's32[2]{0}', space=sflag, size = 0x8, scoped, tag = 'scoped memory for tpu_custom_call.1']
    #allocation5 [shape = 'u8[262144]{0}', space=vmem, size = 0x40000, scoped, tag = 'input window, operand 1, single buffered']
    #allocation6 [shape = 's32[1]{0}', space=sflag, size = 0x4, scoped, tag = 'scoped memory for tpu_custom_call.1']
    #allocation7 [shape = 'u8[2048]{0}', space=vmem, size = 0x800, scoped, tag = 'input window, operand 2, single buffered']
    #allocation8 [shape = 'u8[131072]{0}', space=vmem, size = 0x20000, scoped, tag = 'input window, operand 3, single buffered']
    #allocation9 [shape = 's32[1]{0}', space=sflag, size = 0x4, scoped, tag = 'scoped memory for tpu_custom_call.1']
    #allocation10 [shape = 'u8[458752]{0}', space=vmem, size = 0x70000, scoped, tag = 'input window, operand 4, single buffered']
    #allocation11 [shape = 'u8[32768]{0}', space=vmem, size = 0x8000, scoped, tag = 'output window, operand 0']
    #allocation12 [shape = 'u8[114688]{0}', space=vmem, size = 0x1c000, scoped, tag = 'output window, operand 1']
    #allocation13 [shape = 's32[2]{0}', space=sflag, size = 0x8, scoped, tag = 'scoped memory for tpu_custom_call.1']
    %12 = vsyncpa [#allocation3], 0
    %s13 = scalar_lea.sflag [#allocation3], 1
    %14 = vsyncpa %s13, 0
    %15 = vsyncpa [#allocation6], 0
    %16 = vsyncpa [#allocation9], 0
    %17 = vsyncpa [#allocation4], 0
    %s18 = scalar_lea.sflag [#allocation4], 1
    %19 = vsyncpa %s18, 0
    %20 = vsyncpa [#allocation13], 0
    %s21 = scalar_lea.sflag [#allocation13], 1
    %22 = vsyncpa %s21, 0
    loop: start=0, step=1, limit=4
    $region2: #{tpu_custom_call.1} parent=1 // loop_pre_header
      _
    $region3: #{tpu_custom_call.1} parent=1 // loop_header
      %s24 = sphi 0, %s28
      %p25 = scmp.ge.s32.totalorder %s24, 4
      %s34 = sphi 0, %s36
      %s37 = sphi 0, %s34
      %s38 = sphi 0, %s37
      %s54 = sphi 0, %s38
      %s58 = sphi 0, %s58
      %s60 = sphi 0, %s58
      %s61 = sphi 0, %s60
      %s75 = sphi 0, %s61
      %s79 = sphi 0, %s79
      %s81 = sphi 0, %s79
      %s82 = sphi 0, %s81
      %s96 = sphi 0, %s82
      %s100 = sphi 0, %s100
      %s102 = sphi 0, %s100
      %s103 = sphi 0, %s102
      %s117 = sphi 0, %s103
      %s121 = sphi 0, %s121
      %s123 = sphi 0, %s121
      %s124 = sphi 0, %s123
      %s138 = sphi 0, %s124
      %s144 = sphi 0, %s146
      %s147 = sphi 0, %s144
      %s148 = sphi 0, %s147
      %s164 = sphi 0, %s148
      %s170 = sphi 0, %s172
      %s173 = sphi 0, %s170
      %s174 = sphi 0, %s173
      %s190 = sphi 0, %s174
    $region4: #{tpu_custom_call.1} parent=1 // loop_header_branch
      %27 = sbr.rel (%p25) target = $region8
    $region5: #{tpu_custom_call.1} parent=1 // loop_body
      %s29 = ssub.s32 %s24, 1
      %s30 = ssub.s32 %s24, 2
      %s31 = sadd.s32 %s24, 1
      %s32 = ssub.s32 %s24, %s31
      %p33 = scmp.eq.s32.totalorder %s32, 0
      %s35 = sadd.s32 %s34, 1
      %s36 = scalar_select %p33, %s34, %s35
      %p39 = pneg %p33
      %p40 = scmp.eq.s32.totalorder %s24, 1
      %p41 = por %p39, %p40
      %p42 = scmp.ne.s32.totalorder %s34, %s37
      %p43 = scmp.eq.s32.totalorder %s24, 0
      %p44 = por %p42, %p43
      %p45 = scmp.ne.s32.totalorder %s34, %s37
      %p46 = scmp.eq.s32.totalorder %s29, 1
      %p47 = por %p45, %p46
      %p48 = scmp.ne.s32.totalorder %s37, %s38
      %p49 = scmp.eq.s32.totalorder %s29, 0
      %p50 = por %p48, %p49
      %p51 = scmp.ne.s32.totalorder %s37, %s38
      %p52 = scmp.eq.s32.totalorder %s30, 1
      %p53 = por %p51, %p52
      %p55 = scmp.ne.s32.totalorder %s38, %s54
      %p56 = scmp.eq.s32.totalorder %s30, 0
      %p57 = por %p55, %p56
      %s59 = sadd.s32 %s58, 1
      %p62 = scmp.eq.s32.totalorder %s24, 1
      %p63 = scmp.ne.s32.totalorder %s58, %s60
      %p64 = scmp.eq.s32.totalorder %s24, 0
      %p65 = por %p63, %p64
      %p66 = scmp.ne.s32.totalorder %s58, %s60
      %p67 = scmp.eq.s32.totalorder %s29, 1
      %p68 = por %p66, %p67
      %p69 = scmp.ne.s32.totalorder %s60, %s61
      %p70 = scmp.eq.s32.totalorder %s29, 0
      %p71 = por %p69, %p70
      %p72 = scmp.ne.s32.totalorder %s60, %s61
      %p73 = scmp.eq.s32.totalorder %s30, 1
      %p74 = por %p72, %p73
      %p76 = scmp.ne.s32.totalorder %s61, %s75
      %p77 = scmp.eq.s32.totalorder %s30, 0
      %p78 = por %p76, %p77
      %s80 = sadd.s32 %s79, 1
      %p83 = scmp.eq.s32.totalorder %s24, 1
      %p84 = scmp.ne.s32.totalorder %s79, %s81
      %p85 = scmp.eq.s32.totalorder %s24, 0
      %p86 = por %p84, %p85
      %p87 = scmp.ne.s32.totalorder %s79, %s81
      %p88 = scmp.eq.s32.totalorder %s29, 1
      %p89 = por %p87, %p88
      %p90 = scmp.ne.s32.totalorder %s81, %s82
      %p91 = scmp.eq.s32.totalorder %s29, 0
      %p92 = por %p90, %p91
      %p93 = scmp.ne.s32.totalorder %s81, %s82
      %p94 = scmp.eq.s32.totalorder %s30, 1
      %p95 = por %p93, %p94
      %p97 = scmp.ne.s32.totalorder %s82, %s96
      %p98 = scmp.eq.s32.totalorder %s30, 0
      %p99 = por %p97, %p98
      %s101 = sadd.s32 %s100, 1
      %p104 = scmp.eq.s32.totalorder %s24, 1
      %p105 = scmp.ne.s32.totalorder %s100, %s102
      %p106 = scmp.eq.s32.totalorder %s24, 0
      %p107 = por %p105, %p106
      %p108 = scmp.ne.s32.totalorder %s100, %s102
      %p109 = scmp.eq.s32.totalorder %s29, 1
      %p110 = por %p108, %p109
      %p111 = scmp.ne.s32.totalorder %s102, %s103
      %p112 = scmp.eq.s32.totalorder %s29, 0
      %p113 = por %p111, %p112
      %p114 = scmp.ne.s32.totalorder %s102, %s103
      %p115 = scmp.eq.s32.totalorder %s30, 1
      %p116 = por %p114, %p115
      %p118 = scmp.ne.s32.totalorder %s103, %s117
      %p119 = scmp.eq.s32.totalorder %s30, 0
      %p120 = por %p118, %p119
      %s122 = sadd.s32 %s121, 1
      %p125 = scmp.eq.s32.totalorder %s24, 1
      %p126 = scmp.ne.s32.totalorder %s121, %s123
      %p127 = scmp.eq.s32.totalorder %s24, 0
      %p128 = por %p126, %p127
      %p129 = scmp.ne.s32.totalorder %s121, %s123
      %p130 = scmp.eq.s32.totalorder %s29, 1
      %p131 = por %p129, %p130
      %p132 = scmp.ne.s32.totalorder %s123, %s124
      %p133 = scmp.eq.s32.totalorder %s29, 0
      %p134 = por %p132, %p133
      %p135 = scmp.ne.s32.totalorder %s123, %s124
      %p136 = scmp.eq.s32.totalorder %s30, 1
      %p137 = por %p135, %p136
      %p139 = scmp.ne.s32.totalorder %s124, %s138
      %p140 = scmp.eq.s32.totalorder %s30, 0
      %p141 = por %p139, %p140
      %s142 = ssub.s32 %s24, %s31
      %p143 = scmp.eq.s32.totalorder %s142, 0
      %s145 = sadd.s32 %s144, 1
      %s146 = scalar_select %p143, %s144, %s145
      %p149 = pneg %p143
      %p150 = scmp.eq.s32.totalorder %s24, 1
      %p151 = por %p149, %p150
      %p152 = scmp.ne.s32.totalorder %s144, %s147
      %p153 = scmp.eq.s32.totalorder %s24, 0
      %p154 = por %p152, %p153
      %p155 = scmp.ne.s32.totalorder %s144, %s147
      %p156 = scmp.eq.s32.totalorder %s29, 1
      %p157 = por %p155, %p156
      %p158 = scmp.ne.s32.totalorder %s147, %s148
      %p159 = scmp.eq.s32.totalorder %s29, 0
      %p160 = por %p158, %p159
      %p161 = scmp.ne.s32.totalorder %s147, %s148
      %p162 = scmp.eq.s32.totalorder %s30, 1
      %p163 = por %p161, %p162
      %p165 = scmp.ne.s32.totalorder %s148, %s164
      %p166 = scmp.eq.s32.totalorder %s30, 0
      %p167 = por %p165, %p166
      %s168 = ssub.s32 %s24, %s31
      %p169 = scmp.eq.s32.totalorder %s168, 0
      %s171 = sadd.s32 %s170, 1
      %s172 = scalar_select %p169, %s170, %s171
      %p175 = pneg %p169
      %p176 = scmp.eq.s32.totalorder %s24, 1
      %p177 = por %p175, %p176
      %p178 = scmp.ne.s32.totalorder %s170, %s173
      %p179 = scmp.eq.s32.totalorder %s24, 0
      %p180 = por %p178, %p179
      %p181 = scmp.ne.s32.totalorder %s170, %s173
      %p182 = scmp.eq.s32.totalorder %s29, 1
      %p183 = por %p181, %p182
      %p184 = scmp.ne.s32.totalorder %s173, %s174
      %p185 = scmp.eq.s32.totalorder %s29, 0
      %p186 = por %p184, %p185
      %p187 = scmp.ne.s32.totalorder %s173, %s174
      %p188 = scmp.eq.s32.totalorder %s30, 1
      %p189 = por %p187, %p188
      %p191 = scmp.ne.s32.totalorder %s174, %s190
      %p192 = scmp.eq.s32.totalorder %s30, 0
      %p193 = por %p191, %p192
      %p194 = scmp.le.s32.totalorder 1, %s24
      %p195 = scmp.lt.s32.totalorder %s24, 3
      %p196 = pnand %p194, %p195
      %p197 = pneg %p196
      // Predicated region
      $region9: #{tpu_custom_call.1} parent=5 // pred_check
        _
      $region10: #{tpu_custom_call.1} parent=5 // pred_check_branch
        %199 = sbr.rel (%p196) target = $region12
      $region11: #{tpu_custom_call.1} parent=5 // pred_region
        %s200 = ssub.s32 %s24, 1
        // Predicated region
        $region13: #{tpu_custom_call.1} parent=11 // pred_check
          %p201 = pneg %p71
        $region14: #{tpu_custom_call.1} parent=11 // pred_check_branch
          %203 = sbr.rel (%p201) target = $region16
        $region15: #{tpu_custom_call.1} parent=11 // pred_region
          %s205 = ssub.s32 8192, 8192
          %206 = vsyncadd [#allocation6], %s205
          %s207 = sshll.u32 [#allocation5], 4
          %s208 = int_to_ptr.vmem [resolvable:$true] %s207
          %213 = dma.hbm_to_vmem [thread:$0]  %s1, 8192, %s208, [#allocation6], 512, 512, 32
        $region16: #{tpu_custom_call.1} parent=11 // pred_fallthru
          _
        // Predicated region
        $region17: #{tpu_custom_call.1} parent=11 // pred_check
          %p214 = pneg %p92
        $region18: #{tpu_custom_call.1} parent=11 // pred_check_branch
          %216 = sbr.rel (%p214) target = $region20
        $region19: #{tpu_custom_call.1} parent=11 // pred_region
          %s218 = ssub.s32 64, 64
          %219 = vsyncadd [#allocation6], %s218
          %s221 = sshll.u32 [#allocation7], 4
          %s222 = int_to_ptr.vmem [resolvable:$true] %s221
          %224 = dma.hbm_to_vmem [thread:$0]  %s2, 64, %s222, [#allocation6]
        $region20: #{tpu_custom_call.1} parent=11 // pred_fallthru
          _
        // Predicated region
        $region21: #{tpu_custom_call.1} parent=11 // pred_check
          %p225 = pneg %p113
        $region22: #{tpu_custom_call.1} parent=11 // pred_check_branch
          %227 = sbr.rel (%p225) target = $region24
        $region23: #{tpu_custom_call.1} parent=11 // pred_region
          %s229 = ssub.s32 4096, 4096
          %230 = vsyncadd [#allocation9], %s229
          %s231 = sshll.u32 [#allocation8], 4
          %s232 = int_to_ptr.vmem [resolvable:$true] %s231
          %237 = dma.hbm_to_vmem [thread:$0]  %s3, 4096, %s232, [#allocation9], 256, 256, 16
        $region24: #{tpu_custom_call.1} parent=11 // pred_fallthru
          _
        // Predicated region
        $region25: #{tpu_custom_call.1} parent=11 // pred_check
          %p238 = pneg %p134
        $region26: #{tpu_custom_call.1} parent=11 // pred_check_branch
          %240 = sbr.rel (%p238) target = $region28
        $region27: #{tpu_custom_call.1} parent=11 // pred_region
          %s242 = ssub.s32 14336, 14336
          %243 = vsyncadd [#allocation9], %s242
          %s244 = sshll.u32 [#allocation10], 4
          %s245 = int_to_ptr.vmem [resolvable:$true] %s244
          %250 = dma.hbm_to_vmem [thread:$0]  %s4, 14336, %s245, [#allocation9], 896, 896, 56
        $region28: #{tpu_custom_call.1} parent=11 // pred_fallthru
          _
      $region12: #{tpu_custom_call.1} parent=5 // pred_fallthru
        _
      %p251 = scmp.lt.s32.totalorder %s24, 2
      // Predicated region
      $region29: #{tpu_custom_call.1} parent=5 // pred_check
        %p252 = pneg %p251
      $region30: #{tpu_custom_call.1} parent=5 // pred_check_branch
        %254 = sbr.rel (%p252) target = $region32
      $region31: #{tpu_custom_call.1} parent=5 // pred_region
        // Predicated region
        $region33: #{tpu_custom_call.1} parent=31 // pred_check
          %p255 = pneg %p44
        $region34: #{tpu_custom_call.1} parent=31 // pred_check_branch
          %257 = sbr.rel (%p255) target = $region36
        $region35: #{tpu_custom_call.1} parent=31 // pred_region
          %s258 = sand.u32 %s34, 1
          %s259 = scalar_lea.sflag [#allocation3], %s258
          %s260 = sand.u32 %s34, 1
          %s261 = smul.addr %s260, 16
          %s262 = scalar_lea.vmem [#allocation2], %s261
          %s263 = smul.u32 2, %s24
          %s265 = ssub.s32 256, 256
          %266 = vsyncadd %s259, %s265
          %s267 = smul.addr %s263, 128
          %s268 = scalar_lea.hbm %s0, %s267
          %s269 = sshll.u32 %s262, 4
          %s270 = int_to_ptr.vmem [resolvable:$true] %s269
          %275 = dma.hbm_to_vmem [thread:$0]  %s268, 256, %s270, %s259, 128, 128, 8
        $region36: #{tpu_custom_call.1} parent=31 // pred_fallthru
          _
      $region32: #{tpu_custom_call.1} parent=5 // pred_fallthru
        _
      %p276 = scmp.le.s32.totalorder 1, %s24
      %p277 = scmp.lt.s32.totalorder %s24, 3
      %p278 = pnand %p276, %p277
      %p279 = pneg %p278
      // Predicated region
      $region37: #{tpu_custom_call.1} parent=5 // pred_check
        _
      $region38: #{tpu_custom_call.1} parent=5 // pred_check_branch
        %281 = sbr.rel (%p278) target = $region40
      $region39: #{tpu_custom_call.1} parent=5 // pred_region
        %s282 = ssub.s32 %s24, 1
        %s283 = sand.u32 %s37, 1
        %s284 = scalar_lea.sflag [#allocation3], %s283
        %s285 = sand.u32 %s37, 1
        %s286 = smul.addr %s285, 16
        %s287 = scalar_lea.vmem [#allocation2], %s286
        // Predicated region
        $region41: #{tpu_custom_call.1} parent=39 // pred_check
          %p288 = pneg %p50
        $region42: #{tpu_custom_call.1} parent=39 // pred_check_branch
          %290 = sbr.rel (%p288) target = $region44
        $region43: #{tpu_custom_call.1} parent=39 // pred_region
          %291 = dma.done %s284, 256
        $region44: #{tpu_custom_call.1} parent=39 // pred_fallthru
          _
        // Predicated region
        $region45: #{tpu_custom_call.1} parent=39 // pred_check
          %p292 = pneg %p71
        $region46: #{tpu_custom_call.1} parent=39 // pred_check_branch
          %294 = sbr.rel (%p292) target = $region48
        $region47: #{tpu_custom_call.1} parent=39 // pred_region
          %295 = dma.done [#allocation6], 8192
        $region48: #{tpu_custom_call.1} parent=39 // pred_fallthru
          _
        // Predicated region
        $region49: #{tpu_custom_call.1} parent=39 // pred_check
          %p296 = pneg %p92
        $region50: #{tpu_custom_call.1} parent=39 // pred_check_branch
          %298 = sbr.rel (%p296) target = $region52
        $region51: #{tpu_custom_call.1} parent=39 // pred_region
          %299 = dma.done [#allocation6], 64
        $region52: #{tpu_custom_call.1} parent=39 // pred_fallthru
          _
        // Predicated region
        $region53: #{tpu_custom_call.1} parent=39 // pred_check
          %p300 = pneg %p113
        $region54: #{tpu_custom_call.1} parent=39 // pred_check_branch
          %302 = sbr.rel (%p300) target = $region56
        $region55: #{tpu_custom_call.1} parent=39 // pred_region
          %303 = dma.done [#allocation9], 4096
        $region56: #{tpu_custom_call.1} parent=39 // pred_fallthru
          _
        // Predicated region
        $region57: #{tpu_custom_call.1} parent=39 // pred_check
          %p304 = pneg %p134
        $region58: #{tpu_custom_call.1} parent=39 // pred_check_branch
          %306 = sbr.rel (%p304) target = $region60
        $region59: #{tpu_custom_call.1} parent=39 // pred_region
          %307 = dma.done [#allocation9], 14336
        $region60: #{tpu_custom_call.1} parent=39 // pred_fallthru
          _
        %s308 = sand.u32 %s37, 1
        %s309 = scalar_lea.sflag [#allocation3], %s308
        %s310 = sand.u32 %s37, 1
        %s311 = smul.addr %s310, 16
        %s312 = scalar_lea.vmem [#allocation2], %s311
        %p313 = pneg %p50
        %p314 = pneg %p47
        %p315 = pneg %p71
        %p316 = pneg %p68
        %p317 = pneg %p92
        %p318 = pneg %p89
        %p319 = pneg %p113
        %p320 = pneg %p110
        %p321 = pneg %p134
        %p322 = pneg %p131
        %p323 = pneg %p160
        %p324 = pneg %p157
        %s325 = sand.u32 %s147, 1
        %s326 = scalar_lea.sflag [#allocation4], %s325
        %s327 = sand.u32 %s147, 1
        %s328 = smul.addr %s327, 32
        %s329 = scalar_lea.vmem [#allocation11], %s328
        %p330 = pneg %p186
        %p331 = pneg %p183
        %s332 = sand.u32 %s173, 1
        %s333 = scalar_lea.sflag [#allocation13], %s332
        %s334 = sand.u32 %s173, 1
        %s335 = smul.addr %s334, 112
        %s336 = scalar_lea.vmem [#allocation12], %s335
        %s337 = smul.u32 2, %s29
        %s338 = smul.u32 2, %s29
        %s339 = smul.u32 2, %s29
        %v340 = vld [vmem:[%s287] sm:$0xff]
        %v341 = vld [vmem:[%s287 + $0x8] sm:$0xff]
        %v342 = vld [vmem:[#allocation5] sm:$0xff]
        %v343 = vld [vmem:[#allocation5 + $0x8] sm:$0xff]
        %v344 = vld [vmem:[#allocation5 + $0x10] sm:$0xff]
        %v345 = vld [vmem:[#allocation5 + $0x18] sm:$0xff]
        %v346 = vld [vmem:[#allocation5 + $0x20] sm:$0xff]
        %v347 = vld [vmem:[#allocation5 + $0x28] sm:$0xff]
        %v348 = vld [vmem:[#allocation5 + $0x30] sm:$0xff]
        %v349 = vld [vmem:[#allocation5 + $0x38] sm:$0xff]
        %v350 = vld [vmem:[#allocation5 + $0x40] sm:$0xff]
        %v351 = vld [vmem:[#allocation5 + $0x48] sm:$0xff]
        %v352 = vld [vmem:[#allocation5 + $0x50] sm:$0xff]
        %v353 = vld [vmem:[#allocation5 + $0x58] sm:$0xff]
        %v354 = vld [vmem:[#allocation5 + $0x60] sm:$0xff]
        %v355 = vld [vmem:[#allocation5 + $0x68] sm:$0xff]
        %v356 = vld [vmem:[#allocation5 + $0x70] sm:$0xff]
        %v357 = vld [vmem:[#allocation5 + $0x78] sm:$0xff]
        %v358 = vld [vmem:[#allocation5 + $0x80] sm:$0xff]
        %v359 = vld [vmem:[#allocation5 + $0x88] sm:$0xff]
        %v360 = vld [vmem:[#allocation5 + $0x90] sm:$0xff]
        %v361 = vld [vmem:[#allocation5 + $0x98] sm:$0xff]
        %v362 = vld [vmem:[#allocation5 + $0xa0] sm:$0xff]
        %v363 = vld [vmem:[#allocation5 + $0xa8] sm:$0xff]
        %v364 = vld [vmem:[#allocation5 + $0xb0] sm:$0xff]
        %v365 = vld [vmem:[#allocation5 + $0xb8] sm:$0xff]
        %v366 = vld [vmem:[#allocation5 + $0xc0] sm:$0xff]
        %v367 = vld [vmem:[#allocation5 + $0xc8] sm:$0xff]
        %v368 = vld [vmem:[#allocation5 + $0xd0] sm:$0xff]
        %v369 = vld [vmem:[#allocation5 + $0xd8] sm:$0xff]
        %v370 = vld [vmem:[#allocation5 + $0xe0] sm:$0xff]
        %v371 = vld [vmem:[#allocation5 + $0xe8] sm:$0xff]
        %v372 = vld [vmem:[#allocation5 + $0xf0] sm:$0xff]
        %v373 = vld [vmem:[#allocation5 + $0xf8] sm:$0xff]
        %v374 = vld [vmem:[#allocation5 + $0x100] sm:$0xff]
        %v375 = vld [vmem:[#allocation5 + $0x108] sm:$0xff]
        %v376 = vld [vmem:[#allocation5 + $0x110] sm:$0xff]
        %v377 = vld [vmem:[#allocation5 + $0x118] sm:$0xff]
        %v378 = vld [vmem:[#allocation5 + $0x120] sm:$0xff]
        %v379 = vld [vmem:[#allocation5 + $0x128] sm:$0xff]
        %v380 = vld [vmem:[#allocation5 + $0x130] sm:$0xff]
        %v381 = vld [vmem:[#allocation5 + $0x138] sm:$0xff]
        %v382 = vld [vmem:[#allocation5 + $0x140] sm:$0xff]
        %v383 = vld [vmem:[#allocation5 + $0x148] sm:$0xff]
        %v384 = vld [vmem:[#allocation5 + $0x150] sm:$0xff]
        %v385 = vld [vmem:[#allocation5 + $0x158] sm:$0xff]
        %v386 = vld [vmem:[#allocation5 + $0x160] sm:$0xff]
        %v387 = vld [vmem:[#allocation5 + $0x168] sm:$0xff]
        %v388 = vld [vmem:[#allocation5 + $0x170] sm:$0xff]
        %v389 = vld [vmem:[#allocation5 + $0x178] sm:$0xff]
        %v390 = vld [vmem:[#allocation5 + $0x180] sm:$0xff]
        %v391 = vld [vmem:[#allocation5 + $0x188] sm:$0xff]
        %v392 = vld [vmem:[#allocation5 + $0x190] sm:$0xff]
        %v393 = vld [vmem:[#allocation5 + $0x198] sm:$0xff]
        %v394 = vld [vmem:[#allocation5 + $0x1a0] sm:$0xff]
        %v395 = vld [vmem:[#allocation5 + $0x1a8] sm:$0xff]
        %v396 = vld [vmem:[#allocation5 + $0x1b0] sm:$0xff]
        %v397 = vld [vmem:[#allocation5 + $0x1b8] sm:$0xff]
        %v398 = vld [vmem:[#allocation5 + $0x1c0] sm:$0xff]
        %v399 = vld [vmem:[#allocation5 + $0x1c8] sm:$0xff]
        %v400 = vld [vmem:[#allocation5 + $0x1d0] sm:$0xff]
        %v401 = vld [vmem:[#allocation5 + $0x1d8] sm:$0xff]
        %v402 = vld [vmem:[#allocation5 + $0x1e0] sm:$0xff]
        %v403 = vld [vmem:[#allocation5 + $0x1e8] sm:$0xff]
        %v404 = vld [vmem:[#allocation5 + $0x1f0] sm:$0xff]
        %v405 = vld [vmem:[#allocation5 + $0x1f8] sm:$0xff]
        %v406 = vld [vmem:[#allocation7] sm:$0xf]
        %v408 = vlaneseq
        %v409 = vshrl.u32 %v408, 7
        %v410 = vsub.s32 0, %v409
        %v411 = vrot.slane %v406, %v410
        %v412 = vlaneseq
        %v413 = vshrl.u32 %v412, 7
        %v414 = vsub.s32 1, %v413
        %v415 = vrot.slane %v406, %v414
        %v416 = vlaneseq
        %v417 = vshrl.u32 %v416, 7
        %v418 = vsub.s32 2, %v417
        %v419 = vrot.slane %v406, %v418
        %v420 = vlaneseq
        %v421 = vshrl.u32 %v420, 7
        %v422 = vsub.s32 3, %v421
        %v423 = vrot.slane %v406, %v422
        %428 = vmatprep.subr.mxu0 %v403
        %429 = vmatpush1.msra.mxu0 %v402
        %430 = vmatprep.subr.mxu0 %v399
        %431 = vmatpush1.msra.mxu0 %v398
        %432 = vmatprep.subr.mxu0 %v395
        %433 = vmatpush1.msra.mxu0 %v394
        %434 = vmatprep.subr.mxu0 %v391
        %435 = vmatpush1.msra.mxu0 %v390
        %436 = vmatprep.subr.mxu0 %v387
        %437 = vmatpush1.msra.mxu0 %v386
        %438 = vmatprep.subr.mxu0 %v383
        %439 = vmatpush1.msra.mxu0 %v382
        %440 = vmatprep.subr.mxu0 %v379
        %441 = vmatpush1.msra.mxu0 %v378
        %442 = vmatprep.subr.mxu0 %v375
        %443 = vmatpush1.msra.mxu0 %v374
        %444 = vmatprep.subr.mxu0 %v371
        %445 = vmatpush1.msra.mxu0 %v370
        %446 = vmatprep.subr.mxu0 %v367
        %447 = vmatpush1.msra.mxu0 %v366
        %448 = vmatprep.subr.mxu0 %v363
        %449 = vmatpush1.msra.mxu0 %v362
        %450 = vmatprep.subr.mxu0 %v359
        %451 = vmatpush1.msra.mxu0 %v358
        %452 = vmatprep.subr.mxu0 %v355
        %453 = vmatpush1.msra.mxu0 %v354
        %454 = vmatprep.subr.mxu0 %v351
        %455 = vmatpush1.msra.mxu0 %v350
        %456 = vmatprep.subr.mxu0 %v347
        %457 = vmatpush1.msra.mxu0 %v346
        %458 = vmatprep.subr.mxu0 %v343
        %459 = vmatpush1.msra.mxu0 %v342
        %460 = vmatprep.subr.mxu0 0.0
        %461 = vmatpush2.msra.mxu0 0.0
        %462 = vmatprep.subr.mxu0 0.0
        %463 = vmatpush2.msra.mxu0 0.0
        %464 = vmatprep.subr.mxu0 0.0
        %465 = vmatpush2.msra.mxu0 0.0
        %466 = vmatprep.subr.mxu0 0.0
        %467 = vmatpush2.msra.mxu0 0.0
        %468 = vmatprep.subr.mxu0 0.0
        %469 = vmatpush2.msra.mxu0 0.0
        %470 = vmatprep.subr.mxu0 0.0
        %471 = vmatpush2.msra.mxu0 0.0
        %472 = vmatprep.subr.mxu0 0.0
        %473 = vmatpush2.msra.mxu0 0.0
        %474 = vmatprep.subr.mxu0 0.0
        %475 = vmatpush2.msra.mxu0 0.0
        %476 = vmatprep.subr.mxu0 0.0
        %477 = vmatpush2.msra.mxu0 0.0
        %478 = vmatprep.subr.mxu0 0.0
        %479 = vmatpush2.msra.mxu0 0.0
        %480 = vmatprep.subr.mxu0 0.0
        %481 = vmatpush2.msra.mxu0 0.0
        %482 = vmatprep.subr.mxu0 0.0
        %483 = vmatpush2.msra.mxu0 0.0
        %484 = vmatprep.subr.mxu0 0.0
        %485 = vmatpush2.msra.mxu0 0.0
        %486 = vmatprep.subr.mxu0 0.0
        %487 = vmatpush2.msra.mxu0 0.0
        %488 = vmatprep.subr.mxu0 0.0
        %489 = vmatpush2.msra.mxu0 0.0
        %490 = vmatprep.subr.mxu0 0.0
        %491 = vmatpush2.msra.mxu0 0.0
        %492 = vmatprep.mubr.f32.mxu0 0.0
        %493 = vmatmul.mubr.f32.gmra.mxu0 %v340
        %v494 = vpop.f32.mrf.mxu0
        %v495 = vadd.f32 %v411, %v494
        %v496 = vpop.f32.mrf.mxu0
        %v497 = vadd.f32 %v415, %v496
        %498 = vmatprep.mubr.f32.mxu0 0.0
        %499 = vmatmul.mubr.f32.gmra.mxu0 %v341
        %v500 = vpop.f32.mrf.mxu0
        %v501 = vadd.f32 %v411, %v500
        %v502 = vpop.f32.mrf.mxu0
        %v503 = vadd.f32 %v415, %v502
        %504 = vdwg.mxu0
        %505 = vmatprep.subr.mxu0 %v405
        %506 = vmatpush1.msra.mxu0 %v404
        %507 = vmatprep.subr.mxu0 %v401
        %508 = vmatpush1.msra.mxu0 %v400
        %509 = vmatprep.subr.mxu0 %v397
        %510 = vmatpush1.msra.mxu0 %v396
        %511 = vmatprep.subr.mxu0 %v393
        %512 = vmatpush1.msra.mxu0 %v392
        %513 = vmatprep.subr.mxu0 %v389
        %514 = vmatpush1.msra.mxu0 %v388
        %515 = vmatprep.subr.mxu0 %v385
        %516 = vmatpush1.msra.mxu0 %v384
        %517 = vmatprep.subr.mxu0 %v381
        %518 = vmatpush1.msra.mxu0 %v380
        %519 = vmatprep.subr.mxu0 %v377
        %520 = vmatpush1.msra.mxu0 %v376
        %521 = vmatprep.subr.mxu0 %v373
        %522 = vmatpush1.msra.mxu0 %v372
        %523 = vmatprep.subr.mxu0 %v369
        %524 = vmatpush1.msra.mxu0 %v368
        %525 = vmatprep.subr.mxu0 %v365
        %526 = vmatpush1.msra.mxu0 %v364
        %527 = vmatprep.subr.mxu0 %v361
        %528 = vmatpush1.msra.mxu0 %v360
        %529 = vmatprep.subr.mxu0 %v357
        %530 = vmatpush1.msra.mxu0 %v356
        %531 = vmatprep.subr.mxu0 %v353
        %532 = vmatpush1.msra.mxu0 %v352
        %533 = vmatprep.subr.mxu0 %v349
        %534 = vmatpush1.msra.mxu0 %v348
        %535 = vmatprep.subr.mxu0 %v345
        %536 = vmatpush1.msra.mxu0 %v344
        %537 = vmatprep.subr.mxu0 0.0
        %538 = vmatpush2.msra.mxu0 0.0
        %539 = vmatprep.subr.mxu0 0.0
        %540 = vmatpush2.msra.mxu0 0.0
        %541 = vmatprep.subr.mxu0 0.0
        %542 = vmatpush2.msra.mxu0 0.0
        %543 = vmatprep.subr.mxu0 0.0
        %544 = vmatpush2.msra.mxu0 0.0
        %545 = vmatprep.subr.mxu0 0.0
        %546 = vmatpush2.msra.mxu0 0.0
        %547 = vmatprep.subr.mxu0 0.0
        %548 = vmatpush2.msra.mxu0 0.0
        %549 = vmatprep.subr.mxu0 0.0
        %550 = vmatpush2.msra.mxu0 0.0
        %551 = vmatprep.subr.mxu0 0.0
        %552 = vmatpush2.msra.mxu0 0.0
        %553 = vmatprep.subr.mxu0 0.0
        %554 = vmatpush2.msra.mxu0 0.0
        %555 = vmatprep.subr.mxu0 0.0
        %556 = vmatpush2.msra.mxu0 0.0
        %557 = vmatprep.subr.mxu0 0.0
        %558 = vmatpush2.msra.mxu0 0.0
        %559 = vmatprep.subr.mxu0 0.0
        %560 = vmatpush2.msra.mxu0 0.0
        %561 = vmatprep.subr.mxu0 0.0
        %562 = vmatpush2.msra.mxu0 0.0
        %563 = vmatprep.subr.mxu0 0.0
        %564 = vmatpush2.msra.mxu0 0.0
        %565 = vmatprep.subr.mxu0 0.0
        %566 = vmatpush2.msra.mxu0 0.0
        %567 = vmatprep.subr.mxu0 0.0
        %568 = vmatpush2.msra.mxu0 0.0
        %569 = vmatprep.mubr.f32.mxu0 0.0
        %570 = vmatmul.mubr.f32.gmra.mxu0 %v340
        %v571 = vpop.f32.mrf.mxu0
        %v572 = vadd.f32 %v419, %v571
        %v573 = vpop.f32.mrf.mxu0
        %v574 = vadd.f32 %v423, %v573
        %575 = vmatprep.mubr.f32.mxu0 0.0
        %576 = vmatmul.mubr.f32.gmra.mxu0 %v341
        %v577 = vpop.f32.mrf.mxu0
        %v578 = vadd.f32 %v419, %v577
        %v579 = vpop.f32.mrf.mxu0
        %v580 = vadd.f32 %v423, %v579
        %581 = vdwg.mxu0
        %vm582 = vcmp.gt.f32.partialorder %v495, 0.0
        %vm583 = vcmp.gt.f32.partialorder %v497, 0.0
        %vm584 = vcmp.gt.f32.partialorder %v572, 0.0
        %vm585 = vcmp.gt.f32.partialorder %v574, 0.0
        %vm586 = vcmp.gt.f32.partialorder %v501, 0.0
        %vm587 = vcmp.gt.f32.partialorder %v503, 0.0
        %vm588 = vcmp.gt.f32.partialorder %v578, 0.0
        %vm589 = vcmp.gt.f32.partialorder %v580, 0.0
        %v590 = vmul.f32 %v495, 0.1
        %v591 = vmul.f32 %v497, 0.1
        %v592 = vmul.f32 %v572, 0.1
        %v593 = vmul.f32 %v574, 0.1
        %v594 = vmul.f32 %v501, 0.1
        %v595 = vmul.f32 %v503, 0.1
        %v596 = vmul.f32 %v578, 0.1
        %v597 = vmul.f32 %v580, 0.1
        %v598 = vsel %vm582, %v495, %v590
        %v599 = vsel %vm583, %v497, %v591
        %v600 = vsel %vm584, %v572, %v592
        %v601 = vsel %vm585, %v574, %v593
        %v602 = vsel %vm586, %v501, %v594
        %v603 = vsel %vm587, %v503, %v595
        %v604 = vsel %vm588, %v578, %v596
        %v605 = vsel %vm589, %v580, %v597
        %v606 = vld [vmem:[#allocation8] sm:$0xff]
        %v607 = vld [vmem:[#allocation8 + $0x8] sm:$0xff]
        %v608 = vld [vmem:[#allocation8 + $0x10] sm:$0xff]
        %v609 = vld [vmem:[#allocation8 + $0x18] sm:$0xff]
        %v610 = vld [vmem:[#allocation8 + $0x20] sm:$0xff]
        %v611 = vld [vmem:[#allocation8 + $0x28] sm:$0xff]
        %v612 = vld [vmem:[#allocation8 + $0x30] sm:$0xff]
        %v613 = vld [vmem:[#allocation8 + $0x38] sm:$0xff]
        %v614 = vld [vmem:[#allocation8 + $0x40] sm:$0xff]
        %v615 = vld [vmem:[#allocation8 + $0x48] sm:$0xff]
        %v616 = vld [vmem:[#allocation8 + $0x50] sm:$0xff]
        %v617 = vld [vmem:[#allocation8 + $0x58] sm:$0xff]
        %v618 = vld [vmem:[#allocation8 + $0x60] sm:$0xff]
        %v619 = vld [vmem:[#allocation8 + $0x68] sm:$0xff]
        %v620 = vld [vmem:[#allocation8 + $0x70] sm:$0xff]
        %v621 = vld [vmem:[#allocation8 + $0x78] sm:$0xff]
        %v622 = vld [vmem:[#allocation8 + $0x80] sm:$0xff]
        %v623 = vld [vmem:[#allocation8 + $0x88] sm:$0xff]
        %v624 = vld [vmem:[#allocation8 + $0x90] sm:$0xff]
        %v625 = vld [vmem:[#allocation8 + $0x98] sm:$0xff]
        %v626 = vld [vmem:[#allocation8 + $0xa0] sm:$0xff]
        %v627 = vld [vmem:[#allocation8 + $0xa8] sm:$0xff]
        %v628 = vld [vmem:[#allocation8 + $0xb0] sm:$0xff]
        %v629 = vld [vmem:[#allocation8 + $0xb8] sm:$0xff]
        %v630 = vld [vmem:[#allocation8 + $0xc0] sm:$0xff]
        %v631 = vld [vmem:[#allocation8 + $0xc8] sm:$0xff]
        %v632 = vld [vmem:[#allocation8 + $0xd0] sm:$0xff]
        %v633 = vld [vmem:[#allocation8 + $0xd8] sm:$0xff]
        %v634 = vld [vmem:[#allocation8 + $0xe0] sm:$0xff]
        %v635 = vld [vmem:[#allocation8 + $0xe8] sm:$0xff]
        %v636 = vld [vmem:[#allocation8 + $0xf0] sm:$0xff]
        %v637 = vld [vmem:[#allocation8 + $0xf8] sm:$0xff]
        %638 = vmatprep.subr.mxu0 %v637
        %639 = vmatpush1.msra.mxu0 %v636
        %640 = vmatprep.subr.mxu0 %v635
        %641 = vmatpush1.msra.mxu0 %v634
        %642 = vmatprep.subr.mxu0 %v633
        %643 = vmatpush1.msra.mxu0 %v632
        %644 = vmatprep.subr.mxu0 %v631
        %645 = vmatpush1.msra.mxu0 %v630
        %646 = vmatprep.subr.mxu0 %v629
        %647 = vmatpush1.msra.mxu0 %v628
        %648 = vmatprep.subr.mxu0 %v627
        %649 = vmatpush1.msra.mxu0 %v626
        %650 = vmatprep.subr.mxu0 %v625
        %651 = vmatpush1.msra.mxu0 %v624
        %652 = vmatprep.subr.mxu0 %v623
        %653 = vmatpush1.msra.mxu0 %v622
        %654 = vmatprep.subr.mxu0 %v621
        %655 = vmatpush1.msra.mxu0 %v620
        %656 = vmatprep.subr.mxu0 %v619
        %657 = vmatpush1.msra.mxu0 %v618
        %658 = vmatprep.subr.mxu0 %v617
        %659 = vmatpush1.msra.mxu0 %v616
        %660 = vmatprep.subr.mxu0 %v615
        %661 = vmatpush1.msra.mxu0 %v614
        %662 = vmatprep.subr.mxu0 %v613
        %663 = vmatpush1.msra.mxu0 %v612
        %664 = vmatprep.subr.mxu0 %v611
        %665 = vmatpush1.msra.mxu0 %v610
        %666 = vmatprep.subr.mxu0 %v609
        %667 = vmatpush1.msra.mxu0 %v608
        %668 = vmatprep.subr.mxu0 %v607
        %669 = vmatpush1.msra.mxu0 %v606
        %670 = vmatprep.subr.mxu0 0.0
        %671 = vmatpush2.msra.mxu0 0.0
        %672 = vmatprep.subr.mxu0 0.0
        %673 = vmatpush2.msra.mxu0 0.0
        %674 = vmatprep.subr.mxu0 0.0
        %675 = vmatpush2.msra.mxu0 0.0
        %676 = vmatprep.subr.mxu0 0.0
        %677 = vmatpush2.msra.mxu0 0.0
        %678 = vmatprep.subr.mxu0 0.0
        %679 = vmatpush2.msra.mxu0 0.0
        %680 = vmatprep.subr.mxu0 0.0
        %681 = vmatpush2.msra.mxu0 0.0
        %682 = vmatprep.subr.mxu0 0.0
        %683 = vmatpush2.msra.mxu0 0.0
        %684 = vmatprep.subr.mxu0 0.0
        %685 = vmatpush2.msra.mxu0 0.0
        %686 = vmatprep.subr.mxu0 0.0
        %687 = vmatpush2.msra.mxu0 0.0
        %688 = vmatprep.subr.mxu0 0.0
        %689 = vmatpush2.msra.mxu0 0.0
        %690 = vmatprep.subr.mxu0 0.0
        %691 = vmatpush2.msra.mxu0 0.0
        %692 = vmatprep.subr.mxu0 0.0
        %693 = vmatpush2.msra.mxu0 0.0
        %694 = vmatprep.subr.mxu0 0.0
        %695 = vmatpush2.msra.mxu0 0.0
        %696 = vmatprep.subr.mxu0 0.0
        %697 = vmatpush2.msra.mxu0 0.0
        %698 = vmatprep.subr.mxu0 0.0
        %699 = vmatpush2.msra.mxu0 0.0
        %700 = vmatprep.subr.mxu0 0.0
        %701 = vmatpush2.msra.mxu0 0.0
        %702 = vmatprep.mubr.f32.mxu0 0.0
        %703 = vmatmul.mubr.f32.gmra.mxu0 %v598
        %v704 = vpop.f32.mrf.mxu0
        %v705 = vadd.f32 0.0, %v704
        %v706 = vpop.f32.mrf.mxu0
        %v707 = vadd.f32 0.0, %v706
        %708 = vmatprep.mubr.f32.mxu0 0.0
        %709 = vmatmul.mubr.f32.gmra.mxu0 %v602
        %v710 = vpop.f32.mrf.mxu0
        %v711 = vadd.f32 0.0, %v710
        %v712 = vpop.f32.mrf.mxu0
        %v713 = vadd.f32 0.0, %v712
        %714 = vdwg.mxu0
        %v715 = vld [vmem:[#allocation10] sm:$0xff]
        %v716 = vld [vmem:[#allocation10 + $0x8] sm:$0xff]
        %v717 = vld [vmem:[#allocation10 + $0x10] sm:$0xff]
        %v718 = vld [vmem:[#allocation10 + $0x18] sm:$0xff]
        %v719 = vld [vmem:[#allocation10 + $0x20] sm:$0xff]
        %v720 = vld [vmem:[#allocation10 + $0x28] sm:$0xff]
        %v721 = vld [vmem:[#allocation10 + $0x30] sm:$0xff]
        %v722 = vld [vmem:[#allocation10 + $0x38] sm:$0xff]
        %v723 = vld [vmem:[#allocation10 + $0x40] sm:$0xff]
        %v724 = vld [vmem:[#allocation10 + $0x48] sm:$0xff]
        %v725 = vld [vmem:[#allocation10 + $0x50] sm:$0xff]
        %v726 = vld [vmem:[#allocation10 + $0x58] sm:$0xff]
        %v727 = vld [vmem:[#allocation10 + $0x60] sm:$0xff]
        %v728 = vld [vmem:[#allocation10 + $0x68] sm:$0xff]
        %v729 = vld [vmem:[#allocation10 + $0x70] sm:$0xff]
        %v730 = vld [vmem:[#allocation10 + $0x78] sm:$0xff]
        %v731 = vld [vmem:[#allocation10 + $0x80] sm:$0xff]
        %v732 = vld [vmem:[#allocation10 + $0x88] sm:$0xff]
        %v733 = vld [vmem:[#allocation10 + $0x90] sm:$0xff]
        %v734 = vld [vmem:[#allocation10 + $0x98] sm:$0xff]
        %v735 = vld [vmem:[#allocation10 + $0xa0] sm:$0xff]
        %v736 = vld [vmem:[#allocation10 + $0xa8] sm:$0xff]
        %v737 = vld [vmem:[#allocation10 + $0xb0] sm:$0xff]
        %v738 = vld [vmem:[#allocation10 + $0xb8] sm:$0xff]
        %v739 = vld [vmem:[#allocation10 + $0xc0] sm:$0xff]
        %v740 = vld [vmem:[#allocation10 + $0xc8] sm:$0xff]
        %v741 = vld [vmem:[#allocation10 + $0xd0] sm:$0xff]
        %v742 = vld [vmem:[#allocation10 + $0xd8] sm:$0xff]
        %v743 = vld [vmem:[#allocation10 + $0xe0] sm:$0xff]
        %v744 = vld [vmem:[#allocation10 + $0xe8] sm:$0xff]
        %v745 = vld [vmem:[#allocation10 + $0xf0] sm:$0xff]
        %v746 = vld [vmem:[#allocation10 + $0xf8] sm:$0xff]
        %v747 = vld [vmem:[#allocation10 + $0x100] sm:$0xff]
        %v748 = vld [vmem:[#allocation10 + $0x108] sm:$0xff]
        %v749 = vld [vmem:[#allocation10 + $0x110] sm:$0xff]
        %v750 = vld [vmem:[#allocation10 + $0x118] sm:$0xff]
        %v751 = vld [vmem:[#allocation10 + $0x120] sm:$0xff]
        %v752 = vld [vmem:[#allocation10 + $0x128] sm:$0xff]
        %v753 = vld [vmem:[#allocation10 + $0x130] sm:$0xff]
        %v754 = vld [vmem:[#allocation10 + $0x138] sm:$0xff]
        %v755 = vld [vmem:[#allocation10 + $0x140] sm:$0xff]
        %v756 = vld [vmem:[#allocation10 + $0x148] sm:$0xff]
        %v757 = vld [vmem:[#allocation10 + $0x150] sm:$0xff]
        %v758 = vld [vmem:[#allocation10 + $0x158] sm:$0xff]
        %v759 = vld [vmem:[#allocation10 + $0x160] sm:$0xff]
        %v760 = vld [vmem:[#allocation10 + $0x168] sm:$0xff]
        %v761 = vld [vmem:[#allocation10 + $0x170] sm:$0xff]
        %v762 = vld [vmem:[#allocation10 + $0x178] sm:$0xff]
        %v763 = vld [vmem:[#allocation10 + $0x180] sm:$0xff]
        %v764 = vld [vmem:[#allocation10 + $0x188] sm:$0xff]
        %v765 = vld [vmem:[#allocation10 + $0x190] sm:$0xff]
        %v766 = vld [vmem:[#allocation10 + $0x198] sm:$0xff]
        %v767 = vld [vmem:[#allocation10 + $0x1a0] sm:$0xff]
        %v768 = vld [vmem:[#allocation10 + $0x1a8] sm:$0xff]
        %v769 = vld [vmem:[#allocation10 + $0x1b0] sm:$0xff]
        %v770 = vld [vmem:[#allocation10 + $0x1b8] sm:$0xff]
        %v771 = vld [vmem:[#allocation10 + $0x1c0] sm:$0xff]
        %v772 = vld [vmem:[#allocation10 + $0x1c8] sm:$0xff]
        %v773 = vld [vmem:[#allocation10 + $0x1d0] sm:$0xff]
        %v774 = vld [vmem:[#allocation10 + $0x1d8] sm:$0xff]
        %v775 = vld [vmem:[#allocation10 + $0x1e0] sm:$0xff]
        %v776 = vld [vmem:[#allocation10 + $0x1e8] sm:$0xff]
        %v777 = vld [vmem:[#allocation10 + $0x1f0] sm:$0xff]
        %v778 = vld [vmem:[#allocation10 + $0x1f8] sm:$0xff]
        %v779 = vld [vmem:[#allocation10 + $0x200] sm:$0xff]
        %v780 = vld [vmem:[#allocation10 + $0x208] sm:$0xff]
        %v781 = vld [vmem:[#allocation10 + $0x210] sm:$0xff]
        %v782 = vld [vmem:[#allocation10 + $0x218] sm:$0xff]
        %v783 = vld [vmem:[#allocation10 + $0x220] sm:$0xff]
        %v784 = vld [vmem:[#allocation10 + $0x228] sm:$0xff]
        %v785 = vld [vmem:[#allocation10 + $0x230] sm:$0xff]
        %v786 = vld [vmem:[#allocation10 + $0x238] sm:$0xff]
        %v787 = vld [vmem:[#allocation10 + $0x240] sm:$0xff]
        %v788 = vld [vmem:[#allocation10 + $0x248] sm:$0xff]
        %v789 = vld [vmem:[#allocation10 + $0x250] sm:$0xff]
        %v790 = vld [vmem:[#allocation10 + $0x258] sm:$0xff]
        %v791 = vld [vmem:[#allocation10 + $0x260] sm:$0xff]
        %v792 = vld [vmem:[#allocation10 + $0x268] sm:$0xff]
        %v793 = vld [vmem:[#allocation10 + $0x270] sm:$0xff]
        %v794 = vld [vmem:[#allocation10 + $0x278] sm:$0xff]
        %v795 = vld [vmem:[#allocation10 + $0x280] sm:$0xff]
        %v796 = vld [vmem:[#allocation10 + $0x288] sm:$0xff]
        %v797 = vld [vmem:[#allocation10 + $0x290] sm:$0xff]
        %v798 = vld [vmem:[#allocation10 + $0x298] sm:$0xff]
        %v799 = vld [vmem:[#allocation10 + $0x2a0] sm:$0xff]
        %v800 = vld [vmem:[#allocation10 + $0x2a8] sm:$0xff]
        %v801 = vld [vmem:[#allocation10 + $0x2b0] sm:$0xff]
        %v802 = vld [vmem:[#allocation10 + $0x2b8] sm:$0xff]
        %v803 = vld [vmem:[#allocation10 + $0x2c0] sm:$0xff]
        %v804 = vld [vmem:[#allocation10 + $0x2c8] sm:$0xff]
        %v805 = vld [vmem:[#allocation10 + $0x2d0] sm:$0xff]
        %v806 = vld [vmem:[#allocation10 + $0x2d8] sm:$0xff]
        %v807 = vld [vmem:[#allocation10 + $0x2e0] sm:$0xff]
        %v808 = vld [vmem:[#allocation10 + $0x2e8] sm:$0xff]
        %v809 = vld [vmem:[#allocation10 + $0x2f0] sm:$0xff]
        %v810 = vld [vmem:[#allocation10 + $0x2f8] sm:$0xff]
        %v811 = vld [vmem:[#allocation10 + $0x300] sm:$0xff]
        %v812 = vld [vmem:[#allocation10 + $0x308] sm:$0xff]
        %v813 = vld [vmem:[#allocation10 + $0x310] sm:$0xff]
        %v814 = vld [vmem:[#allocation10 + $0x318] sm:$0xff]
        %v815 = vld [vmem:[#allocation10 + $0x320] sm:$0xff]
        %v816 = vld [vmem:[#allocation10 + $0x328] sm:$0xff]
        %v817 = vld [vmem:[#allocation10 + $0x330] sm:$0xff]
        %v818 = vld [vmem:[#allocation10 + $0x338] sm:$0xff]
        %v819 = vld [vmem:[#allocation10 + $0x340] sm:$0xff]
        %v820 = vld [vmem:[#allocation10 + $0x348] sm:$0xff]
        %v821 = vld [vmem:[#allocation10 + $0x350] sm:$0xff]
        %v822 = vld [vmem:[#allocation10 + $0x358] sm:$0xff]
        %v823 = vld [vmem:[#allocation10 + $0x360] sm:$0xff]
        %v824 = vld [vmem:[#allocation10 + $0x368] sm:$0xff]
        %v825 = vld [vmem:[#allocation10 + $0x370] sm:$0xff]
        %v826 = vld [vmem:[#allocation10 + $0x378] sm:$0xff]
        %827 = vmatprep.subr.mxu0 %v821
        %828 = vmatpush1.msra.mxu0 %v820
        %829 = vmatprep.subr.mxu0 %v814
        %830 = vmatpush1.msra.mxu0 %v813
        %831 = vmatprep.subr.mxu0 %v807
        %832 = vmatpush1.msra.mxu0 %v806
        %833 = vmatprep.subr.mxu0 %v800
        %834 = vmatpush1.msra.mxu0 %v799
        %835 = vmatprep.subr.mxu0 %v793
        %836 = vmatpush1.msra.mxu0 %v792
        %837 = vmatprep.subr.mxu0 %v786
        %838 = vmatpush1.msra.mxu0 %v785
        %839 = vmatprep.subr.mxu0 %v779
        %840 = vmatpush1.msra.mxu0 %v778
        %841 = vmatprep.subr.mxu0 %v772
        %842 = vmatpush1.msra.mxu0 %v771
        %843 = vmatprep.subr.mxu0 %v765
        %844 = vmatpush1.msra.mxu0 %v764
        %845 = vmatprep.subr.mxu0 %v758
        %846 = vmatpush1.msra.mxu0 %v757
        %847 = vmatprep.subr.mxu0 %v751
        %848 = vmatpush1.msra.mxu0 %v750
        %849 = vmatprep.subr.mxu0 %v744
        %850 = vmatpush1.msra.mxu0 %v743
        %851 = vmatprep.subr.mxu0 %v737
        %852 = vmatpush1.msra.mxu0 %v736
        %853 = vmatprep.subr.mxu0 %v730
        %854 = vmatpush1.msra.mxu0 %v729
        %855 = vmatprep.subr.mxu0 %v723
        %856 = vmatpush1.msra.mxu0 %v722
        %857 = vmatprep.subr.mxu0 %v716
        %858 = vmatpush1.msra.mxu0 %v715
        %859 = vmatprep.subr.mxu0 0.0
        %860 = vmatpush2.msra.mxu0 0.0
        %861 = vmatprep.subr.mxu0 0.0
        %862 = vmatpush2.msra.mxu0 0.0
        %863 = vmatprep.subr.mxu0 0.0
        %864 = vmatpush2.msra.mxu0 0.0
        %865 = vmatprep.subr.mxu0 0.0
        %866 = vmatpush2.msra.mxu0 0.0
        %867 = vmatprep.subr.mxu0 0.0
        %868 = vmatpush2.msra.mxu0 0.0
        %869 = vmatprep.subr.mxu0 0.0
        %870 = vmatpush2.msra.mxu0 0.0
        %871 = vmatprep.subr.mxu0 0.0
        %872 = vmatpush2.msra.mxu0 0.0
        %873 = vmatprep.subr.mxu0 0.0
        %874 = vmatpush2.msra.mxu0 0.0
        %875 = vmatprep.subr.mxu0 0.0
        %876 = vmatpush2.msra.mxu0 0.0
        %877 = vmatprep.subr.mxu0 0.0
        %878 = vmatpush2.msra.mxu0 0.0
        %879 = vmatprep.subr.mxu0 0.0
        %880 = vmatpush2.msra.mxu0 0.0
        %881 = vmatprep.subr.mxu0 0.0
        %882 = vmatpush2.msra.mxu0 0.0
        %883 = vmatprep.subr.mxu0 0.0
        %884 = vmatpush2.msra.mxu0 0.0
        %885 = vmatprep.subr.mxu0 0.0
        %886 = vmatpush2.msra.mxu0 0.0
        %887 = vmatprep.subr.mxu0 0.0
        %888 = vmatpush2.msra.mxu0 0.0
        %889 = vmatprep.subr.mxu0 0.0
        %890 = vmatpush2.msra.mxu0 0.0
        %891 = vmatprep.mubr.f32.mxu0 0.0
        %892 = vmatmul.mubr.f32.gmra.mxu0 %v600
        %v893 = vpop.f32.mrf.mxu0
        %v894 = vadd.f32 0.0, %v893
        %v895 = vpop.f32.mrf.mxu0
        %v896 = vadd.f32 0.0, %v895
        %897 = vmatprep.mubr.f32.mxu0 0.0
        %898 = vmatmul.mubr.f32.gmra.mxu0 %v604
        %v899 = vpop.f32.mrf.mxu0
        %v900 = vadd.f32 0.0, %v899
        %v901 = vpop.f32.mrf.mxu0
        %v902 = vadd.f32 0.0, %v901
        %903 = vdwg.mxu0
        %904 = vmatprep.subr.mxu0 %v823
        %905 = vmatpush1.msra.mxu0 %v822
        %906 = vmatprep.subr.mxu0 %v816
        %907 = vmatpush1.msra.mxu0 %v815
        %908 = vmatprep.subr.mxu0 %v809
        %909 = vmatpush1.msra.mxu0 %v808
        %910 = vmatprep.subr.mxu0 %v802
        %911 = vmatpush1.msra.mxu0 %v801
        %912 = vmatprep.subr.mxu0 %v795
        %913 = vmatpush1.msra.mxu0 %v794
        %914 = vmatprep.subr.mxu0 %v788
        %915 = vmatpush1.msra.mxu0 %v787
        %916 = vmatprep.subr.mxu0 %v781
        %917 = vmatpush1.msra.mxu0 %v780
        %918 = vmatprep.subr.mxu0 %v774
        %919 = vmatpush1.msra.mxu0 %v773
        %920 = vmatprep.subr.mxu0 %v767
        %921 = vmatpush1.msra.mxu0 %v766
        %922 = vmatprep.subr.mxu0 %v760
        %923 = vmatpush1.msra.mxu0 %v759
        %924 = vmatprep.subr.mxu0 %v753
        %925 = vmatpush1.msra.mxu0 %v752
        %926 = vmatprep.subr.mxu0 %v746
        %927 = vmatpush1.msra.mxu0 %v745
        %928 = vmatprep.subr.mxu0 %v739
        %929 = vmatpush1.msra.mxu0 %v738
        %930 = vmatprep.subr.mxu0 %v732
        %931 = vmatpush1.msra.mxu0 %v731
        %932 = vmatprep.subr.mxu0 %v725
        %933 = vmatpush1.msra.mxu0 %v724
        %934 = vmatprep.subr.mxu0 %v718
        %935 = vmatpush1.msra.mxu0 %v717
        %936 = vmatprep.subr.mxu0 0.0
        %937 = vmatpush2.msra.mxu0 0.0
        %938 = vmatprep.subr.mxu0 0.0
        %939 = vmatpush2.msra.mxu0 0.0
        %940 = vmatprep.subr.mxu0 0.0
        %941 = vmatpush2.msra.mxu0 0.0
        %942 = vmatprep.subr.mxu0 0.0
        %943 = vmatpush2.msra.mxu0 0.0
        %944 = vmatprep.subr.mxu0 0.0
        %945 = vmatpush2.msra.mxu0 0.0
        %946 = vmatprep.subr.mxu0 0.0
        %947 = vmatpush2.msra.mxu0 0.0
        %948 = vmatprep.subr.mxu0 0.0
        %949 = vmatpush2.msra.mxu0 0.0
        %950 = vmatprep.subr.mxu0 0.0
        %951 = vmatpush2.msra.mxu0 0.0
        %952 = vmatprep.subr.mxu0 0.0
        %953 = vmatpush2.msra.mxu0 0.0
        %954 = vmatprep.subr.mxu0 0.0
        %955 = vmatpush2.msra.mxu0 0.0
        %956 = vmatprep.subr.mxu0 0.0
        %957 = vmatpush2.msra.mxu0 0.0
        %958 = vmatprep.subr.mxu0 0.0
        %959 = vmatpush2.msra.mxu0 0.0
        %960 = vmatprep.subr.mxu0 0.0
        %961 = vmatpush2.msra.mxu0 0.0
        %962 = vmatprep.subr.mxu0 0.0
        %963 = vmatpush2.msra.mxu0 0.0
        %964 = vmatprep.subr.mxu0 0.0
        %965 = vmatpush2.msra.mxu0 0.0
        %966 = vmatprep.subr.mxu0 0.0
        %967 = vmatpush2.msra.mxu0 0.0
        %968 = vmatprep.mubr.f32.mxu0 0.0
        %969 = vmatmul.mubr.f32.gmra.mxu0 %v600
        %v970 = vpop.f32.mrf.mxu0
        %v971 = vadd.f32 0.0, %v970
        %v972 = vpop.f32.mrf.mxu0
        %v973 = vadd.f32 0.0, %v972
        %974 = vmatprep.mubr.f32.mxu0 0.0
        %975 = vmatmul.mubr.f32.gmra.mxu0 %v604
        %v976 = vpop.f32.mrf.mxu0
        %v977 = vadd.f32 0.0, %v976
        %v978 = vpop.f32.mrf.mxu0
        %v979 = vadd.f32 0.0, %v978
        %980 = vdwg.mxu0
        %981 = vmatprep.subr.mxu0 %v825
        %982 = vmatpush1.msra.mxu0 %v824
        %983 = vmatprep.subr.mxu0 %v818
        %984 = vmatpush1.msra.mxu0 %v817
        %985 = vmatprep.subr.mxu0 %v811
        %986 = vmatpush1.msra.mxu0 %v810
        %987 = vmatprep.subr.mxu0 %v804
        %988 = vmatpush1.msra.mxu0 %v803
        %989 = vmatprep.subr.mxu0 %v797
        %990 = vmatpush1.msra.mxu0 %v796
        %991 = vmatprep.subr.mxu0 %v790
        %992 = vmatpush1.msra.mxu0 %v789
        %993 = vmatprep.subr.mxu0 %v783
        %994 = vmatpush1.msra.mxu0 %v782
        %995 = vmatprep.subr.mxu0 %v776
        %996 = vmatpush1.msra.mxu0 %v775
        %997 = vmatprep.subr.mxu0 %v769
        %998 = vmatpush1.msra.mxu0 %v768
        %999 = vmatprep.subr.mxu0 %v762
        %1000 = vmatpush1.msra.mxu0 %v761
        %1001 = vmatprep.subr.mxu0 %v755
        %1002 = vmatpush1.msra.mxu0 %v754
        %1003 = vmatprep.subr.mxu0 %v748
        %1004 = vmatpush1.msra.mxu0 %v747
        %1005 = vmatprep.subr.mxu0 %v741
        %1006 = vmatpush1.msra.mxu0 %v740
        %1007 = vmatprep.subr.mxu0 %v734
        %1008 = vmatpush1.msra.mxu0 %v733
        %1009 = vmatprep.subr.mxu0 %v727
        %1010 = vmatpush1.msra.mxu0 %v726
        %1011 = vmatprep.subr.mxu0 %v720
        %1012 = vmatpush1.msra.mxu0 %v719
        %1013 = vmatprep.subr.mxu0 0.0
        %1014 = vmatpush2.msra.mxu0 0.0
        %1015 = vmatprep.subr.mxu0 0.0
        %1016 = vmatpush2.msra.mxu0 0.0
        %1017 = vmatprep.subr.mxu0 0.0
        %1018 = vmatpush2.msra.mxu0 0.0
        %1019 = vmatprep.subr.mxu0 0.0
        %1020 = vmatpush2.msra.mxu0 0.0
        %1021 = vmatprep.subr.mxu0 0.0
        %1022 = vmatpush2.msra.mxu0 0.0
        %1023 = vmatprep.subr.mxu0 0.0
        %1024 = vmatpush2.msra.mxu0 0.0
        %1025 = vmatprep.subr.mxu0 0.0
        %1026 = vmatpush2.msra.mxu0 0.0
        %1027 = vmatprep.subr.mxu0 0.0
        %1028 = vmatpush2.msra.mxu0 0.0
        %1029 = vmatprep.subr.mxu0 0.0
        %1030 = vmatpush2.msra.mxu0 0.0
        %1031 = vmatprep.subr.mxu0 0.0
        %1032 = vmatpush2.msra.mxu0 0.0
        %1033 = vmatprep.subr.mxu0 0.0
        %1034 = vmatpush2.msra.mxu0 0.0
        %1035 = vmatprep.subr.mxu0 0.0
        %1036 = vmatpush2.msra.mxu0 0.0
        %1037 = vmatprep.subr.mxu0 0.0
        %1038 = vmatpush2.msra.mxu0 0.0
        %1039 = vmatprep.subr.mxu0 0.0
        %1040 = vmatpush2.msra.mxu0 0.0
        %1041 = vmatprep.subr.mxu0 0.0
        %1042 = vmatpush2.msra.mxu0 0.0
        %1043 = vmatprep.subr.mxu0 0.0
        %1044 = vmatpush2.msra.mxu0 0.0
        %1045 = vmatprep.mubr.f32.mxu0 0.0
        %1046 = vmatmul.mubr.f32.gmra.mxu0 %v600
        %v1047 = vpop.f32.mrf.mxu0
        %v1048 = vadd.f32 0.0, %v1047
        %v1049 = vpop.f32.mrf.mxu0
        %v1050 = vadd.f32 0.0, %v1049
        %1051 = vmatprep.mubr.f32.mxu0 0.0
        %1052 = vmatmul.mubr.f32.gmra.mxu0 %v604
        %v1053 = vpop.f32.mrf.mxu0
        %v1054 = vadd.f32 0.0, %v1053
        %v1055 = vpop.f32.mrf.mxu0
        %v1056 = vadd.f32 0.0, %v1055
        %1057 = vdwg.mxu0
        %1058 = vmatprep.subr.mxu0 0.0
        %1059 = vmatpush1.msra.mxu0 %v826
        %1060 = vmatprep.subr.mxu0 0.0
        %1061 = vmatpush1.msra.mxu0 %v819
        %1062 = vmatprep.subr.mxu0 0.0
        %1063 = vmatpush1.msra.mxu0 %v812
        %1064 = vmatprep.subr.mxu0 0.0
        %1065 = vmatpush1.msra.mxu0 %v805
        %1066 = vmatprep.subr.mxu0 0.0
        %1067 = vmatpush1.msra.mxu0 %v798
        %1068 = vmatprep.subr.mxu0 0.0
        %1069 = vmatpush1.msra.mxu0 %v791
        %1070 = vmatprep.subr.mxu0 0.0
        %1071 = vmatpush1.msra.mxu0 %v784
        %1072 = vmatprep.subr.mxu0 0.0
        %1073 = vmatpush1.msra.mxu0 %v777
        %1074 = vmatprep.subr.mxu0 0.0
        %1075 = vmatpush1.msra.mxu0 %v770
        %1076 = vmatprep.subr.mxu0 0.0
        %1077 = vmatpush1.msra.mxu0 %v763
        %1078 = vmatprep.subr.mxu0 0.0
        %1079 = vmatpush1.msra.mxu0 %v756
        %1080 = vmatprep.subr.mxu0 0.0
        %1081 = vmatpush1.msra.mxu0 %v749
        %1082 = vmatprep.subr.mxu0 0.0
        %1083 = vmatpush1.msra.mxu0 %v742
        %1084 = vmatprep.subr.mxu0 0.0
        %1085 = vmatpush1.msra.mxu0 %v735
        %1086 = vmatprep.subr.mxu0 0.0
        %1087 = vmatpush1.msra.mxu0 %v728
        %1088 = vmatprep.subr.mxu0 0.0
        %1089 = vmatpush1.msra.mxu0 %v721
        %1090 = vmatprep.subr.mxu0 0.0
        %1091 = vmatpush2.msra.mxu0 0.0
        %1092 = vmatprep.subr.mxu0 0.0
        %1093 = vmatpush2.msra.mxu0 0.0
        %1094 = vmatprep.subr.mxu0 0.0
        %1095 = vmatpush2.msra.mxu0 0.0
        %1096 = vmatprep.subr.mxu0 0.0
        %1097 = vmatpush2.msra.mxu0 0.0
        %1098 = vmatprep.subr.mxu0 0.0
        %1099 = vmatpush2.msra.mxu0 0.0
        %1100 = vmatprep.subr.mxu0 0.0
        %1101 = vmatpush2.msra.mxu0 0.0
        %1102 = vmatprep.subr.mxu0 0.0
        %1103 = vmatpush2.msra.mxu0 0.0
        %1104 = vmatprep.subr.mxu0 0.0
        %1105 = vmatpush2.msra.mxu0 0.0
        %1106 = vmatprep.subr.mxu0 0.0
        %1107 = vmatpush2.msra.mxu0 0.0
        %1108 = vmatprep.subr.mxu0 0.0
        %1109 = vmatpush2.msra.mxu0 0.0
        %1110 = vmatprep.subr.mxu0 0.0
        %1111 = vmatpush2.msra.mxu0 0.0
        %1112 = vmatprep.subr.mxu0 0.0
        %1113 = vmatpush2.msra.mxu0 0.0
        %1114 = vmatprep.subr.mxu0 0.0
        %1115 = vmatpush2.msra.mxu0 0.0
        %1116 = vmatprep.subr.mxu0 0.0
        %1117 = vmatpush2.msra.mxu0 0.0
        %1118 = vmatprep.subr.mxu0 0.0
        %1119 = vmatpush2.msra.mxu0 0.0
        %1120 = vmatprep.subr.mxu0 0.0
        %1121 = vmatpush2.msra.mxu0 0.0
        %1122 = vmatprep.mubr.f32.mxu0 0.0
        %1123 = vmatmul.mubr.f32.gmra.mxu0 %v600
        %v1124 = vpop.f32.mrf.mxu0
        %v1125 = vadd.f32 0.0, %v1124
        %v1126 = vpop.f32.mrf.mxu0
        %1127 = vmatprep.mubr.f32.mxu0 0.0
        %1128 = vmatmul.mubr.f32.gmra.mxu0 %v604
        %v1129 = vpop.f32.mrf.mxu0
        %v1130 = vadd.f32 0.0, %v1129
        %v1131 = vpop.f32.mrf.mxu0
        %1132 = vdwg.mxu0
        %1133 = vmatprep.subr.mxu0 0.0
        %1134 = vmatpush1.xpose.msra.mxu0 0.0
        %1135 = vmatprep.subr.mxu0 0.0
        %1136 = vmatpush1.xpose.msra.mxu0 0.0
        %1137 = vmatprep.subr.mxu0 0.0
        %1138 = vmatpush1.xpose.msra.mxu0 0.0
        %1139 = vmatprep.subr.mxu0 0.0
        %1140 = vmatpush1.xpose.msra.mxu0 0.0
        %1141 = vmatprep.subr.mxu0 0.0
        %1142 = vmatpush1.xpose.msra.mxu0 0.0
        %1143 = vmatprep.subr.mxu0 0.0
        %1144 = vmatpush1.xpose.msra.mxu0 0.0
        %1145 = vmatprep.subr.mxu0 0.0
        %1146 = vmatpush1.xpose.msra.mxu0 0.0
        %1147 = vmatprep.subr.mxu0 0.0
        %1148 = vmatpush1.xpose.msra.mxu0 0.0
        %1149 = vmatprep.subr.mxu0 0.0
        %1150 = vmatpush1.xpose.msra.mxu0 0.0
        %1151 = vmatprep.subr.mxu0 0.0
        %1152 = vmatpush1.xpose.msra.mxu0 0.0
        %1153 = vmatprep.subr.mxu0 0.0
        %1154 = vmatpush1.xpose.msra.mxu0 0.0
        %1155 = vmatprep.subr.mxu0 0.0
        %1156 = vmatpush1.xpose.msra.mxu0 0.0
        %1157 = vmatprep.subr.mxu0 0.0
        %1158 = vmatpush1.xpose.msra.mxu0 0.0
        %1159 = vmatprep.subr.mxu0 0.0
        %1160 = vmatpush1.xpose.msra.mxu0 0.0
        %1161 = vmatprep.subr.mxu0 0.0
        %1162 = vmatpush1.xpose.msra.mxu0 0.0
        %1163 = vmatprep.subr.mxu0 0.0
        %1164 = vmatpush1.xpose.msra.mxu0 %v599
        %1165 = vmatprep.subr.mxu0 0.0
        %1166 = vmatpush2.xpose.msra.mxu0 0.0
        %1167 = vmatprep.subr.mxu0 0.0
        %1168 = vmatpush2.xpose.msra.mxu0 0.0
        %1169 = vmatprep.subr.mxu0 0.0
        %1170 = vmatpush2.xpose.msra.mxu0 0.0
        %1171 = vmatprep.subr.mxu0 0.0
        %1172 = vmatpush2.xpose.msra.mxu0 0.0
        %1173 = vmatprep.subr.mxu0 0.0
        %1174 = vmatpush2.xpose.msra.mxu0 0.0
        %1175 = vmatprep.subr.mxu0 0.0
        %1176 = vmatpush2.xpose.msra.mxu0 0.0
        %1177 = vmatprep.subr.mxu0 0.0
        %1178 = vmatpush2.xpose.msra.mxu0 0.0
        %1179 = vmatprep.subr.mxu0 0.0
        %1180 = vmatpush2.xpose.msra.mxu0 0.0
        %1181 = vmatprep.subr.mxu0 0.0
        %1182 = vmatpush2.xpose.msra.mxu0 0.0
        %1183 = vmatprep.subr.mxu0 0.0
        %1184 = vmatpush2.xpose.msra.mxu0 0.0
        %1185 = vmatprep.subr.mxu0 0.0
        %1186 = vmatpush2.xpose.msra.mxu0 0.0
        %1187 = vmatprep.subr.mxu0 0.0
        %1188 = vmatpush2.xpose.msra.mxu0 0.0
        %1189 = vmatprep.subr.mxu0 0.0
        %1190 = vmatpush2.xpose.msra.mxu0 0.0
        %1191 = vmatprep.subr.mxu0 0.0
        %1192 = vmatpush2.xpose.msra.mxu0 0.0
        %1193 = vmatprep.subr.mxu0 0.0
        %1194 = vmatpush2.xpose.msra.mxu0 0.0
        %1195 = vmatprep.subr.mxu0 0.0
        %1196 = vmatpush2.xpose.msra.mxu0 0.0
        %1197 = vmatprep.mubr.f32.mxu0 0.0
        %1198 = vmatmul.mubr.f32.gmra.mxu0 %v705
        %v1199 = vpop.f32.mrf.mxu0
        %v1200 = vadd.f32 0.0, %v1199
        %v1201 = vpop.f32.mrf.mxu0
        %1202 = vdwg.mxu0
        %vm1203 = vcmask 64512
        %1204 = vst.msk [vmem:[%s329] sm:$0xff] %vm1203, %v1200
        %1205 = vmatprep.subr.mxu0 0.0
        %1206 = vmatpush1.xpose.msra.mxu0 0.0
        %1207 = vmatprep.subr.mxu0 0.0
        %1208 = vmatpush1.xpose.msra.mxu0 0.0
        %1209 = vmatprep.subr.mxu0 0.0
        %1210 = vmatpush1.xpose.msra.mxu0 0.0
        %1211 = vmatprep.subr.mxu0 0.0
        %1212 = vmatpush1.xpose.msra.mxu0 0.0
        %1213 = vmatprep.subr.mxu0 0.0
        %1214 = vmatpush1.xpose.msra.mxu0 0.0
        %1215 = vmatprep.subr.mxu0 0.0
        %1216 = vmatpush1.xpose.msra.mxu0 0.0
        %1217 = vmatprep.subr.mxu0 0.0
        %1218 = vmatpush1.xpose.msra.mxu0 0.0
        %1219 = vmatprep.subr.mxu0 0.0
        %1220 = vmatpush1.xpose.msra.mxu0 0.0
        %1221 = vmatprep.subr.mxu0 0.0
        %1222 = vmatpush1.xpose.msra.mxu0 0.0
        %1223 = vmatprep.subr.mxu0 0.0
        %1224 = vmatpush1.xpose.msra.mxu0 0.0
        %1225 = vmatprep.subr.mxu0 0.0
        %1226 = vmatpush1.xpose.msra.mxu0 0.0
        %1227 = vmatprep.subr.mxu0 0.0
        %1228 = vmatpush1.xpose.msra.mxu0 0.0
        %1229 = vmatprep.subr.mxu0 0.0
        %1230 = vmatpush1.xpose.msra.mxu0 0.0
        %1231 = vmatprep.subr.mxu0 0.0
        %1232 = vmatpush1.xpose.msra.mxu0 0.0
        %1233 = vmatprep.subr.mxu0 0.0
        %1234 = vmatpush1.xpose.msra.mxu0 0.0
        %1235 = vmatprep.subr.mxu0 0.0
        %1236 = vmatpush1.xpose.msra.mxu0 %v599
        %1237 = vmatprep.subr.mxu0 0.0
        %1238 = vmatpush2.xpose.msra.mxu0 0.0
        %1239 = vmatprep.subr.mxu0 0.0
        %1240 = vmatpush2.xpose.msra.mxu0 0.0
        %1241 = vmatprep.subr.mxu0 0.0
        %1242 = vmatpush2.xpose.msra.mxu0 0.0
        %1243 = vmatprep.subr.mxu0 0.0
        %1244 = vmatpush2.xpose.msra.mxu0 0.0
        %1245 = vmatprep.subr.mxu0 0.0
        %1246 = vmatpush2.xpose.msra.mxu0 0.0
        %1247 = vmatprep.subr.mxu0 0.0
        %1248 = vmatpush2.xpose.msra.mxu0 0.0
        %1249 = vmatprep.subr.mxu0 0.0
        %1250 = vmatpush2.xpose.msra.mxu0 0.0
        %1251 = vmatprep.subr.mxu0 0.0
        %1252 = vmatpush2.xpose.msra.mxu0 0.0
        %1253 = vmatprep.subr.mxu0 0.0
        %1254 = vmatpush2.xpose.msra.mxu0 0.0
        %1255 = vmatprep.subr.mxu0 0.0
        %1256 = vmatpush2.xpose.msra.mxu0 0.0
        %1257 = vmatprep.subr.mxu0 0.0
        %1258 = vmatpush2.xpose.msra.mxu0 0.0
        %1259 = vmatprep.subr.mxu0 0.0
        %1260 = vmatpush2.xpose.msra.mxu0 0.0
        %1261 = vmatprep.subr.mxu0 0.0
        %1262 = vmatpush2.xpose.msra.mxu0 0.0
        %1263 = vmatprep.subr.mxu0 0.0
        %1264 = vmatpush2.xpose.msra.mxu0 0.0
        %1265 = vmatprep.subr.mxu0 0.0
        %1266 = vmatpush2.xpose.msra.mxu0 0.0
        %1267 = vmatprep.subr.mxu0 0.0
        %1268 = vmatpush2.xpose.msra.mxu0 0.0
        %1269 = vmatprep.mubr.f32.mxu0 0.0
        %1270 = vmatmul.mubr.f32.gmra.mxu0 %v707
        %v1271 = vpop.f32.mrf.mxu0
        %v1272 = vadd.f32 0.0, %v1271
        %v1273 = vpop.f32.mrf.mxu0
        %1274 = vdwg.mxu0
        %s1275 = scalar_lea.vmem %s329, 8 [#allocation11]
        %1276 = vst.msk [vmem:[%s1275] sm:$0xff] %vm1203, %v1272
        %1277 = vmatprep.subr.mxu0 0.0
        %1278 = vmatpush1.xpose.msra.mxu0 0.0
        %1279 = vmatprep.subr.mxu0 0.0
        %1280 = vmatpush1.xpose.msra.mxu0 0.0
        %1281 = vmatprep.subr.mxu0 0.0
        %1282 = vmatpush1.xpose.msra.mxu0 0.0
        %1283 = vmatprep.subr.mxu0 0.0
        %1284 = vmatpush1.xpose.msra.mxu0 0.0
        %1285 = vmatprep.subr.mxu0 0.0
        %1286 = vmatpush1.xpose.msra.mxu0 0.0
        %1287 = vmatprep.subr.mxu0 0.0
        %1288 = vmatpush1.xpose.msra.mxu0 0.0
        %1289 = vmatprep.subr.mxu0 0.0
        %1290 = vmatpush1.xpose.msra.mxu0 0.0
        %1291 = vmatprep.subr.mxu0 0.0
        %1292 = vmatpush1.xpose.msra.mxu0 0.0
        %1293 = vmatprep.subr.mxu0 0.0
        %1294 = vmatpush1.xpose.msra.mxu0 0.0
        %1295 = vmatprep.subr.mxu0 0.0
        %1296 = vmatpush1.xpose.msra.mxu0 0.0
        %1297 = vmatprep.subr.mxu0 0.0
        %1298 = vmatpush1.xpose.msra.mxu0 0.0
        %1299 = vmatprep.subr.mxu0 0.0
        %1300 = vmatpush1.xpose.msra.mxu0 0.0
        %1301 = vmatprep.subr.mxu0 0.0
        %1302 = vmatpush1.xpose.msra.mxu0 0.0
        %1303 = vmatprep.subr.mxu0 0.0
        %1304 = vmatpush1.xpose.msra.mxu0 0.0
        %1305 = vmatprep.subr.mxu0 0.0
        %1306 = vmatpush1.xpose.msra.mxu0 0.0
        %1307 = vmatprep.subr.mxu0 0.0
        %1308 = vmatpush1.xpose.msra.mxu0 %v601
        %1309 = vmatprep.subr.mxu0 0.0
        %1310 = vmatpush2.xpose.msra.mxu0 0.0
        %1311 = vmatprep.subr.mxu0 0.0
        %1312 = vmatpush2.xpose.msra.mxu0 0.0
        %1313 = vmatprep.subr.mxu0 0.0
        %1314 = vmatpush2.xpose.msra.mxu0 0.0
        %1315 = vmatprep.subr.mxu0 0.0
        %1316 = vmatpush2.xpose.msra.mxu0 0.0
        %1317 = vmatprep.subr.mxu0 0.0
        %1318 = vmatpush2.xpose.msra.mxu0 0.0
        %1319 = vmatprep.subr.mxu0 0.0
        %1320 = vmatpush2.xpose.msra.mxu0 0.0
        %1321 = vmatprep.subr.mxu0 0.0
        %1322 = vmatpush2.xpose.msra.mxu0 0.0
        %1323 = vmatprep.subr.mxu0 0.0
        %1324 = vmatpush2.xpose.msra.mxu0 0.0
        %1325 = vmatprep.subr.mxu0 0.0
        %1326 = vmatpush2.xpose.msra.mxu0 0.0
        %1327 = vmatprep.subr.mxu0 0.0
        %1328 = vmatpush2.xpose.msra.mxu0 0.0
        %1329 = vmatprep.subr.mxu0 0.0
        %1330 = vmatpush2.xpose.msra.mxu0 0.0
        %1331 = vmatprep.subr.mxu0 0.0
        %1332 = vmatpush2.xpose.msra.mxu0 0.0
        %1333 = vmatprep.subr.mxu0 0.0
        %1334 = vmatpush2.xpose.msra.mxu0 0.0
        %1335 = vmatprep.subr.mxu0 0.0
        %1336 = vmatpush2.xpose.msra.mxu0 0.0
        %1337 = vmatprep.subr.mxu0 0.0
        %1338 = vmatpush2.xpose.msra.mxu0 0.0
        %1339 = vmatprep.subr.mxu0 0.0
        %1340 = vmatpush2.xpose.msra.mxu0 0.0
        %1341 = vmatprep.mubr.f32.mxu0 0.0
        %1342 = vmatmul.mubr.f32.gmra.mxu0 %v894
        %v1343 = vpop.f32.mrf.mxu0
        %v1344 = vadd.f32 0.0, %v1343
        %v1345 = vpop.f32.mrf.mxu0
        %1346 = vdwg.mxu0
        %1347 = vst.msk [vmem:[%s336] sm:$0xff] %vm1203, %v1344
        %1348 = vmatprep.subr.mxu0 0.0
        %1349 = vmatpush1.xpose.msra.mxu0 0.0
        %1350 = vmatprep.subr.mxu0 0.0
        %1351 = vmatpush1.xpose.msra.mxu0 0.0
        %1352 = vmatprep.subr.mxu0 0.0
        %1353 = vmatpush1.xpose.msra.mxu0 0.0
        %1354 = vmatprep.subr.mxu0 0.0
        %1355 = vmatpush1.xpose.msra.mxu0 0.0
        %1356 = vmatprep.subr.mxu0 0.0
        %1357 = vmatpush1.xpose.msra.mxu0 0.0
        %1358 = vmatprep.subr.mxu0 0.0
        %1359 = vmatpush1.xpose.msra.mxu0 0.0
        %1360 = vmatprep.subr.mxu0 0.0
        %1361 = vmatpush1.xpose.msra.mxu0 0.0
        %1362 = vmatprep.subr.mxu0 0.0
        %1363 = vmatpush1.xpose.msra.mxu0 0.0
        %1364 = vmatprep.subr.mxu0 0.0
        %1365 = vmatpush1.xpose.msra.mxu0 0.0
        %1366 = vmatprep.subr.mxu0 0.0
        %1367 = vmatpush1.xpose.msra.mxu0 0.0
        %1368 = vmatprep.subr.mxu0 0.0
        %1369 = vmatpush1.xpose.msra.mxu0 0.0
        %1370 = vmatprep.subr.mxu0 0.0
        %1371 = vmatpush1.xpose.msra.mxu0 0.0
        %1372 = vmatprep.subr.mxu0 0.0
        %1373 = vmatpush1.xpose.msra.mxu0 0.0
        %1374 = vmatprep.subr.mxu0 0.0
        %1375 = vmatpush1.xpose.msra.mxu0 0.0
        %1376 = vmatprep.subr.mxu0 0.0
        %1377 = vmatpush1.xpose.msra.mxu0 0.0
        %1378 = vmatprep.subr.mxu0 0.0
        %1379 = vmatpush1.xpose.msra.mxu0 %v601
        %1380 = vmatprep.subr.mxu0 0.0
        %1381 = vmatpush2.xpose.msra.mxu0 0.0
        %1382 = vmatprep.subr.mxu0 0.0
        %1383 = vmatpush2.xpose.msra.mxu0 0.0
        %1384 = vmatprep.subr.mxu0 0.0
        %1385 = vmatpush2.xpose.msra.mxu0 0.0
        %1386 = vmatprep.subr.mxu0 0.0
        %1387 = vmatpush2.xpose.msra.mxu0 0.0
        %1388 = vmatprep.subr.mxu0 0.0
        %1389 = vmatpush2.xpose.msra.mxu0 0.0
        %1390 = vmatprep.subr.mxu0 0.0
        %1391 = vmatpush2.xpose.msra.mxu0 0.0
        %1392 = vmatprep.subr.mxu0 0.0
        %1393 = vmatpush2.xpose.msra.mxu0 0.0
        %1394 = vmatprep.subr.mxu0 0.0
        %1395 = vmatpush2.xpose.msra.mxu0 0.0
        %1396 = vmatprep.subr.mxu0 0.0
        %1397 = vmatpush2.xpose.msra.mxu0 0.0
        %1398 = vmatprep.subr.mxu0 0.0
        %1399 = vmatpush2.xpose.msra.mxu0 0.0
        %1400 = vmatprep.subr.mxu0 0.0
        %1401 = vmatpush2.xpose.msra.mxu0 0.0
        %1402 = vmatprep.subr.mxu0 0.0
        %1403 = vmatpush2.xpose.msra.mxu0 0.0
        %1404 = vmatprep.subr.mxu0 0.0
        %1405 = vmatpush2.xpose.msra.mxu0 0.0
        %1406 = vmatprep.subr.mxu0 0.0
        %1407 = vmatpush2.xpose.msra.mxu0 0.0
        %1408 = vmatprep.subr.mxu0 0.0
        %1409 = vmatpush2.xpose.msra.mxu0 0.0
        %1410 = vmatprep.subr.mxu0 0.0
        %1411 = vmatpush2.xpose.msra.mxu0 0.0
        %1412 = vmatprep.mubr.f32.mxu0 0.0
        %1413 = vmatmul.mubr.f32.gmra.mxu0 %v896
        %v1414 = vpop.f32.mrf.mxu0
        %v1415 = vadd.f32 0.0, %v1414
        %v1416 = vpop.f32.mrf.mxu0
        %1417 = vdwg.mxu0
        %s1418 = scalar_lea.vmem %s336, 8 [#allocation12]
        %1419 = vst.msk [vmem:[%s1418] sm:$0xff] %vm1203, %v1415
        %1420 = vmatprep.subr.mxu0 0.0
        %1421 = vmatpush1.xpose.msra.mxu0 0.0
        %1422 = vmatprep.subr.mxu0 0.0
        %1423 = vmatpush1.xpose.msra.mxu0 0.0
        %1424 = vmatprep.subr.mxu0 0.0
        %1425 = vmatpush1.xpose.msra.mxu0 0.0
        %1426 = vmatprep.subr.mxu0 0.0
        %1427 = vmatpush1.xpose.msra.mxu0 0.0
        %1428 = vmatprep.subr.mxu0 0.0
        %1429 = vmatpush1.xpose.msra.mxu0 0.0
        %1430 = vmatprep.subr.mxu0 0.0
        %1431 = vmatpush1.xpose.msra.mxu0 0.0
        %1432 = vmatprep.subr.mxu0 0.0
        %1433 = vmatpush1.xpose.msra.mxu0 0.0
        %1434 = vmatprep.subr.mxu0 0.0
        %1435 = vmatpush1.xpose.msra.mxu0 0.0
        %1436 = vmatprep.subr.mxu0 0.0
        %1437 = vmatpush1.xpose.msra.mxu0 0.0
        %1438 = vmatprep.subr.mxu0 0.0
        %1439 = vmatpush1.xpose.msra.mxu0 0.0
        %1440 = vmatprep.subr.mxu0 0.0
        %1441 = vmatpush1.xpose.msra.mxu0 0.0
        %1442 = vmatprep.subr.mxu0 0.0
        %1443 = vmatpush1.xpose.msra.mxu0 0.0
        %1444 = vmatprep.subr.mxu0 0.0
        %1445 = vmatpush1.xpose.msra.mxu0 0.0
        %1446 = vmatprep.subr.mxu0 0.0
        %1447 = vmatpush1.xpose.msra.mxu0 0.0
        %1448 = vmatprep.subr.mxu0 0.0
        %1449 = vmatpush1.xpose.msra.mxu0 0.0
        %1450 = vmatprep.subr.mxu0 0.0
        %1451 = vmatpush1.xpose.msra.mxu0 %v601
        %1452 = vmatprep.subr.mxu0 0.0
        %1453 = vmatpush2.xpose.msra.mxu0 0.0
        %1454 = vmatprep.subr.mxu0 0.0
        %1455 = vmatpush2.xpose.msra.mxu0 0.0
        %1456 = vmatprep.subr.mxu0 0.0
        %1457 = vmatpush2.xpose.msra.mxu0 0.0
        %1458 = vmatprep.subr.mxu0 0.0
        %1459 = vmatpush2.xpose.msra.mxu0 0.0
        %1460 = vmatprep.subr.mxu0 0.0
        %1461 = vmatpush2.xpose.msra.mxu0 0.0
        %1462 = vmatprep.subr.mxu0 0.0
        %1463 = vmatpush2.xpose.msra.mxu0 0.0
        %1464 = vmatprep.subr.mxu0 0.0
        %1465 = vmatpush2.xpose.msra.mxu0 0.0
        %1466 = vmatprep.subr.mxu0 0.0
        %1467 = vmatpush2.xpose.msra.mxu0 0.0
        %1468 = vmatprep.subr.mxu0 0.0
        %1469 = vmatpush2.xpose.msra.mxu0 0.0
        %1470 = vmatprep.subr.mxu0 0.0
        %1471 = vmatpush2.xpose.msra.mxu0 0.0
        %1472 = vmatprep.subr.mxu0 0.0
        %1473 = vmatpush2.xpose.msra.mxu0 0.0
        %1474 = vmatprep.subr.mxu0 0.0
        %1475 = vmatpush2.xpose.msra.mxu0 0.0
        %1476 = vmatprep.subr.mxu0 0.0
        %1477 = vmatpush2.xpose.msra.mxu0 0.0
        %1478 = vmatprep.subr.mxu0 0.0
        %1479 = vmatpush2.xpose.msra.mxu0 0.0
        %1480 = vmatprep.subr.mxu0 0.0
        %1481 = vmatpush2.xpose.msra.mxu0 0.0
        %1482 = vmatprep.subr.mxu0 0.0
        %1483 = vmatpush2.xpose.msra.mxu0 0.0
        %1484 = vmatprep.mubr.f32.mxu0 0.0
        %1485 = vmatmul.mubr.f32.gmra.mxu0 %v971
        %v1486 = vpop.f32.mrf.mxu0
        %v1487 = vadd.f32 0.0, %v1486
        %v1488 = vpop.f32.mrf.mxu0
        %1489 = vdwg.mxu0
        %s1490 = scalar_lea.vmem %s336, 16 [#allocation12]
        %1491 = vst.msk [vmem:[%s1490] sm:$0xff] %vm1203, %v1487
        %1492 = vmatprep.subr.mxu0 0.0
        %1493 = vmatpush1.xpose.msra.mxu0 0.0
        %1494 = vmatprep.subr.mxu0 0.0
        %1495 = vmatpush1.xpose.msra.mxu0 0.0
        %1496 = vmatprep.subr.mxu0 0.0
        %1497 = vmatpush1.xpose.msra.mxu0 0.0
        %1498 = vmatprep.subr.mxu0 0.0
        %1499 = vmatpush1.xpose.msra.mxu0 0.0
        %1500 = vmatprep.subr.mxu0 0.0
        %1501 = vmatpush1.xpose.msra.mxu0 0.0
        %1502 = vmatprep.subr.mxu0 0.0
        %1503 = vmatpush1.xpose.msra.mxu0 0.0
        %1504 = vmatprep.subr.mxu0 0.0
        %1505 = vmatpush1.xpose.msra.mxu0 0.0
        %1506 = vmatprep.subr.mxu0 0.0
        %1507 = vmatpush1.xpose.msra.mxu0 0.0
        %1508 = vmatprep.subr.mxu0 0.0
        %1509 = vmatpush1.xpose.msra.mxu0 0.0
        %1510 = vmatprep.subr.mxu0 0.0
        %1511 = vmatpush1.xpose.msra.mxu0 0.0
        %1512 = vmatprep.subr.mxu0 0.0
        %1513 = vmatpush1.xpose.msra.mxu0 0.0
        %1514 = vmatprep.subr.mxu0 0.0
        %1515 = vmatpush1.xpose.msra.mxu0 0.0
        %1516 = vmatprep.subr.mxu0 0.0
        %1517 = vmatpush1.xpose.msra.mxu0 0.0
        %1518 = vmatprep.subr.mxu0 0.0
        %1519 = vmatpush1.xpose.msra.mxu0 0.0
        %1520 = vmatprep.subr.mxu0 0.0
        %1521 = vmatpush1.xpose.msra.mxu0 0.0
        %1522 = vmatprep.subr.mxu0 0.0
        %1523 = vmatpush1.xpose.msra.mxu0 %v601
        %1524 = vmatprep.subr.mxu0 0.0
        %1525 = vmatpush2.xpose.msra.mxu0 0.0
        %1526 = vmatprep.subr.mxu0 0.0
        %1527 = vmatpush2.xpose.msra.mxu0 0.0
        %1528 = vmatprep.subr.mxu0 0.0
        %1529 = vmatpush2.xpose.msra.mxu0 0.0
        %1530 = vmatprep.subr.mxu0 0.0
        %1531 = vmatpush2.xpose.msra.mxu0 0.0
        %1532 = vmatprep.subr.mxu0 0.0
        %1533 = vmatpush2.xpose.msra.mxu0 0.0
        %1534 = vmatprep.subr.mxu0 0.0
        %1535 = vmatpush2.xpose.msra.mxu0 0.0
        %1536 = vmatprep.subr.mxu0 0.0
        %1537 = vmatpush2.xpose.msra.mxu0 0.0
        %1538 = vmatprep.subr.mxu0 0.0
        %1539 = vmatpush2.xpose.msra.mxu0 0.0
        %1540 = vmatprep.subr.mxu0 0.0
        %1541 = vmatpush2.xpose.msra.mxu0 0.0
        %1542 = vmatprep.subr.mxu0 0.0
        %1543 = vmatpush2.xpose.msra.mxu0 0.0
        %1544 = vmatprep.subr.mxu0 0.0
        %1545 = vmatpush2.xpose.msra.mxu0 0.0
        %1546 = vmatprep.subr.mxu0 0.0
        %1547 = vmatpush2.xpose.msra.mxu0 0.0
        %1548 = vmatprep.subr.mxu0 0.0
        %1549 = vmatpush2.xpose.msra.mxu0 0.0
        %1550 = vmatprep.subr.mxu0 0.0
        %1551 = vmatpush2.xpose.msra.mxu0 0.0
        %1552 = vmatprep.subr.mxu0 0.0
        %1553 = vmatpush2.xpose.msra.mxu0 0.0
        %1554 = vmatprep.subr.mxu0 0.0
        %1555 = vmatpush2.xpose.msra.mxu0 0.0
        %1556 = vmatprep.mubr.f32.mxu0 0.0
        %1557 = vmatmul.mubr.f32.gmra.mxu0 %v973
        %v1558 = vpop.f32.mrf.mxu0
        %v1559 = vadd.f32 0.0, %v1558
        %v1560 = vpop.f32.mrf.mxu0
        %1561 = vdwg.mxu0
        %s1562 = scalar_lea.vmem %s336, 24 [#allocation12]
        %1563 = vst.msk [vmem:[%s1562] sm:$0xff] %vm1203, %v1559
        %1564 = vmatprep.subr.mxu0 0.0
        %1565 = vmatpush1.xpose.msra.mxu0 0.0
        %1566 = vmatprep.subr.mxu0 0.0
        %1567 = vmatpush1.xpose.msra.mxu0 0.0
        %1568 = vmatprep.subr.mxu0 0.0
        %1569 = vmatpush1.xpose.msra.mxu0 0.0
        %1570 = vmatprep.subr.mxu0 0.0
        %1571 = vmatpush1.xpose.msra.mxu0 0.0
        %1572 = vmatprep.subr.mxu0 0.0
        %1573 = vmatpush1.xpose.msra.mxu0 0.0
        %1574 = vmatprep.subr.mxu0 0.0
        %1575 = vmatpush1.xpose.msra.mxu0 0.0
        %1576 = vmatprep.subr.mxu0 0.0
        %1577 = vmatpush1.xpose.msra.mxu0 0.0
        %1578 = vmatprep.subr.mxu0 0.0
        %1579 = vmatpush1.xpose.msra.mxu0 0.0
        %1580 = vmatprep.subr.mxu0 0.0
        %1581 = vmatpush1.xpose.msra.mxu0 0.0
        %1582 = vmatprep.subr.mxu0 0.0
        %1583 = vmatpush1.xpose.msra.mxu0 0.0
        %1584 = vmatprep.subr.mxu0 0.0
        %1585 = vmatpush1.xpose.msra.mxu0 0.0
        %1586 = vmatprep.subr.mxu0 0.0
        %1587 = vmatpush1.xpose.msra.mxu0 0.0
        %1588 = vmatprep.subr.mxu0 0.0
        %1589 = vmatpush1.xpose.msra.mxu0 0.0
        %1590 = vmatprep.subr.mxu0 0.0
        %1591 = vmatpush1.xpose.msra.mxu0 0.0
        %1592 = vmatprep.subr.mxu0 0.0
        %1593 = vmatpush1.xpose.msra.mxu0 0.0
        %1594 = vmatprep.subr.mxu0 0.0
        %1595 = vmatpush1.xpose.msra.mxu0 %v601
        %1596 = vmatprep.subr.mxu0 0.0
        %1597 = vmatpush2.xpose.msra.mxu0 0.0
        %1598 = vmatprep.subr.mxu0 0.0
        %1599 = vmatpush2.xpose.msra.mxu0 0.0
        %1600 = vmatprep.subr.mxu0 0.0
        %1601 = vmatpush2.xpose.msra.mxu0 0.0
        %1602 = vmatprep.subr.mxu0 0.0
        %1603 = vmatpush2.xpose.msra.mxu0 0.0
        %1604 = vmatprep.subr.mxu0 0.0
        %1605 = vmatpush2.xpose.msra.mxu0 0.0
        %1606 = vmatprep.subr.mxu0 0.0
        %1607 = vmatpush2.xpose.msra.mxu0 0.0
        %1608 = vmatprep.subr.mxu0 0.0
        %1609 = vmatpush2.xpose.msra.mxu0 0.0
        %1610 = vmatprep.subr.mxu0 0.0
        %1611 = vmatpush2.xpose.msra.mxu0 0.0
        %1612 = vmatprep.subr.mxu0 0.0
        %1613 = vmatpush2.xpose.msra.mxu0 0.0
        %1614 = vmatprep.subr.mxu0 0.0
        %1615 = vmatpush2.xpose.msra.mxu0 0.0
        %1616 = vmatprep.subr.mxu0 0.0
        %1617 = vmatpush2.xpose.msra.mxu0 0.0
        %1618 = vmatprep.subr.mxu0 0.0
        %1619 = vmatpush2.xpose.msra.mxu0 0.0
        %1620 = vmatprep.subr.mxu0 0.0
        %1621 = vmatpush2.xpose.msra.mxu0 0.0
        %1622 = vmatprep.subr.mxu0 0.0
        %1623 = vmatpush2.xpose.msra.mxu0 0.0
        %1624 = vmatprep.subr.mxu0 0.0
        %1625 = vmatpush2.xpose.msra.mxu0 0.0
        %1626 = vmatprep.subr.mxu0 0.0
        %1627 = vmatpush2.xpose.msra.mxu0 0.0
        %1628 = vmatprep.mubr.f32.mxu0 0.0
        %1629 = vmatmul.mubr.f32.gmra.mxu0 %v1048
        %v1630 = vpop.f32.mrf.mxu0
        %v1631 = vadd.f32 0.0, %v1630
        %v1632 = vpop.f32.mrf.mxu0
        %1633 = vdwg.mxu0
        %s1634 = scalar_lea.vmem %s336, 32 [#allocation12]
        %1635 = vst.msk [vmem:[%s1634] sm:$0xff] %vm1203, %v1631
        %1636 = vmatprep.subr.mxu0 0.0
        %1637 = vmatpush1.xpose.msra.mxu0 0.0
        %1638 = vmatprep.subr.mxu0 0.0
        %1639 = vmatpush1.xpose.msra.mxu0 0.0
        %1640 = vmatprep.subr.mxu0 0.0
        %1641 = vmatpush1.xpose.msra.mxu0 0.0
        %1642 = vmatprep.subr.mxu0 0.0
        %1643 = vmatpush1.xpose.msra.mxu0 0.0
        %1644 = vmatprep.subr.mxu0 0.0
        %1645 = vmatpush1.xpose.msra.mxu0 0.0
        %1646 = vmatprep.subr.mxu0 0.0
        %1647 = vmatpush1.xpose.msra.mxu0 0.0
        %1648 = vmatprep.subr.mxu0 0.0
        %1649 = vmatpush1.xpose.msra.mxu0 0.0
        %1650 = vmatprep.subr.mxu0 0.0
        %1651 = vmatpush1.xpose.msra.mxu0 0.0
        %1652 = vmatprep.subr.mxu0 0.0
        %1653 = vmatpush1.xpose.msra.mxu0 0.0
        %1654 = vmatprep.subr.mxu0 0.0
        %1655 = vmatpush1.xpose.msra.mxu0 0.0
        %1656 = vmatprep.subr.mxu0 0.0
        %1657 = vmatpush1.xpose.msra.mxu0 0.0
        %1658 = vmatprep.subr.mxu0 0.0
        %1659 = vmatpush1.xpose.msra.mxu0 0.0
        %1660 = vmatprep.subr.mxu0 0.0
        %1661 = vmatpush1.xpose.msra.mxu0 0.0
        %1662 = vmatprep.subr.mxu0 0.0
        %1663 = vmatpush1.xpose.msra.mxu0 0.0
        %1664 = vmatprep.subr.mxu0 0.0
        %1665 = vmatpush1.xpose.msra.mxu0 0.0
        %1666 = vmatprep.subr.mxu0 0.0
        %1667 = vmatpush1.xpose.msra.mxu0 %v601
        %1668 = vmatprep.subr.mxu0 0.0
        %1669 = vmatpush2.xpose.msra.mxu0 0.0
        %1670 = vmatprep.subr.mxu0 0.0
        %1671 = vmatpush2.xpose.msra.mxu0 0.0
        %1672 = vmatprep.subr.mxu0 0.0
        %1673 = vmatpush2.xpose.msra.mxu0 0.0
        %1674 = vmatprep.subr.mxu0 0.0
        %1675 = vmatpush2.xpose.msra.mxu0 0.0
        %1676 = vmatprep.subr.mxu0 0.0
        %1677 = vmatpush2.xpose.msra.mxu0 0.0
        %1678 = vmatprep.subr.mxu0 0.0
        %1679 = vmatpush2.xpose.msra.mxu0 0.0
        %1680 = vmatprep.subr.mxu0 0.0
        %1681 = vmatpush2.xpose.msra.mxu0 0.0
        %1682 = vmatprep.subr.mxu0 0.0
        %1683 = vmatpush2.xpose.msra.mxu0 0.0
        %1684 = vmatprep.subr.mxu0 0.0
        %1685 = vmatpush2.xpose.msra.mxu0 0.0
        %1686 = vmatprep.subr.mxu0 0.0
        %1687 = vmatpush2.xpose.msra.mxu0 0.0
        %1688 = vmatprep.subr.mxu0 0.0
        %1689 = vmatpush2.xpose.msra.mxu0 0.0
        %1690 = vmatprep.subr.mxu0 0.0
        %1691 = vmatpush2.xpose.msra.mxu0 0.0
        %1692 = vmatprep.subr.mxu0 0.0
        %1693 = vmatpush2.xpose.msra.mxu0 0.0
        %1694 = vmatprep.subr.mxu0 0.0
        %1695 = vmatpush2.xpose.msra.mxu0 0.0
        %1696 = vmatprep.subr.mxu0 0.0
        %1697 = vmatpush2.xpose.msra.mxu0 0.0
        %1698 = vmatprep.subr.mxu0 0.0
        %1699 = vmatpush2.xpose.msra.mxu0 0.0
        %1700 = vmatprep.mubr.f32.mxu0 0.0
        %1701 = vmatmul.mubr.f32.gmra.mxu0 %v1050
        %v1702 = vpop.f32.mrf.mxu0
        %v1703 = vadd.f32 0.0, %v1702
        %v1704 = vpop.f32.mrf.mxu0
        %1705 = vdwg.mxu0
        %s1706 = scalar_lea.vmem %s336, 40 [#allocation12]
        %1707 = vst.msk [vmem:[%s1706] sm:$0xff] %vm1203, %v1703
        %1708 = vmatprep.subr.mxu0 0.0
        %1709 = vmatpush1.xpose.msra.mxu0 0.0
        %1710 = vmatprep.subr.mxu0 0.0
        %1711 = vmatpush1.xpose.msra.mxu0 0.0
        %1712 = vmatprep.subr.mxu0 0.0
        %1713 = vmatpush1.xpose.msra.mxu0 0.0
        %1714 = vmatprep.subr.mxu0 0.0
        %1715 = vmatpush1.xpose.msra.mxu0 0.0
        %1716 = vmatprep.subr.mxu0 0.0
        %1717 = vmatpush1.xpose.msra.mxu0 0.0
        %1718 = vmatprep.subr.mxu0 0.0
        %1719 = vmatpush1.xpose.msra.mxu0 0.0
        %1720 = vmatprep.subr.mxu0 0.0
        %1721 = vmatpush1.xpose.msra.mxu0 0.0
        %1722 = vmatprep.subr.mxu0 0.0
        %1723 = vmatpush1.xpose.msra.mxu0 0.0
        %1724 = vmatprep.subr.mxu0 0.0
        %1725 = vmatpush1.xpose.msra.mxu0 0.0
        %1726 = vmatprep.subr.mxu0 0.0
        %1727 = vmatpush1.xpose.msra.mxu0 0.0
        %1728 = vmatprep.subr.mxu0 0.0
        %1729 = vmatpush1.xpose.msra.mxu0 0.0
        %1730 = vmatprep.subr.mxu0 0.0
        %1731 = vmatpush1.xpose.msra.mxu0 0.0
        %1732 = vmatprep.subr.mxu0 0.0
        %1733 = vmatpush1.xpose.msra.mxu0 0.0
        %1734 = vmatprep.subr.mxu0 0.0
        %1735 = vmatpush1.xpose.msra.mxu0 0.0
        %1736 = vmatprep.subr.mxu0 0.0
        %1737 = vmatpush1.xpose.msra.mxu0 0.0
        %1738 = vmatprep.subr.mxu0 0.0
        %1739 = vmatpush1.xpose.msra.mxu0 %v601
        %1740 = vmatprep.subr.mxu0 0.0
        %1741 = vmatpush2.xpose.msra.mxu0 0.0
        %1742 = vmatprep.subr.mxu0 0.0
        %1743 = vmatpush2.xpose.msra.mxu0 0.0
        %1744 = vmatprep.subr.mxu0 0.0
        %1745 = vmatpush2.xpose.msra.mxu0 0.0
        %1746 = vmatprep.subr.mxu0 0.0
        %1747 = vmatpush2.xpose.msra.mxu0 0.0
        %1748 = vmatprep.subr.mxu0 0.0
        %1749 = vmatpush2.xpose.msra.mxu0 0.0
        %1750 = vmatprep.subr.mxu0 0.0
        %1751 = vmatpush2.xpose.msra.mxu0 0.0
        %1752 = vmatprep.subr.mxu0 0.0
        %1753 = vmatpush2.xpose.msra.mxu0 0.0
        %1754 = vmatprep.subr.mxu0 0.0
        %1755 = vmatpush2.xpose.msra.mxu0 0.0
        %1756 = vmatprep.subr.mxu0 0.0
        %1757 = vmatpush2.xpose.msra.mxu0 0.0
        %1758 = vmatprep.subr.mxu0 0.0
        %1759 = vmatpush2.xpose.msra.mxu0 0.0
        %1760 = vmatprep.subr.mxu0 0.0
        %1761 = vmatpush2.xpose.msra.mxu0 0.0
        %1762 = vmatprep.subr.mxu0 0.0
        %1763 = vmatpush2.xpose.msra.mxu0 0.0
        %1764 = vmatprep.subr.mxu0 0.0
        %1765 = vmatpush2.xpose.msra.mxu0 0.0
        %1766 = vmatprep.subr.mxu0 0.0
        %1767 = vmatpush2.xpose.msra.mxu0 0.0
        %1768 = vmatprep.subr.mxu0 0.0
        %1769 = vmatpush2.xpose.msra.mxu0 0.0
        %1770 = vmatprep.subr.mxu0 0.0
        %1771 = vmatpush2.xpose.msra.mxu0 0.0
        %1772 = vmatprep.mubr.f32.mxu0 0.0
        %1773 = vmatmul.mubr.f32.gmra.mxu0 %v1125
        %v1774 = vpop.f32.mrf.mxu0
        %v1775 = vadd.f32 0.0, %v1774
        %v1776 = vpop.f32.mrf.mxu0
        %1777 = vdwg.mxu0
        %s1778 = scalar_lea.vmem %s336, 48 [#allocation12]
        %1779 = vst.msk [vmem:[%s1778] sm:$0xff] %vm1203, %v1775
        %1780 = vmatprep.subr.mxu0 0.0
        %1781 = vmatpush1.xpose.msra.mxu0 0.0
        %1782 = vmatprep.subr.mxu0 0.0
        %1783 = vmatpush1.xpose.msra.mxu0 0.0
        %1784 = vmatprep.subr.mxu0 0.0
        %1785 = vmatpush1.xpose.msra.mxu0 0.0
        %1786 = vmatprep.subr.mxu0 0.0
        %1787 = vmatpush1.xpose.msra.mxu0 0.0
        %1788 = vmatprep.subr.mxu0 0.0
        %1789 = vmatpush1.xpose.msra.mxu0 0.0
        %1790 = vmatprep.subr.mxu0 0.0
        %1791 = vmatpush1.xpose.msra.mxu0 0.0
        %1792 = vmatprep.subr.mxu0 0.0
        %1793 = vmatpush1.xpose.msra.mxu0 0.0
        %1794 = vmatprep.subr.mxu0 0.0
        %1795 = vmatpush1.xpose.msra.mxu0 0.0
        %1796 = vmatprep.subr.mxu0 0.0
        %1797 = vmatpush1.xpose.msra.mxu0 0.0
        %1798 = vmatprep.subr.mxu0 0.0
        %1799 = vmatpush1.xpose.msra.mxu0 0.0
        %1800 = vmatprep.subr.mxu0 0.0
        %1801 = vmatpush1.xpose.msra.mxu0 0.0
        %1802 = vmatprep.subr.mxu0 0.0
        %1803 = vmatpush1.xpose.msra.mxu0 0.0
        %1804 = vmatprep.subr.mxu0 0.0
        %1805 = vmatpush1.xpose.msra.mxu0 0.0
        %1806 = vmatprep.subr.mxu0 0.0
        %1807 = vmatpush1.xpose.msra.mxu0 0.0
        %1808 = vmatprep.subr.mxu0 0.0
        %1809 = vmatpush1.xpose.msra.mxu0 0.0
        %1810 = vmatprep.subr.mxu0 0.0
        %1811 = vmatpush1.xpose.msra.mxu0 %v603
        %1812 = vmatprep.subr.mxu0 0.0
        %1813 = vmatpush2.xpose.msra.mxu0 0.0
        %1814 = vmatprep.subr.mxu0 0.0
        %1815 = vmatpush2.xpose.msra.mxu0 0.0
        %1816 = vmatprep.subr.mxu0 0.0
        %1817 = vmatpush2.xpose.msra.mxu0 0.0
        %1818 = vmatprep.subr.mxu0 0.0
        %1819 = vmatpush2.xpose.msra.mxu0 0.0
        %1820 = vmatprep.subr.mxu0 0.0
        %1821 = vmatpush2.xpose.msra.mxu0 0.0
        %1822 = vmatprep.subr.mxu0 0.0
        %1823 = vmatpush2.xpose.msra.mxu0 0.0
        %1824 = vmatprep.subr.mxu0 0.0
        %1825 = vmatpush2.xpose.msra.mxu0 0.0
        %1826 = vmatprep.subr.mxu0 0.0
        %1827 = vmatpush2.xpose.msra.mxu0 0.0
        %1828 = vmatprep.subr.mxu0 0.0
        %1829 = vmatpush2.xpose.msra.mxu0 0.0
        %1830 = vmatprep.subr.mxu0 0.0
        %1831 = vmatpush2.xpose.msra.mxu0 0.0
        %1832 = vmatprep.subr.mxu0 0.0
        %1833 = vmatpush2.xpose.msra.mxu0 0.0
        %1834 = vmatprep.subr.mxu0 0.0
        %1835 = vmatpush2.xpose.msra.mxu0 0.0
        %1836 = vmatprep.subr.mxu0 0.0
        %1837 = vmatpush2.xpose.msra.mxu0 0.0
        %1838 = vmatprep.subr.mxu0 0.0
        %1839 = vmatpush2.xpose.msra.mxu0 0.0
        %1840 = vmatprep.subr.mxu0 0.0
        %1841 = vmatpush2.xpose.msra.mxu0 0.0
        %1842 = vmatprep.subr.mxu0 0.0
        %1843 = vmatpush2.xpose.msra.mxu0 0.0
        %1844 = vmatprep.mubr.f32.mxu0 0.0
        %1845 = vmatmul.mubr.f32.gmra.mxu0 %v711
        %v1846 = vpop.f32.mrf.mxu0
        %v1847 = vadd.f32 0.0, %v1846
        %v1848 = vpop.f32.mrf.mxu0
        %1849 = vdwg.mxu0
        %s1850 = scalar_lea.vmem %s329, 16 [#allocation11]
        %1851 = vst.msk [vmem:[%s1850] sm:$0xff] %vm1203, %v1847
        %1852 = vmatprep.subr.mxu0 0.0
        %1853 = vmatpush1.xpose.msra.mxu0 0.0
        %1854 = vmatprep.subr.mxu0 0.0
        %1855 = vmatpush1.xpose.msra.mxu0 0.0
        %1856 = vmatprep.subr.mxu0 0.0
        %1857 = vmatpush1.xpose.msra.mxu0 0.0
        %1858 = vmatprep.subr.mxu0 0.0
        %1859 = vmatpush1.xpose.msra.mxu0 0.0
        %1860 = vmatprep.subr.mxu0 0.0
        %1861 = vmatpush1.xpose.msra.mxu0 0.0
        %1862 = vmatprep.subr.mxu0 0.0
        %1863 = vmatpush1.xpose.msra.mxu0 0.0
        %1864 = vmatprep.subr.mxu0 0.0
        %1865 = vmatpush1.xpose.msra.mxu0 0.0
        %1866 = vmatprep.subr.mxu0 0.0
        %1867 = vmatpush1.xpose.msra.mxu0 0.0
        %1868 = vmatprep.subr.mxu0 0.0
        %1869 = vmatpush1.xpose.msra.mxu0 0.0
        %1870 = vmatprep.subr.mxu0 0.0
        %1871 = vmatpush1.xpose.msra.mxu0 0.0
        %1872 = vmatprep.subr.mxu0 0.0
        %1873 = vmatpush1.xpose.msra.mxu0 0.0
        %1874 = vmatprep.subr.mxu0 0.0
        %1875 = vmatpush1.xpose.msra.mxu0 0.0
        %1876 = vmatprep.subr.mxu0 0.0
        %1877 = vmatpush1.xpose.msra.mxu0 0.0
        %1878 = vmatprep.subr.mxu0 0.0
        %1879 = vmatpush1.xpose.msra.mxu0 0.0
        %1880 = vmatprep.subr.mxu0 0.0
        %1881 = vmatpush1.xpose.msra.mxu0 0.0
        %1882 = vmatprep.subr.mxu0 0.0
        %1883 = vmatpush1.xpose.msra.mxu0 %v603
        %1884 = vmatprep.subr.mxu0 0.0
        %1885 = vmatpush2.xpose.msra.mxu0 0.0
        %1886 = vmatprep.subr.mxu0 0.0
        %1887 = vmatpush2.xpose.msra.mxu0 0.0
        %1888 = vmatprep.subr.mxu0 0.0
        %1889 = vmatpush2.xpose.msra.mxu0 0.0
        %1890 = vmatprep.subr.mxu0 0.0
        %1891 = vmatpush2.xpose.msra.mxu0 0.0
        %1892 = vmatprep.subr.mxu0 0.0
        %1893 = vmatpush2.xpose.msra.mxu0 0.0
        %1894 = vmatprep.subr.mxu0 0.0
        %1895 = vmatpush2.xpose.msra.mxu0 0.0
        %1896 = vmatprep.subr.mxu0 0.0
        %1897 = vmatpush2.xpose.msra.mxu0 0.0
        %1898 = vmatprep.subr.mxu0 0.0
        %1899 = vmatpush2.xpose.msra.mxu0 0.0
        %1900 = vmatprep.subr.mxu0 0.0
        %1901 = vmatpush2.xpose.msra.mxu0 0.0
        %1902 = vmatprep.subr.mxu0 0.0
        %1903 = vmatpush2.xpose.msra.mxu0 0.0
        %1904 = vmatprep.subr.mxu0 0.0
        %1905 = vmatpush2.xpose.msra.mxu0 0.0
        %1906 = vmatprep.subr.mxu0 0.0
        %1907 = vmatpush2.xpose.msra.mxu0 0.0
        %1908 = vmatprep.subr.mxu0 0.0
        %1909 = vmatpush2.xpose.msra.mxu0 0.0
        %1910 = vmatprep.subr.mxu0 0.0
        %1911 = vmatpush2.xpose.msra.mxu0 0.0
        %1912 = vmatprep.subr.mxu0 0.0
        %1913 = vmatpush2.xpose.msra.mxu0 0.0
        %1914 = vmatprep.subr.mxu0 0.0
        %1915 = vmatpush2.xpose.msra.mxu0 0.0
        %1916 = vmatprep.mubr.f32.mxu0 0.0
        %1917 = vmatmul.mubr.f32.gmra.mxu0 %v713
        %v1918 = vpop.f32.mrf.mxu0
        %v1919 = vadd.f32 0.0, %v1918
        %v1920 = vpop.f32.mrf.mxu0
        %1921 = vdwg.mxu0
        %s1922 = scalar_lea.vmem %s329, 24 [#allocation11]
        %1923 = vst.msk [vmem:[%s1922] sm:$0xff] %vm1203, %v1919
        %1924 = vmatprep.subr.mxu0 0.0
        %1925 = vmatpush1.xpose.msra.mxu0 0.0
        %1926 = vmatprep.subr.mxu0 0.0
        %1927 = vmatpush1.xpose.msra.mxu0 0.0
        %1928 = vmatprep.subr.mxu0 0.0
        %1929 = vmatpush1.xpose.msra.mxu0 0.0
        %1930 = vmatprep.subr.mxu0 0.0
        %1931 = vmatpush1.xpose.msra.mxu0 0.0
        %1932 = vmatprep.subr.mxu0 0.0
        %1933 = vmatpush1.xpose.msra.mxu0 0.0
        %1934 = vmatprep.subr.mxu0 0.0
        %1935 = vmatpush1.xpose.msra.mxu0 0.0
        %1936 = vmatprep.subr.mxu0 0.0
        %1937 = vmatpush1.xpose.msra.mxu0 0.0
        %1938 = vmatprep.subr.mxu0 0.0
        %1939 = vmatpush1.xpose.msra.mxu0 0.0
        %1940 = vmatprep.subr.mxu0 0.0
        %1941 = vmatpush1.xpose.msra.mxu0 0.0
        %1942 = vmatprep.subr.mxu0 0.0
        %1943 = vmatpush1.xpose.msra.mxu0 0.0
        %1944 = vmatprep.subr.mxu0 0.0
        %1945 = vmatpush1.xpose.msra.mxu0 0.0
        %1946 = vmatprep.subr.mxu0 0.0
        %1947 = vmatpush1.xpose.msra.mxu0 0.0
        %1948 = vmatprep.subr.mxu0 0.0
        %1949 = vmatpush1.xpose.msra.mxu0 0.0
        %1950 = vmatprep.subr.mxu0 0.0
        %1951 = vmatpush1.xpose.msra.mxu0 0.0
        %1952 = vmatprep.subr.mxu0 0.0
        %1953 = vmatpush1.xpose.msra.mxu0 0.0
        %1954 = vmatprep.subr.mxu0 0.0
        %1955 = vmatpush1.xpose.msra.mxu0 %v605
        %1956 = vmatprep.subr.mxu0 0.0
        %1957 = vmatpush2.xpose.msra.mxu0 0.0
        %1958 = vmatprep.subr.mxu0 0.0
        %1959 = vmatpush2.xpose.msra.mxu0 0.0
        %1960 = vmatprep.subr.mxu0 0.0
        %1961 = vmatpush2.xpose.msra.mxu0 0.0
        %1962 = vmatprep.subr.mxu0 0.0
        %1963 = vmatpush2.xpose.msra.mxu0 0.0
        %1964 = vmatprep.subr.mxu0 0.0
        %1965 = vmatpush2.xpose.msra.mxu0 0.0
        %1966 = vmatprep.subr.mxu0 0.0
        %1967 = vmatpush2.xpose.msra.mxu0 0.0
        %1968 = vmatprep.subr.mxu0 0.0
        %1969 = vmatpush2.xpose.msra.mxu0 0.0
        %1970 = vmatprep.subr.mxu0 0.0
        %1971 = vmatpush2.xpose.msra.mxu0 0.0
        %1972 = vmatprep.subr.mxu0 0.0
        %1973 = vmatpush2.xpose.msra.mxu0 0.0
        %1974 = vmatprep.subr.mxu0 0.0
        %1975 = vmatpush2.xpose.msra.mxu0 0.0
        %1976 = vmatprep.subr.mxu0 0.0
        %1977 = vmatpush2.xpose.msra.mxu0 0.0
        %1978 = vmatprep.subr.mxu0 0.0
        %1979 = vmatpush2.xpose.msra.mxu0 0.0
        %1980 = vmatprep.subr.mxu0 0.0
        %1981 = vmatpush2.xpose.msra.mxu0 0.0
        %1982 = vmatprep.subr.mxu0 0.0
        %1983 = vmatpush2.xpose.msra.mxu0 0.0
        %1984 = vmatprep.subr.mxu0 0.0
        %1985 = vmatpush2.xpose.msra.mxu0 0.0
        %1986 = vmatprep.subr.mxu0 0.0
        %1987 = vmatpush2.xpose.msra.mxu0 0.0
        %1988 = vmatprep.mubr.f32.mxu0 0.0
        %1989 = vmatmul.mubr.f32.gmra.mxu0 %v900
        %v1990 = vpop.f32.mrf.mxu0
        %v1991 = vadd.f32 0.0, %v1990
        %v1992 = vpop.f32.mrf.mxu0
        %1993 = vdwg.mxu0
        %s1994 = scalar_lea.vmem %s336, 56 [#allocation12]
        %1995 = vst.msk [vmem:[%s1994] sm:$0xff] %vm1203, %v1991
        %1996 = vmatprep.subr.mxu0 0.0
        %1997 = vmatpush1.xpose.msra.mxu0 0.0
        %1998 = vmatprep.subr.mxu0 0.0
        %1999 = vmatpush1.xpose.msra.mxu0 0.0
        %2000 = vmatprep.subr.mxu0 0.0
        %2001 = vmatpush1.xpose.msra.mxu0 0.0
        %2002 = vmatprep.subr.mxu0 0.0
        %2003 = vmatpush1.xpose.msra.mxu0 0.0
        %2004 = vmatprep.subr.mxu0 0.0
        %2005 = vmatpush1.xpose.msra.mxu0 0.0
        %2006 = vmatprep.subr.mxu0 0.0
        %2007 = vmatpush1.xpose.msra.mxu0 0.0
        %2008 = vmatprep.subr.mxu0 0.0
        %2009 = vmatpush1.xpose.msra.mxu0 0.0
        %2010 = vmatprep.subr.mxu0 0.0
        %2011 = vmatpush1.xpose.msra.mxu0 0.0
        %2012 = vmatprep.subr.mxu0 0.0
        %2013 = vmatpush1.xpose.msra.mxu0 0.0
        %2014 = vmatprep.subr.mxu0 0.0
        %2015 = vmatpush1.xpose.msra.mxu0 0.0
        %2016 = vmatprep.subr.mxu0 0.0
        %2017 = vmatpush1.xpose.msra.mxu0 0.0
        %2018 = vmatprep.subr.mxu0 0.0
        %2019 = vmatpush1.xpose.msra.mxu0 0.0
        %2020 = vmatprep.subr.mxu0 0.0
        %2021 = vmatpush1.xpose.msra.mxu0 0.0
        %2022 = vmatprep.subr.mxu0 0.0
        %2023 = vmatpush1.xpose.msra.mxu0 0.0
        %2024 = vmatprep.subr.mxu0 0.0
        %2025 = vmatpush1.xpose.msra.mxu0 0.0
        %2026 = vmatprep.subr.mxu0 0.0
        %2027 = vmatpush1.xpose.msra.mxu0 %v605
        %2028 = vmatprep.subr.mxu0 0.0
        %2029 = vmatpush2.xpose.msra.mxu0 0.0
        %2030 = vmatprep.subr.mxu0 0.0
        %2031 = vmatpush2.xpose.msra.mxu0 0.0
        %2032 = vmatprep.subr.mxu0 0.0
        %2033 = vmatpush2.xpose.msra.mxu0 0.0
        %2034 = vmatprep.subr.mxu0 0.0
        %2035 = vmatpush2.xpose.msra.mxu0 0.0
        %2036 = vmatprep.subr.mxu0 0.0
        %2037 = vmatpush2.xpose.msra.mxu0 0.0
        %2038 = vmatprep.subr.mxu0 0.0
        %2039 = vmatpush2.xpose.msra.mxu0 0.0
        %2040 = vmatprep.subr.mxu0 0.0
        %2041 = vmatpush2.xpose.msra.mxu0 0.0
        %2042 = vmatprep.subr.mxu0 0.0
        %2043 = vmatpush2.xpose.msra.mxu0 0.0
        %2044 = vmatprep.subr.mxu0 0.0
        %2045 = vmatpush2.xpose.msra.mxu0 0.0
        %2046 = vmatprep.subr.mxu0 0.0
        %2047 = vmatpush2.xpose.msra.mxu0 0.0
        %2048 = vmatprep.subr.mxu0 0.0
        %2049 = vmatpush2.xpose.msra.mxu0 0.0
        %2050 = vmatprep.subr.mxu0 0.0
        %2051 = vmatpush2.xpose.msra.mxu0 0.0
        %2052 = vmatprep.subr.mxu0 0.0
        %2053 = vmatpush2.xpose.msra.mxu0 0.0
        %2054 = vmatprep.subr.mxu0 0.0
        %2055 = vmatpush2.xpose.msra.mxu0 0.0
        %2056 = vmatprep.subr.mxu0 0.0
        %2057 = vmatpush2.xpose.msra.mxu0 0.0
        %2058 = vmatprep.subr.mxu0 0.0
        %2059 = vmatpush2.xpose.msra.mxu0 0.0
        %2060 = vmatprep.mubr.f32.mxu0 0.0
        %2061 = vmatmul.mubr.f32.gmra.mxu0 %v902
        %v2062 = vpop.f32.mrf.mxu0
        %v2063 = vadd.f32 0.0, %v2062
        %v2064 = vpop.f32.mrf.mxu0
        %2065 = vdwg.mxu0
        %s2066 = scalar_lea.vmem %s336, 64 [#allocation12]
        %2067 = vst.msk [vmem:[%s2066] sm:$0xff] %vm1203, %v2063
        %2068 = vmatprep.subr.mxu0 0.0
        %2069 = vmatpush1.xpose.msra.mxu0 0.0
        %2070 = vmatprep.subr.mxu0 0.0
        %2071 = vmatpush1.xpose.msra.mxu0 0.0
        %2072 = vmatprep.subr.mxu0 0.0
        %2073 = vmatpush1.xpose.msra.mxu0 0.0
        %2074 = vmatprep.subr.mxu0 0.0
        %2075 = vmatpush1.xpose.msra.mxu0 0.0
        %2076 = vmatprep.subr.mxu0 0.0
        %2077 = vmatpush1.xpose.msra.mxu0 0.0
        %2078 = vmatprep.subr.mxu0 0.0
        %2079 = vmatpush1.xpose.msra.mxu0 0.0
        %2080 = vmatprep.subr.mxu0 0.0
        %2081 = vmatpush1.xpose.msra.mxu0 0.0
        %2082 = vmatprep.subr.mxu0 0.0
        %2083 = vmatpush1.xpose.msra.mxu0 0.0
        %2084 = vmatprep.subr.mxu0 0.0
        %2085 = vmatpush1.xpose.msra.mxu0 0.0
        %2086 = vmatprep.subr.mxu0 0.0
        %2087 = vmatpush1.xpose.msra.mxu0 0.0
        %2088 = vmatprep.subr.mxu0 0.0
        %2089 = vmatpush1.xpose.msra.mxu0 0.0
        %2090 = vmatprep.subr.mxu0 0.0
        %2091 = vmatpush1.xpose.msra.mxu0 0.0
        %2092 = vmatprep.subr.mxu0 0.0
        %2093 = vmatpush1.xpose.msra.mxu0 0.0
        %2094 = vmatprep.subr.mxu0 0.0
        %2095 = vmatpush1.xpose.msra.mxu0 0.0
        %2096 = vmatprep.subr.mxu0 0.0
        %2097 = vmatpush1.xpose.msra.mxu0 0.0
        %2098 = vmatprep.subr.mxu0 0.0
        %2099 = vmatpush1.xpose.msra.mxu0 %v605
        %2100 = vmatprep.subr.mxu0 0.0
        %2101 = vmatpush2.xpose.msra.mxu0 0.0
        %2102 = vmatprep.subr.mxu0 0.0
        %2103 = vmatpush2.xpose.msra.mxu0 0.0
        %2104 = vmatprep.subr.mxu0 0.0
        %2105 = vmatpush2.xpose.msra.mxu0 0.0
        %2106 = vmatprep.subr.mxu0 0.0
        %2107 = vmatpush2.xpose.msra.mxu0 0.0
        %2108 = vmatprep.subr.mxu0 0.0
        %2109 = vmatpush2.xpose.msra.mxu0 0.0
        %2110 = vmatprep.subr.mxu0 0.0
        %2111 = vmatpush2.xpose.msra.mxu0 0.0
        %2112 = vmatprep.subr.mxu0 0.0
        %2113 = vmatpush2.xpose.msra.mxu0 0.0
        %2114 = vmatprep.subr.mxu0 0.0
        %2115 = vmatpush2.xpose.msra.mxu0 0.0
        %2116 = vmatprep.subr.mxu0 0.0
        %2117 = vmatpush2.xpose.msra.mxu0 0.0
        %2118 = vmatprep.subr.mxu0 0.0
        %2119 = vmatpush2.xpose.msra.mxu0 0.0
        %2120 = vmatprep.subr.mxu0 0.0
        %2121 = vmatpush2.xpose.msra.mxu0 0.0
        %2122 = vmatprep.subr.mxu0 0.0
        %2123 = vmatpush2.xpose.msra.mxu0 0.0
        %2124 = vmatprep.subr.mxu0 0.0
        %2125 = vmatpush2.xpose.msra.mxu0 0.0
        %2126 = vmatprep.subr.mxu0 0.0
        %2127 = vmatpush2.xpose.msra.mxu0 0.0
        %2128 = vmatprep.subr.mxu0 0.0
        %2129 = vmatpush2.xpose.msra.mxu0 0.0
        %2130 = vmatprep.subr.mxu0 0.0
        %2131 = vmatpush2.xpose.msra.mxu0 0.0
        %2132 = vmatprep.mubr.f32.mxu0 0.0
        %2133 = vmatmul.mubr.f32.gmra.mxu0 %v977
        %v2134 = vpop.f32.mrf.mxu0
        %v2135 = vadd.f32 0.0, %v2134
        %v2136 = vpop.f32.mrf.mxu0
        %2137 = vdwg.mxu0
        %s2138 = scalar_lea.vmem %s336, 72 [#allocation12]
        %2139 = vst.msk [vmem:[%s2138] sm:$0xff] %vm1203, %v2135
        %2140 = vmatprep.subr.mxu0 0.0
        %2141 = vmatpush1.xpose.msra.mxu0 0.0
        %2142 = vmatprep.subr.mxu0 0.0
        %2143 = vmatpush1.xpose.msra.mxu0 0.0
        %2144 = vmatprep.subr.mxu0 0.0
        %2145 = vmatpush1.xpose.msra.mxu0 0.0
        %2146 = vmatprep.subr.mxu0 0.0
        %2147 = vmatpush1.xpose.msra.mxu0 0.0
        %2148 = vmatprep.subr.mxu0 0.0
        %2149 = vmatpush1.xpose.msra.mxu0 0.0
        %2150 = vmatprep.subr.mxu0 0.0
        %2151 = vmatpush1.xpose.msra.mxu0 0.0
        %2152 = vmatprep.subr.mxu0 0.0
        %2153 = vmatpush1.xpose.msra.mxu0 0.0
        %2154 = vmatprep.subr.mxu0 0.0
        %2155 = vmatpush1.xpose.msra.mxu0 0.0
        %2156 = vmatprep.subr.mxu0 0.0
        %2157 = vmatpush1.xpose.msra.mxu0 0.0
        %2158 = vmatprep.subr.mxu0 0.0
        %2159 = vmatpush1.xpose.msra.mxu0 0.0
        %2160 = vmatprep.subr.mxu0 0.0
        %2161 = vmatpush1.xpose.msra.mxu0 0.0
        %2162 = vmatprep.subr.mxu0 0.0
        %2163 = vmatpush1.xpose.msra.mxu0 0.0
        %2164 = vmatprep.subr.mxu0 0.0
        %2165 = vmatpush1.xpose.msra.mxu0 0.0
        %2166 = vmatprep.subr.mxu0 0.0
        %2167 = vmatpush1.xpose.msra.mxu0 0.0
        %2168 = vmatprep.subr.mxu0 0.0
        %2169 = vmatpush1.xpose.msra.mxu0 0.0
        %2170 = vmatprep.subr.mxu0 0.0
        %2171 = vmatpush1.xpose.msra.mxu0 %v605
        %2172 = vmatprep.subr.mxu0 0.0
        %2173 = vmatpush2.xpose.msra.mxu0 0.0
        %2174 = vmatprep.subr.mxu0 0.0
        %2175 = vmatpush2.xpose.msra.mxu0 0.0
        %2176 = vmatprep.subr.mxu0 0.0
        %2177 = vmatpush2.xpose.msra.mxu0 0.0
        %2178 = vmatprep.subr.mxu0 0.0
        %2179 = vmatpush2.xpose.msra.mxu0 0.0
        %2180 = vmatprep.subr.mxu0 0.0
        %2181 = vmatpush2.xpose.msra.mxu0 0.0
        %2182 = vmatprep.subr.mxu0 0.0
        %2183 = vmatpush2.xpose.msra.mxu0 0.0
        %2184 = vmatprep.subr.mxu0 0.0
        %2185 = vmatpush2.xpose.msra.mxu0 0.0
        %2186 = vmatprep.subr.mxu0 0.0
        %2187 = vmatpush2.xpose.msra.mxu0 0.0
        %2188 = vmatprep.subr.mxu0 0.0
        %2189 = vmatpush2.xpose.msra.mxu0 0.0
        %2190 = vmatprep.subr.mxu0 0.0
        %2191 = vmatpush2.xpose.msra.mxu0 0.0
        %2192 = vmatprep.subr.mxu0 0.0
        %2193 = vmatpush2.xpose.msra.mxu0 0.0
        %2194 = vmatprep.subr.mxu0 0.0
        %2195 = vmatpush2.xpose.msra.mxu0 0.0
        %2196 = vmatprep.subr.mxu0 0.0
        %2197 = vmatpush2.xpose.msra.mxu0 0.0
        %2198 = vmatprep.subr.mxu0 0.0
        %2199 = vmatpush2.xpose.msra.mxu0 0.0
        %2200 = vmatprep.subr.mxu0 0.0
        %2201 = vmatpush2.xpose.msra.mxu0 0.0
        %2202 = vmatprep.subr.mxu0 0.0
        %2203 = vmatpush2.xpose.msra.mxu0 0.0
        %2204 = vmatprep.mubr.f32.mxu0 0.0
        %2205 = vmatmul.mubr.f32.gmra.mxu0 %v979
        %v2206 = vpop.f32.mrf.mxu0
        %v2207 = vadd.f32 0.0, %v2206
        %v2208 = vpop.f32.mrf.mxu0
        %2209 = vdwg.mxu0
        %s2210 = scalar_lea.vmem %s336, 80 [#allocation12]
        %2211 = vst.msk [vmem:[%s2210] sm:$0xff] %vm1203, %v2207
        %2212 = vmatprep.subr.mxu0 0.0
        %2213 = vmatpush1.xpose.msra.mxu0 0.0
        %2214 = vmatprep.subr.mxu0 0.0
        %2215 = vmatpush1.xpose.msra.mxu0 0.0
        %2216 = vmatprep.subr.mxu0 0.0
        %2217 = vmatpush1.xpose.msra.mxu0 0.0
        %2218 = vmatprep.subr.mxu0 0.0
        %2219 = vmatpush1.xpose.msra.mxu0 0.0
        %2220 = vmatprep.subr.mxu0 0.0
        %2221 = vmatpush1.xpose.msra.mxu0 0.0
        %2222 = vmatprep.subr.mxu0 0.0
        %2223 = vmatpush1.xpose.msra.mxu0 0.0
        %2224 = vmatprep.subr.mxu0 0.0
        %2225 = vmatpush1.xpose.msra.mxu0 0.0
        %2226 = vmatprep.subr.mxu0 0.0
        %2227 = vmatpush1.xpose.msra.mxu0 0.0
        %2228 = vmatprep.subr.mxu0 0.0
        %2229 = vmatpush1.xpose.msra.mxu0 0.0
        %2230 = vmatprep.subr.mxu0 0.0
        %2231 = vmatpush1.xpose.msra.mxu0 0.0
        %2232 = vmatprep.subr.mxu0 0.0
        %2233 = vmatpush1.xpose.msra.mxu0 0.0
        %2234 = vmatprep.subr.mxu0 0.0
        %2235 = vmatpush1.xpose.msra.mxu0 0.0
        %2236 = vmatprep.subr.mxu0 0.0
        %2237 = vmatpush1.xpose.msra.mxu0 0.0
        %2238 = vmatprep.subr.mxu0 0.0
        %2239 = vmatpush1.xpose.msra.mxu0 0.0
        %2240 = vmatprep.subr.mxu0 0.0
        %2241 = vmatpush1.xpose.msra.mxu0 0.0
        %2242 = vmatprep.subr.mxu0 0.0
        %2243 = vmatpush1.xpose.msra.mxu0 %v605
        %2244 = vmatprep.subr.mxu0 0.0
        %2245 = vmatpush2.xpose.msra.mxu0 0.0
        %2246 = vmatprep.subr.mxu0 0.0
        %2247 = vmatpush2.xpose.msra.mxu0 0.0
        %2248 = vmatprep.subr.mxu0 0.0
        %2249 = vmatpush2.xpose.msra.mxu0 0.0
        %2250 = vmatprep.subr.mxu0 0.0
        %2251 = vmatpush2.xpose.msra.mxu0 0.0
        %2252 = vmatprep.subr.mxu0 0.0
        %2253 = vmatpush2.xpose.msra.mxu0 0.0
        %2254 = vmatprep.subr.mxu0 0.0
        %2255 = vmatpush2.xpose.msra.mxu0 0.0
        %2256 = vmatprep.subr.mxu0 0.0
        %2257 = vmatpush2.xpose.msra.mxu0 0.0
        %2258 = vmatprep.subr.mxu0 0.0
        %2259 = vmatpush2.xpose.msra.mxu0 0.0
        %2260 = vmatprep.subr.mxu0 0.0
        %2261 = vmatpush2.xpose.msra.mxu0 0.0
        %2262 = vmatprep.subr.mxu0 0.0
        %2263 = vmatpush2.xpose.msra.mxu0 0.0
        %2264 = vmatprep.subr.mxu0 0.0
        %2265 = vmatpush2.xpose.msra.mxu0 0.0
        %2266 = vmatprep.subr.mxu0 0.0
        %2267 = vmatpush2.xpose.msra.mxu0 0.0
        %2268 = vmatprep.subr.mxu0 0.0
        %2269 = vmatpush2.xpose.msra.mxu0 0.0
        %2270 = vmatprep.subr.mxu0 0.0
        %2271 = vmatpush2.xpose.msra.mxu0 0.0
        %2272 = vmatprep.subr.mxu0 0.0
        %2273 = vmatpush2.xpose.msra.mxu0 0.0
        %2274 = vmatprep.subr.mxu0 0.0
        %2275 = vmatpush2.xpose.msra.mxu0 0.0
        %2276 = vmatprep.mubr.f32.mxu0 0.0
        %2277 = vmatmul.mubr.f32.gmra.mxu0 %v1054
        %v2278 = vpop.f32.mrf.mxu0
        %v2279 = vadd.f32 0.0, %v2278
        %v2280 = vpop.f32.mrf.mxu0
        %2281 = vdwg.mxu0
        %s2282 = scalar_lea.vmem %s336, 88 [#allocation12]
        %2283 = vst.msk [vmem:[%s2282] sm:$0xff] %vm1203, %v2279
        %2284 = vmatprep.subr.mxu0 0.0
        %2285 = vmatpush1.xpose.msra.mxu0 0.0
        %2286 = vmatprep.subr.mxu0 0.0
        %2287 = vmatpush1.xpose.msra.mxu0 0.0
        %2288 = vmatprep.subr.mxu0 0.0
        %2289 = vmatpush1.xpose.msra.mxu0 0.0
        %2290 = vmatprep.subr.mxu0 0.0
        %2291 = vmatpush1.xpose.msra.mxu0 0.0
        %2292 = vmatprep.subr.mxu0 0.0
        %2293 = vmatpush1.xpose.msra.mxu0 0.0
        %2294 = vmatprep.subr.mxu0 0.0
        %2295 = vmatpush1.xpose.msra.mxu0 0.0
        %2296 = vmatprep.subr.mxu0 0.0
        %2297 = vmatpush1.xpose.msra.mxu0 0.0
        %2298 = vmatprep.subr.mxu0 0.0
        %2299 = vmatpush1.xpose.msra.mxu0 0.0
        %2300 = vmatprep.subr.mxu0 0.0
        %2301 = vmatpush1.xpose.msra.mxu0 0.0
        %2302 = vmatprep.subr.mxu0 0.0
        %2303 = vmatpush1.xpose.msra.mxu0 0.0
        %2304 = vmatprep.subr.mxu0 0.0
        %2305 = vmatpush1.xpose.msra.mxu0 0.0
        %2306 = vmatprep.subr.mxu0 0.0
        %2307 = vmatpush1.xpose.msra.mxu0 0.0
        %2308 = vmatprep.subr.mxu0 0.0
        %2309 = vmatpush1.xpose.msra.mxu0 0.0
        %2310 = vmatprep.subr.mxu0 0.0
        %2311 = vmatpush1.xpose.msra.mxu0 0.0
        %2312 = vmatprep.subr.mxu0 0.0
        %2313 = vmatpush1.xpose.msra.mxu0 0.0
        %2314 = vmatprep.subr.mxu0 0.0
        %2315 = vmatpush1.xpose.msra.mxu0 %v605
        %2316 = vmatprep.subr.mxu0 0.0
        %2317 = vmatpush2.xpose.msra.mxu0 0.0
        %2318 = vmatprep.subr.mxu0 0.0
        %2319 = vmatpush2.xpose.msra.mxu0 0.0
        %2320 = vmatprep.subr.mxu0 0.0
        %2321 = vmatpush2.xpose.msra.mxu0 0.0
        %2322 = vmatprep.subr.mxu0 0.0
        %2323 = vmatpush2.xpose.msra.mxu0 0.0
        %2324 = vmatprep.subr.mxu0 0.0
        %2325 = vmatpush2.xpose.msra.mxu0 0.0
        %2326 = vmatprep.subr.mxu0 0.0
        %2327 = vmatpush2.xpose.msra.mxu0 0.0
        %2328 = vmatprep.subr.mxu0 0.0
        %2329 = vmatpush2.xpose.msra.mxu0 0.0
        %2330 = vmatprep.subr.mxu0 0.0
        %2331 = vmatpush2.xpose.msra.mxu0 0.0
        %2332 = vmatprep.subr.mxu0 0.0
        %2333 = vmatpush2.xpose.msra.mxu0 0.0
        %2334 = vmatprep.subr.mxu0 0.0
        %2335 = vmatpush2.xpose.msra.mxu0 0.0
        %2336 = vmatprep.subr.mxu0 0.0
        %2337 = vmatpush2.xpose.msra.mxu0 0.0
        %2338 = vmatprep.subr.mxu0 0.0
        %2339 = vmatpush2.xpose.msra.mxu0 0.0
        %2340 = vmatprep.subr.mxu0 0.0
        %2341 = vmatpush2.xpose.msra.mxu0 0.0
        %2342 = vmatprep.subr.mxu0 0.0
        %2343 = vmatpush2.xpose.msra.mxu0 0.0
        %2344 = vmatprep.subr.mxu0 0.0
        %2345 = vmatpush2.xpose.msra.mxu0 0.0
        %2346 = vmatprep.subr.mxu0 0.0
        %2347 = vmatpush2.xpose.msra.mxu0 0.0
        %2348 = vmatprep.mubr.f32.mxu0 0.0
        %2349 = vmatmul.mubr.f32.gmra.mxu0 %v1056
        %v2350 = vpop.f32.mrf.mxu0
        %v2351 = vadd.f32 0.0, %v2350
        %v2352 = vpop.f32.mrf.mxu0
        %2353 = vdwg.mxu0
        %s2354 = scalar_lea.vmem %s336, 96 [#allocation12]
        %2355 = vst.msk [vmem:[%s2354] sm:$0xff] %vm1203, %v2351
        %2356 = vmatprep.subr.mxu0 0.0
        %2357 = vmatpush1.xpose.msra.mxu0 0.0
        %2358 = vmatprep.subr.mxu0 0.0
        %2359 = vmatpush1.xpose.msra.mxu0 0.0
        %2360 = vmatprep.subr.mxu0 0.0
        %2361 = vmatpush1.xpose.msra.mxu0 0.0
        %2362 = vmatprep.subr.mxu0 0.0
        %2363 = vmatpush1.xpose.msra.mxu0 0.0
        %2364 = vmatprep.subr.mxu0 0.0
        %2365 = vmatpush1.xpose.msra.mxu0 0.0
        %2366 = vmatprep.subr.mxu0 0.0
        %2367 = vmatpush1.xpose.msra.mxu0 0.0
        %2368 = vmatprep.subr.mxu0 0.0
        %2369 = vmatpush1.xpose.msra.mxu0 0.0
        %2370 = vmatprep.subr.mxu0 0.0
        %2371 = vmatpush1.xpose.msra.mxu0 0.0
        %2372 = vmatprep.subr.mxu0 0.0
        %2373 = vmatpush1.xpose.msra.mxu0 0.0
        %2374 = vmatprep.subr.mxu0 0.0
        %2375 = vmatpush1.xpose.msra.mxu0 0.0
        %2376 = vmatprep.subr.mxu0 0.0
        %2377 = vmatpush1.xpose.msra.mxu0 0.0
        %2378 = vmatprep.subr.mxu0 0.0
        %2379 = vmatpush1.xpose.msra.mxu0 0.0
        %2380 = vmatprep.subr.mxu0 0.0
        %2381 = vmatpush1.xpose.msra.mxu0 0.0
        %2382 = vmatprep.subr.mxu0 0.0
        %2383 = vmatpush1.xpose.msra.mxu0 0.0
        %2384 = vmatprep.subr.mxu0 0.0
        %2385 = vmatpush1.xpose.msra.mxu0 0.0
        %2386 = vmatprep.subr.mxu0 0.0
        %2387 = vmatpush1.xpose.msra.mxu0 %v605
        %2388 = vmatprep.subr.mxu0 0.0
        %2389 = vmatpush2.xpose.msra.mxu0 0.0
        %2390 = vmatprep.subr.mxu0 0.0
        %2391 = vmatpush2.xpose.msra.mxu0 0.0
        %2392 = vmatprep.subr.mxu0 0.0
        %2393 = vmatpush2.xpose.msra.mxu0 0.0
        %2394 = vmatprep.subr.mxu0 0.0
        %2395 = vmatpush2.xpose.msra.mxu0 0.0
        %2396 = vmatprep.subr.mxu0 0.0
        %2397 = vmatpush2.xpose.msra.mxu0 0.0
        %2398 = vmatprep.subr.mxu0 0.0
        %2399 = vmatpush2.xpose.msra.mxu0 0.0
        %2400 = vmatprep.subr.mxu0 0.0
        %2401 = vmatpush2.xpose.msra.mxu0 0.0
        %2402 = vmatprep.subr.mxu0 0.0
        %2403 = vmatpush2.xpose.msra.mxu0 0.0
        %2404 = vmatprep.subr.mxu0 0.0
        %2405 = vmatpush2.xpose.msra.mxu0 0.0
        %2406 = vmatprep.subr.mxu0 0.0
        %2407 = vmatpush2.xpose.msra.mxu0 0.0
        %2408 = vmatprep.subr.mxu0 0.0
        %2409 = vmatpush2.xpose.msra.mxu0 0.0
        %2410 = vmatprep.subr.mxu0 0.0
        %2411 = vmatpush2.xpose.msra.mxu0 0.0
        %2412 = vmatprep.subr.mxu0 0.0
        %2413 = vmatpush2.xpose.msra.mxu0 0.0
        %2414 = vmatprep.subr.mxu0 0.0
        %2415 = vmatpush2.xpose.msra.mxu0 0.0
        %2416 = vmatprep.subr.mxu0 0.0
        %2417 = vmatpush2.xpose.msra.mxu0 0.0
        %2418 = vmatprep.subr.mxu0 0.0
        %2419 = vmatpush2.xpose.msra.mxu0 0.0
        %2420 = vmatprep.mubr.f32.mxu0 0.0
        %2421 = vmatmul.mubr.f32.gmra.mxu0 %v1130
        %v2422 = vpop.f32.mrf.mxu0
        %v2423 = vadd.f32 0.0, %v2422
        %v2424 = vpop.f32.mrf.mxu0
        %2425 = vdwg.mxu0
        %s2426 = scalar_lea.vmem %s336, 104 [#allocation12]
        %2427 = vst.msk [vmem:[%s2426] sm:$0xff] %vm1203, %v2423
        %s2428 = sand.u32 %s147, 1
        %s2429 = scalar_lea.sflag [#allocation4], %s2428
        %s2430 = sand.u32 %s147, 1
        %s2431 = smul.addr %s2430, 32
        %s2432 = scalar_lea.vmem [#allocation11], %s2431
        %s2433 = sand.u32 %s173, 1
        %s2434 = scalar_lea.sflag [#allocation13], %s2433
        %s2435 = sand.u32 %s173, 1
        %s2436 = smul.addr %s2435, 112
        %s2437 = scalar_lea.vmem [#allocation12], %s2436
        // Predicated region
        $region61: #{tpu_custom_call.1} parent=39 // pred_check
          %p2438 = pneg %p157
        $region62: #{tpu_custom_call.1} parent=39 // pred_check_branch
          %2440 = sbr.rel (%p2438) target = $region64
        $region63: #{tpu_custom_call.1} parent=39 // pred_region
          %s2441 = smul.u32 2, %s29
          %s2443 = ssub.s32 512, 512
          %2444 = vsyncadd %s2429, %s2443
          %s2445 = smul.addr %s2441, 2
          %s2446 = smul.addr %s2445, 128
          %s2447 = scalar_lea.hbm %s5, %s2446
          %s2448 = sshll.u32 %s2432, 4
          %s2449 = int_to_ptr.vmem [resolvable:$true] %s2448
          %2454 = dma.vmem_to_hbm [thread:$0]  %s2449, 512, %s2447, %s2429, 128, 128, 8
        $region64: #{tpu_custom_call.1} parent=39 // pred_fallthru
          _
        // Predicated region
        $region65: #{tpu_custom_call.1} parent=39 // pred_check
          %p2455 = pneg %p183
        $region66: #{tpu_custom_call.1} parent=39 // pred_check_branch
          %2457 = sbr.rel (%p2455) target = $region68
        $region67: #{tpu_custom_call.1} parent=39 // pred_region
          %s2458 = smul.u32 2, %s29
          %s2460 = ssub.s32 1792, 1792
          %2461 = vsyncadd %s2434, %s2460
          %s2462 = smul.addr %s2458, 7
          %s2463 = smul.addr %s2462, 128
          %s2464 = scalar_lea.hbm %s6, %s2463
          %s2465 = sshll.u32 %s2437, 4
          %s2466 = int_to_ptr.vmem [resolvable:$true] %s2465
          %2471 = dma.vmem_to_hbm [thread:$0]  %s2466, 1792, %s2464, %s2434, 128, 128, 8
        $region68: #{tpu_custom_call.1} parent=39 // pred_fallthru
          _
      $region40: #{tpu_custom_call.1} parent=5 // pred_fallthru
        _
      %p2472 = scmp.le.s32.totalorder 2, %s24
      // Predicated region
      $region69: #{tpu_custom_call.1} parent=5 // pred_check
        %p2473 = pneg %p2472
      $region70: #{tpu_custom_call.1} parent=5 // pred_check_branch
        %2475 = sbr.rel (%p2473) target = $region72
      $region71: #{tpu_custom_call.1} parent=5 // pred_region
        %s2476 = ssub.s32 %s24, 2
        // Predicated region
        $region73: #{tpu_custom_call.1} parent=71 // pred_check
          %p2477 = pneg %p163
        $region74: #{tpu_custom_call.1} parent=71 // pred_check_branch
          %2479 = sbr.rel (%p2477) target = $region76
        $region75: #{tpu_custom_call.1} parent=71 // pred_region
          %s2480 = sand.u32 %s148, 1
          %s2481 = scalar_lea.sflag [#allocation4], %s2480
          %s2482 = sand.u32 %s148, 1
          %s2483 = smul.addr %s2482, 32
          %s2484 = scalar_lea.vmem [#allocation11], %s2483
          %2485 = dma.done %s2481, 512
        $region76: #{tpu_custom_call.1} parent=71 // pred_fallthru
          _
        // Predicated region
        $region77: #{tpu_custom_call.1} parent=71 // pred_check
          %p2486 = pneg %p189
        $region78: #{tpu_custom_call.1} parent=71 // pred_check_branch
          %2488 = sbr.rel (%p2486) target = $region80
        $region79: #{tpu_custom_call.1} parent=71 // pred_region
          %s2489 = sand.u32 %s174, 1
          %s2490 = scalar_lea.sflag [#allocation13], %s2489
          %s2491 = sand.u32 %s174, 1
          %s2492 = smul.addr %s2491, 112
          %s2493 = scalar_lea.vmem [#allocation12], %s2492
          %2494 = dma.done %s2490, 1792
        $region80: #{tpu_custom_call.1} parent=71 // pred_fallthru
          _
      $region72: #{tpu_custom_call.1} parent=5 // pred_fallthru
        _
    $region6: #{tpu_custom_call.1} parent=1 // loop_footer
      %s28 = sadd.s32 1, %s24
    $region7: #{tpu_custom_call.1} parent=1 // loop_footer_branch
      %23 = sbr.rel target = $region3
    $region8: #{tpu_custom_call.1} parent=1 // loop_exit
      _
    %2495 = vsyncpa [#allocation3], 1
    %s2496 = scalar_lea.sflag [#allocation3], 1
    %2497 = vsyncpa %s2496, 1
    %2498 = vsyncpa [#allocation6], 1
    %2499 = vsyncpa [#allocation9], 1
    %2500 = vsyncpa [#allocation4], 1
    %s2501 = scalar_lea.sflag [#allocation4], 1
    %2502 = vsyncpa %s2501, 1
    %2503 = vsyncpa [#allocation13], 1
    %s2504 = scalar_lea.sflag [#allocation13], 1
    %2505 = vsyncpa %s2504, 1

</llo_original>
